<compile_context>
chip_gen: v7x
topology: tpu7x:2x2x1
jax: 0.10.0
libtpu: 0.0.40
codegen_flags: <defaults>
</compile_context>

<pallas_src>
import functools

import jax
import jax.numpy as jnp
from jax.experimental import pallas as pl
from jax.experimental.pallas import tpu as pltpu


# ----------------------------- fused Pallas kernel ---------------------------
def _convnet_fused_kernel(x_ref, b1_ref, s1_ref, b2_ref, s2_ref, wl_ref, bl_ref,
                          o_ref, *, bt):
    """Whole ConvNet forward for one batch tile of `bt` samples (grid axis = batch tiles).

    Activation rows are h-major / b-minor: row index = h*bt + b, so every conv tap is one
    contiguous sublane-aligned slice (bt should be a multiple of 8).

    x_ref : (1, H*bt, W*Cin)         input tile (matmul dtype)
    b1_ref: (KH, W*Cin,   Wo1*C1)    conv1 banded weights (BN scale folded in)
    s1_ref: (1, Wo1*C1)              conv1 folded bias (f32)
    b2_ref: (KH, Wo1*C1,  Wo2*C2)    conv2 banded weights
    s2_ref: (1, Wo2*C2)              conv2 folded bias (f32)
    wl_ref: (Ho2*Wo2*C2, n_cls_pad)  linear weights, rows in HWC order, lanes padded to 128
    bl_ref: (1, n_cls_pad)           linear bias (f32, zero padded)
    o_ref : (1, bt, n_cls_pad)       logits for this batch tile (f32, lane dense)
    """
    f32 = jnp.float32
    xr = x_ref[0]                                   # (H*bt, W*Cin)
    h_in = xr.shape[0] // bt
    kh1 = b1_ref.shape[0]
    kh2 = b2_ref.shape[0]
    ho1 = h_in - kh1 + 1
    ho2 = ho1 - kh2 + 1

    # ---- conv1 + BN + ReLU: sum over KH taps of banded matmuls (f32 accumulate) ----
    acc1 = jnp.dot(xr[0:ho1 * bt, :], b1_ref[0], preferred_element_type=f32)
    for k in range(1, kh1):
        acc1 = acc1 + jnp.dot(xr[k * bt:(k + ho1) * bt, :], b1_ref[k],
                              preferred_element_type=f32)
    h1 = jnp.maximum(acc1 + s1_ref[...], 0.0)       # f32 epilogue (VPU-friendly on v5e too)
    h1 = h1.astype(b2_ref.dtype)                    # (ho1*bt, Wo1*C1)

    # ---- (Dropout2d is identity at inference) conv2 + BN + ReLU ----
    acc2 = jnp.dot(h1[0:ho2 * bt, :], b2_ref[0], preferred_element_type=f32)
    for k in range(1, kh2):
        acc2 = acc2 + jnp.dot(h1[k * bt:(k + ho2) * bt, :], b2_ref[k],
                              preferred_element_type=f32)
    h2 = jnp.maximum(acc2 + s2_ref[...], 0.0)
    h2 = h2.astype(wl_ref.dtype)                    # (ho2*bt, Wo2*C2)

    # ---- flatten + linear as ONE matmul ----
    # Gather each sample's h-rows onto the lane axis (offsets are multiples of wc2 = 384,
    # i.e. 128-aligned), giving (bt, Ho2*Wo2*C2); then a single deep-K contraction.
    flat = jnp.concatenate([h2[h * bt:(h + 1) * bt, :] for h in range(ho2)], axis=1)
    logits = jnp.dot(flat, wl_ref[...], preferred_element_type=f32) + bl_ref[...]
    o_ref[0] = logits.astype(o_ref.dtype)           # lane-dense (bt, 128) store


# ------------------------- one-time parameter preparation --------------------
def _fold_bn(w, b, gamma, beta, mean, var, eps):
    """Fold conv bias + BatchNorm2d (eval, running stats) into weights / bias."""
    s = gamma / jnp.sqrt(var + eps)
    return w * s[:, None, None, None], beta + s * (b - mean)


def _banded_weights(w_folded, w_in):
    """Conv weights (Cout, Cin, KH, KW) -> per-tap banded matrices.

    Returns B of shape (KH, w_in*Cin, w_out*Cout) with
      B[kh, w*Cin+ci, w0*Cout+co] = w_folded[co, ci, kh, w-w0] if 0 <= w-w0 < KW else 0
    so that a 'valid' conv row becomes:  out[h0] = sum_kh in_row[h0+kh] @ B[kh].
    """
    c_out, c_in, k_h, k_w = w_folded.shape
    w_out = w_in - k_w + 1
    wt = jnp.transpose(w_folded, (2, 3, 1, 0))                    # (KH, KW, Cin, Cout)
    kw = jnp.arange(w_in)[:, None] - jnp.arange(w_out)[None, :]   # (w_in, w_out)
    valid = (kw >= 0) & (kw < k_w)
    taps = wt[:, jnp.clip(kw, 0, k_w - 1)]                        # (KH, w_in, w_out, Cin, Cout)
    taps = taps * valid[None, :, :, None, None].astype(wt.dtype)
    taps = jnp.transpose(taps, (0, 1, 3, 2, 4))                   # (KH, w_in, Cin, w_out, Cout)
    return taps.reshape(k_h, w_in * c_in, w_out * c_out)


def prepare_params(params, H, W, eps=1e-5, matmul_dtype=jnp.bfloat16):
    """One-time host-side layout plumbing: BN fold, banded conv matrices, linear permute.

    matmul_dtype: dtype of the MXU operands (weights + activations). bf16 is recommended on
    v6e/v7x (full-rate MXU, half the weight DMA bytes); f32 for strict accuracy / v5e.
    Accumulation and the bias+ReLU epilogue are always f32.
    """
    f32 = jnp.float32
    w1f, bias1 = _fold_bn(params["w1"], params["b1"], params["g1"], params["be1"],
                          params["m1"], params["v1"], eps)
    w2f, bias2 = _fold_bn(params["w2"], params["b2"], params["g2"], params["be2"],
                          params["m2"], params["v2"], eps)
    c1, _, kh, kw = params["w1"].shape
    c2 = params["w2"].shape[0]
    ho1, wo1 = H - kh + 1, W - kw + 1
    ho2, wo2 = ho1 - kh + 1, wo1 - kw + 1

    b1m = _banded_weights(w1f, W)        # (KH, W*Cin,  Wo1*C1)
    b2m = _banded_weights(w2f, wo1)      # (KH, Wo1*C1, Wo2*C2)
    bias1_row = jnp.tile(bias1, (wo1,)).reshape(1, wo1 * c1)
    bias2_row = jnp.tile(bias2, (wo2,)).reshape(1, wo2 * c2)

    # Linear: PyTorch flatten order is (C, H, W); re-index rows to (H, W, C) so the kernel's
    # lane-dense activation rows feed the matmul directly.  Flatten to a single (K, n_cls_pad)
    # matrix (one matmul in the kernel) and zero-pad the class dim to a full 128-lane slab.
    n_cls = params["w_lin"].shape[1]
    ncls_pad = ((n_cls + 127) // 128) * 128
    wlin = jnp.transpose(params["w_lin"].reshape(c2, ho2, wo2, n_cls),
                         (1, 2, 0, 3)).reshape(ho2 * wo2 * c2, n_cls)
    wlin = jnp.pad(wlin, ((0, 0), (0, ncls_pad - n_cls)))
    blin = jnp.pad(params["b_lin"], (0, ncls_pad - n_cls)).reshape(1, ncls_pad)

    return {"b1m": b1m.astype(matmul_dtype), "bias1": bias1_row.astype(f32),
            "b2m": b2m.astype(matmul_dtype), "bias2": bias2_row.astype(f32),
            "wlin": wlin.astype(matmul_dtype), "blin": blin.astype(f32)}


# ------------------------------- forward wrapper ------------------------------
def convnet_forward(x_nchw, prep, *, n_cls, batch_tile=8):
    """ConvNet forward: one fused pallas_call over batch tiles; only logits round-trip HBM."""
    n, c_in, H, W = x_nchw.shape
    b1m, bias1 = prep["b1m"], prep["bias1"]
    b2m, bias2 = prep["b2m"], prep["bias2"]
    wl, bl = prep["wlin"], prep["blin"]
    kh1, wcin, wc1 = b1m.shape
    kh2, _, wc2 = b2m.shape
    klin, ncls_pad = wl.shape
    ho1 = H - kh1 + 1
    ho2 = ho1 - kh2 + 1
    assert wcin == W * c_in and klin == ho2 * wc2

    bt = batch_tile                       # keep a multiple of 8 (sublane-aligned tap slices)
    num_tiles = pl.cdiv(n, bt)
    n_pad = num_tiles * bt

    # Wrapper-side layout plumbing (cheap): channels-last, then h-major / b-minor rows
    # per batch tile: xt[t, h*bt + b, :] = x[t*bt + b, h, :, :] (HWC flattened on lanes).
    x_hwc = jnp.transpose(x_nchw, (0, 2, 3, 1)).reshape(n, H, W * c_in)
    if n_pad != n:
        x_hwc = jnp.pad(x_hwc, ((0, n_pad - n), (0, 0), (0, 0)))
    xt = x_hwc.reshape(num_tiles, bt, H, W * c_in)
    xt = jnp.transpose(xt, (0, 2, 1, 3)).reshape(num_tiles, H * bt, W * c_in)
    xt = xt.astype(b1m.dtype)

    flops_step = 2 * (kh1 * (ho1 * bt) * wcin * wc1
                      + kh2 * (ho2 * bt) * wc1 * wc2
                      + bt * klin * ncls_pad)
    bytes_acc = (xt.size * xt.dtype.itemsize
                 + sum(a.size * a.dtype.itemsize
                       for a in (b1m, bias1, b2m, bias2, wl, bl))
                 + n_pad * ncls_pad * 4)

    out = pl.pallas_call(
        functools.partial(_convnet_fused_kernel, bt=bt),
        out_shape=jax.ShapeDtypeStruct((num_tiles, bt, ncls_pad), jnp.float32),
        grid=(num_tiles,),
        in_specs=[
            pl.BlockSpec((1, H * bt, wcin), lambda i: (i, 0, 0)),   # per-tile input
            pl.BlockSpec((kh1, wcin, wc1), lambda i: (0, 0, 0)),    # weights: VMEM-resident
            pl.BlockSpec((1, wc1), lambda i: (0, 0)),
            pl.BlockSpec((kh2, wc1, wc2), lambda i: (0, 0, 0)),
            pl.BlockSpec((1, wc2), lambda i: (0, 0)),
            pl.BlockSpec((klin, ncls_pad), lambda i: (0, 0)),
            pl.BlockSpec((1, ncls_pad), lambda i: (0, 0)),
        ],
        out_specs=pl.BlockSpec((1, bt, ncls_pad), lambda i: (i, 0, 0)),
        compiler_params=pltpu.CompilerParams(
            dimension_semantics=("parallel",)),                     # >=2 tiles -> both v7x TCs
        cost_estimate=pl.CostEstimate(flops=num_tiles * flops_step,
                                      transcendentals=0,
                                      bytes_accessed=bytes_acc),
    )(xt, b1m, bias1, b2m, bias2, wl, bl)

    # Un-tile and drop the lane padding / batch padding outside the kernel.
    return out.reshape(n_pad, ncls_pad)[:n, :n_cls]


# ------------------------------ pure-JAX reference ----------------------------
def _reference_forward(x, params, eps=1e-5):
    """Eval-mode reference (XLA conv) used only for the in-script correctness check."""
    hp = jax.lax.Precision.HIGHEST

    def block(x, w, b, g, be, m, v):
        y = jax.lax.conv_general_dilated(
            x, w, window_strides=(1, 1), padding="VALID",
            dimension_numbers=("NCHW", "OIHW", "NCHW"), precision=hp)
        y = y + b[None, :, None, None]
        y = g[None, :, None, None] * (y - m[None, :, None, None]) / jnp.sqrt(
            v[None, :, None, None] + eps) + be[None, :, None, None]
        return jnp.maximum(y, 0.0)

    h1 = block(x, params["w1"], params["b1"], params["g1"], params["be1"],
               params["m1"], params["v1"])
    h2 = block(h1, params["w2"], params["b2"], params["g2"], params["be2"],
               params["m2"], params["v2"])
    flat = h2.reshape(h2.shape[0], -1)                       # PyTorch NCHW flatten
    return jnp.matmul(flat, params["w_lin"], precision=hp) + params["b_lin"]


# ---------------------------------- main --------------------------------------
if __name__ == "__main__":
    key = jax.random.PRNGKey(0)
    ks = jax.random.split(key, 16)

    # 16 samples -> two batch tiles of 8 -> grid=(2,) "parallel" (fills both v7x TCs).
    N, Cin, H, W = 16, 3, 16, 16
    n_cls = 10
    feat = 32 * 12 * 12   # 16 -> 14 -> 12 spatial, 32 channels

    x = jax.random.normal(ks[0], (N, Cin, H, W), jnp.float32)

    params = {
        # conv1: Conv2d(3, 16, 3) + BatchNorm2d(16)
        "w1": 0.1 * jax.random.normal(ks[1], (16, 3, 3, 3), jnp.float32),
        "b1": 0.1 * jax.random.normal(ks[2], (16,), jnp.float32),
        "g1": 1.0 + 0.1 * jax.random.normal(ks[3], (16,), jnp.float32),
        "be1": 0.1 * jax.random.normal(ks[4], (16,), jnp.float32),
        "m1": 0.05 * jax.random.normal(ks[5], (16,), jnp.float32),
        "v1": 0.5 + jnp.abs(jax.random.normal(ks[6], (16,), jnp.float32)),
        # conv2: Conv2d(16, 32, 3) + BatchNorm2d(32)
        "w2": 0.05 * jax.random.normal(ks[7], (32, 16, 3, 3), jnp.float32),
        "b2": 0.1 * jax.random.normal(ks[8], (32,), jnp.float32),
        "g2": 1.0 + 0.1 * jax.random.normal(ks[9], (32,), jnp.float32),
        "be2": 0.1 * jax.random.normal(ks[10], (32,), jnp.float32),
        "m2": 0.05 * jax.random.normal(ks[11], (32,), jnp.float32),
        "v2": 0.5 + jnp.abs(jax.random.normal(ks[12], (32,), jnp.float32)),
        # linear: LazyLinear(n_cls) over the flattened (N, 4608); stored (in, out),
        # rows in PyTorch CHW flatten order.
        "w_lin": 0.02 * jax.random.normal(ks[13], (feat, n_cls), jnp.float32),
        "b_lin": 0.1 * jax.random.normal(ks[14], (n_cls,), jnp.float32),
    }

    fwd = jax.jit(functools.partial(convnet_forward, n_cls=n_cls, batch_tile=8))
    ref = _reference_forward(x, params)

    # --- bf16 matmul operands (recommended on v6e/v7x), f32 accumulation + epilogue ---
    prep_bf16 = prepare_params(params, H, W, matmul_dtype=jnp.bfloat16)
    logits_bf16 = fwd(x, prep_bf16)
    jax.block_until_ready(logits_bf16)
    assert logits_bf16.shape == (N, n_cls), logits_bf16.shape
    assert bool(jnp.all(jnp.isfinite(logits_bf16)))
    # Tolerance derived for bf16 operands: <=2^-9 relative rounding per operand, exact f32
    # accumulation, propagated through K=27 / 144 / 4608 contractions at |logit| ~ 0.3
    # gives worst-case logit error ~1e-2; 3e-2 leaves margin while still flagging any
    # layout/indexing bug (those produce O(0.1+) errors).
    assert bool(jnp.allclose(logits_bf16, ref, rtol=3e-2, atol=3e-2)), (
        float(jnp.max(jnp.abs(logits_bf16 - ref))))

    # --- all-f32 path (v5e / strict accuracy): tight tolerance per review ---
    prep_f32 = prepare_params(params, H, W, matmul_dtype=jnp.float32)
    logits_f32 = fwd(x, prep_f32)
    jax.block_until_ready(logits_f32)
    # Expected error ~1e-5 (summation reorder + MXU f32 multi-pass emulation); 1e-3 keeps
    # comfortable margin while being 50x tighter than the previous 5e-2 check.
    assert bool(jnp.allclose(logits_f32, ref, rtol=1e-3, atol=1e-3)), (
        float(jnp.max(jnp.abs(logits_f32 - ref))))

    print("KERNEL_OK")
</pallas_src>

<mosaic_0001>
module attributes {stable_mosaic.version = 11 : i64} {
  func.func @_convnet_fused_kernel(%arg0: i32, %arg1: memref<1x128x48xbf16, #tpu.memory_space<vmem>>, %arg2: memref<3x48x224xbf16, #tpu.memory_space<vmem>>, %arg3: memref<1x224xf32, #tpu.memory_space<vmem>>, %arg4: memref<3x224x384xbf16, #tpu.memory_space<vmem>>, %arg5: memref<1x384xf32, #tpu.memory_space<vmem>>, %arg6: memref<4608x128xbf16, #tpu.memory_space<vmem>>, %arg7: memref<1x128xf32, #tpu.memory_space<vmem>>, %arg8: memref<1x8x128xf32, #tpu.memory_space<vmem>>) attributes {dimension_semantics = [#tpu.dimension_semantics<parallel>], iteration_bounds = array<i64: 2>, scalar_prefetch = 0 : i64, scratch_operands = 0 : i64, tpu.core_type = #tpu.core_type<tc>, window_params = [{transform_indices = @transform_0, window_bounds = array<i64: 1, 128, 48>}, {pipeline_mode = #tpu.pipeline_mode<synchronous>, transform_indices = @transform_1, window_bounds = array<i64: 3, 48, 224>}, {pipeline_mode = #tpu.pipeline_mode<synchronous>, transform_indices = @transform_2, window_bounds = array<i64: 1, 224>}, {pipeline_mode = #tpu.pipeline_mode<synchronous>, transform_indices = @transform_3, window_bounds = array<i64: 3, 224, 384>}, {pipeline_mode = #tpu.pipeline_mode<synchronous>, transform_indices = @transform_4, window_bounds = array<i64: 1, 384>}, {pipeline_mode = #tpu.pipeline_mode<synchronous>, transform_indices = @transform_5, window_bounds = array<i64: 4608, 128>}, {pipeline_mode = #tpu.pipeline_mode<synchronous>, transform_indices = @transform_6, window_bounds = array<i64: 1, 128>}, {transform_indices = @transform_7, window_bounds = array<i64: 1, 8, 128>}]} {
    %c0 = arith.constant 0 : index
    %c0_0 = arith.constant 0 : index
    %c0_1 = arith.constant 0 : index
    %0 = vector.load %arg1[%c0, %c0_0, %c0_1] : memref<1x128x48xbf16, #tpu.memory_space<vmem>>, vector<1x128x48xbf16>
    %1 = vector.shape_cast %0 : vector<1x128x48xbf16> to vector<128x48xbf16>
    %2 = vector.extract_strided_slice %1 {offsets = [0, 0], sizes = [112, 48], strides = [1, 1]} : vector<128x48xbf16> to vector<112x48xbf16>
    %c0_2 = arith.constant 0 : index
    %c0_3 = arith.constant 0 : index
    %c0_4 = arith.constant 0 : index
    %3 = vector.load %arg2[%c0_2, %c0_3, %c0_4] : memref<3x48x224xbf16, #tpu.memory_space<vmem>>, vector<1x48x224xbf16>
    %4 = vector.shape_cast %3 : vector<1x48x224xbf16> to vector<48x224xbf16>
    %cst = arith.constant dense<0.000000e+00> : vector<112x224xf32>
    %5 = tpu.matmul %2, %4, %cst {dimension_numbers = #tpu.dot_dimension_numbers<[1], [0], [0], [1], [0, 0, 1, 1], [], []>} : vector<112x48xbf16>, vector<48x224xbf16>, vector<112x224xf32> -> vector<112x224xf32>
    %6 = vector.extract_strided_slice %1 {offsets = [8, 0], sizes = [112, 48], strides = [1, 1]} : vector<128x48xbf16> to vector<112x48xbf16>
    %c1 = arith.constant 1 : index
    %c0_5 = arith.constant 0 : index
    %c0_6 = arith.constant 0 : index
    %7 = vector.load %arg2[%c1, %c0_5, %c0_6] : memref<3x48x224xbf16, #tpu.memory_space<vmem>>, vector<1x48x224xbf16>
    %8 = vector.shape_cast %7 : vector<1x48x224xbf16> to vector<48x224xbf16>
    %cst_7 = arith.constant dense<0.000000e+00> : vector<112x224xf32>
    %9 = tpu.matmul %6, %8, %cst_7 {dimension_numbers = #tpu.dot_dimension_numbers<[1], [0], [0], [1], [0, 0, 1, 1], [], []>} : vector<112x48xbf16>, vector<48x224xbf16>, vector<112x224xf32> -> vector<112x224xf32>
    %10 = arith.addf %5, %9 : vector<112x224xf32>
    %11 = vector.extract_strided_slice %1 {offsets = [16, 0], sizes = [112, 48], strides = [1, 1]} : vector<128x48xbf16> to vector<112x48xbf16>
    %c2 = arith.constant 2 : index
    %c0_8 = arith.constant 0 : index
    %c0_9 = arith.constant 0 : index
    %12 = vector.load %arg2[%c2, %c0_8, %c0_9] : memref<3x48x224xbf16, #tpu.memory_space<vmem>>, vector<1x48x224xbf16>
    %13 = vector.shape_cast %12 : vector<1x48x224xbf16> to vector<48x224xbf16>
    %cst_10 = arith.constant dense<0.000000e+00> : vector<112x224xf32>
    %14 = tpu.matmul %11, %13, %cst_10 {dimension_numbers = #tpu.dot_dimension_numbers<[1], [0], [0], [1], [0, 0, 1, 1], [], []>} : vector<112x48xbf16>, vector<48x224xbf16>, vector<112x224xf32> -> vector<112x224xf32>
    %15 = arith.addf %10, %14 : vector<112x224xf32>
    %c0_11 = arith.constant 0 : index
    %c0_12 = arith.constant 0 : index
    %16 = vector.load %arg3[%c0_11, %c0_12] : memref<1x224xf32, #tpu.memory_space<vmem>>, vector<1x224xf32>
    %17 = vector.broadcast %16 : vector<1x224xf32> to vector<112x224xf32>
    %18 = arith.addf %15, %17 : vector<112x224xf32>
    %cst_13 = arith.constant 0.000000e+00 : f32
    %19 = vector.broadcast %cst_13 : f32 to vector<112x224xf32>
    %20 = arith.maximumf %18, %19 : vector<112x224xf32>
    %21 = arith.truncf %20 : vector<112x224xf32> to vector<112x224xbf16>
    %22 = vector.extract_strided_slice %21 {offsets = [0, 0], sizes = [96, 224], strides = [1, 1]} : vector<112x224xbf16> to vector<96x224xbf16>
    %c0_14 = arith.constant 0 : index
    %c0_15 = arith.constant 0 : index
    %c0_16 = arith.constant 0 : index
    %23 = vector.load %arg4[%c0_14, %c0_15, %c0_16] : memref<3x224x384xbf16, #tpu.memory_space<vmem>>, vector<1x224x384xbf16>
    %24 = vector.shape_cast %23 : vector<1x224x384xbf16> to vector<224x384xbf16>
    %cst_17 = arith.constant dense<0.000000e+00> : vector<96x384xf32>
    %25 = tpu.matmul %22, %24, %cst_17 {dimension_numbers = #tpu.dot_dimension_numbers<[1], [0], [0], [1], [0, 0, 1, 1], [], []>} : vector<96x224xbf16>, vector<224x384xbf16>, vector<96x384xf32> -> vector<96x384xf32>
    %26 = vector.extract_strided_slice %21 {offsets = [8, 0], sizes = [96, 224], strides = [1, 1]} : vector<112x224xbf16> to vector<96x224xbf16>
    %c1_18 = arith.constant 1 : index
    %c0_19 = arith.constant 0 : index
    %c0_20 = arith.constant 0 : index
    %27 = vector.load %arg4[%c1_18, %c0_19, %c0_20] : memref<3x224x384xbf16, #tpu.memory_space<vmem>>, vector<1x224x384xbf16>
    %28 = vector.shape_cast %27 : vector<1x224x384xbf16> to vector<224x384xbf16>
    %cst_21 = arith.constant dense<0.000000e+00> : vector<96x384xf32>
    %29 = tpu.matmul %26, %28, %cst_21 {dimension_numbers = #tpu.dot_dimension_numbers<[1], [0], [0], [1], [0, 0, 1, 1], [], []>} : vector<96x224xbf16>, vector<224x384xbf16>, vector<96x384xf32> -> vector<96x384xf32>
    %30 = arith.addf %25, %29 : vector<96x384xf32>
    %31 = vector.extract_strided_slice %21 {offsets = [16, 0], sizes = [96, 224], strides = [1, 1]} : vector<112x224xbf16> to vector<96x224xbf16>
    %c2_22 = arith.constant 2 : index
    %c0_23 = arith.constant 0 : index
    %c0_24 = arith.constant 0 : index
    %32 = vector.load %arg4[%c2_22, %c0_23, %c0_24] : memref<3x224x384xbf16, #tpu.memory_space<vmem>>, vector<1x224x384xbf16>
    %33 = vector.shape_cast %32 : vector<1x224x384xbf16> to vector<224x384xbf16>
    %cst_25 = arith.constant dense<0.000000e+00> : vector<96x384xf32>
    %34 = tpu.matmul %31, %33, %cst_25 {dimension_numbers = #tpu.dot_dimension_numbers<[1], [0], [0], [1], [0, 0, 1, 1], [], []>} : vector<96x224xbf16>, vector<224x384xbf16>, vector<96x384xf32> -> vector<96x384xf32>
    %35 = arith.addf %30, %34 : vector<96x384xf32>
    %c0_26 = arith.constant 0 : index
    %c0_27 = arith.constant 0 : index
    %36 = vector.load %arg5[%c0_26, %c0_27] : memref<1x384xf32, #tpu.memory_space<vmem>>, vector<1x384xf32>
    %37 = vector.broadcast %36 : vector<1x384xf32> to vector<96x384xf32>
    %38 = arith.addf %35, %37 : vector<96x384xf32>
    %cst_28 = arith.constant 0.000000e+00 : f32
    %39 = vector.broadcast %cst_28 : f32 to vector<96x384xf32>
    %40 = arith.maximumf %38, %39 : vector<96x384xf32>
    %41 = arith.truncf %40 : vector<96x384xf32> to vector<96x384xbf16>
    %42 = vector.extract_strided_slice %41 {offsets = [0, 0], sizes = [8, 384], strides = [1, 1]} : vector<96x384xbf16> to vector<8x384xbf16>
    %43 = vector.extract_strided_slice %41 {offsets = [8, 0], sizes = [8, 384], strides = [1, 1]} : vector<96x384xbf16> to vector<8x384xbf16>
    %44 = vector.extract_strided_slice %41 {offsets = [16, 0], sizes = [8, 384], strides = [1, 1]} : vector<96x384xbf16> to vector<8x384xbf16>
    %45 = vector.extract_strided_slice %41 {offsets = [24, 0], sizes = [8, 384], strides = [1, 1]} : vector<96x384xbf16> to vector<8x384xbf16>
    %46 = vector.extract_strided_slice %41 {offsets = [32, 0], sizes = [8, 384], strides = [1, 1]} : vector<96x384xbf16> to vector<8x384xbf16>
    %47 = vector.extract_strided_slice %41 {offsets = [40, 0], sizes = [8, 384], strides = [1, 1]} : vector<96x384xbf16> to vector<8x384xbf16>
    %48 = vector.extract_strided_slice %41 {offsets = [48, 0], sizes = [8, 384], strides = [1, 1]} : vector<96x384xbf16> to vector<8x384xbf16>
    %49 = vector.extract_strided_slice %41 {offsets = [56, 0], sizes = [8, 384], strides = [1, 1]} : vector<96x384xbf16> to vector<8x384xbf16>
    %50 = vector.extract_strided_slice %41 {offsets = [64, 0], sizes = [8, 384], strides = [1, 1]} : vector<96x384xbf16> to vector<8x384xbf16>
    %51 = vector.extract_strided_slice %41 {offsets = [72, 0], sizes = [8, 384], strides = [1, 1]} : vector<96x384xbf16> to vector<8x384xbf16>
    %52 = vector.extract_strided_slice %41 {offsets = [80, 0], sizes = [8, 384], strides = [1, 1]} : vector<96x384xbf16> to vector<8x384xbf16>
    %53 = vector.extract_strided_slice %41 {offsets = [88, 0], sizes = [8, 384], strides = [1, 1]} : vector<96x384xbf16> to vector<8x384xbf16>
    %54 = tpu.concatenate %42, %43, %44, %45, %46, %47, %48, %49, %50, %51, %52, %53 in 1 : vector<8x384xbf16>, vector<8x384xbf16>, vector<8x384xbf16>, vector<8x384xbf16>, vector<8x384xbf16>, vector<8x384xbf16>, vector<8x384xbf16>, vector<8x384xbf16>, vector<8x384xbf16>, vector<8x384xbf16>, vector<8x384xbf16>, vector<8x384xbf16> -> vector<8x4608xbf16>
    %c0_29 = arith.constant 0 : index
    %c0_30 = arith.constant 0 : index
    %55 = vector.load %arg6[%c0_29, %c0_30] : memref<4608x128xbf16, #tpu.memory_space<vmem>>, vector<4608x128xbf16>
    %cst_31 = arith.constant dense<0.000000e+00> : vector<8x128xf32>
    %56 = tpu.matmul %54, %55, %cst_31 {dimension_numbers = #tpu.dot_dimension_numbers<[1], [0], [0], [1], [0, 0, 1, 1], [], []>} : vector<8x4608xbf16>, vector<4608x128xbf16>, vector<8x128xf32> -> vector<8x128xf32>
    %c0_32 = arith.constant 0 : index
    %c0_33 = arith.constant 0 : index
    %57 = vector.load %arg7[%c0_32, %c0_33] : memref<1x128xf32, #tpu.memory_space<vmem>>, vector<1x128xf32>
    %58 = vector.broadcast %57 : vector<1x128xf32> to vector<8x128xf32>
    %59 = arith.addf %56, %58 : vector<8x128xf32>
    %c0_34 = arith.constant 0 : index
    %c0_35 = arith.constant 0 : index
    %c0_36 = arith.constant 0 : index
    %60 = vector.load %arg8[%c0_34, %c0_35, %c0_36] : memref<1x8x128xf32, #tpu.memory_space<vmem>>, vector<1x8x128xf32>
    %61 = vector.shape_cast %60 : vector<1x8x128xf32> to vector<8x128xf32>
    %62 = vector.shape_cast %59 : vector<8x128xf32> to vector<1x8x128xf32>
    tpu.vector_store %arg8[%c0_34, %c0_35, %c0_36], %62 {strides = array<i32>} : memref<1x8x128xf32, #tpu.memory_space<vmem>>, vector<1x8x128xf32>,
    return
  }
  func.func @transform_0(%arg0: i32) -> (i32, i32, i32) {
    %c0_i32 = arith.constant 0 : i32
    %c0_i32_0 = arith.constant 0 : i32
    %c0_i32_1 = arith.constant 0 : i32
    return %arg0, %c0_i32, %c0_i32_0 : i32, i32, i32
  }
  func.func @transform_1(%arg0: i32) -> (i32, i32, i32) {
    %c0_i32 = arith.constant 0 : i32
    %c0_i32_0 = arith.constant 0 : i32
    %c0_i32_1 = arith.constant 0 : i32
    %c0_i32_2 = arith.constant 0 : i32
    return %c0_i32, %c0_i32_0, %c0_i32_1 : i32, i32, i32
  }
  func.func @transform_2(%arg0: i32) -> (i32, i32) {
    %c0_i32 = arith.constant 0 : i32
    %c0_i32_0 = arith.constant 0 : i32
    %c0_i32_1 = arith.constant 0 : i32
    return %c0_i32, %c0_i32_0 : i32, i32
  }
  func.func @transform_3(%arg0: i32) -> (i32, i32, i32) {
    %c0_i32 = arith.constant 0 : i32
    %c0_i32_0 = arith.constant 0 : i32
    %c0_i32_1 = arith.constant 0 : i32
    %c0_i32_2 = arith.constant 0 : i32
    return %c0_i32, %c0_i32_0, %c0_i32_1 : i32, i32, i32
  }
  func.func @transform_4(%arg0: i32) -> (i32, i32) {
    %c0_i32 = arith.constant 0 : i32
    %c0_i32_0 = arith.constant 0 : i32
    %c0_i32_1 = arith.constant 0 : i32
    return %c0_i32, %c0_i32_0 : i32, i32
  }
  func.func @transform_5(%arg0: i32) -> (i32, i32) {
    %c0_i32 = arith.constant 0 : i32
    %c0_i32_0 = arith.constant 0 : i32
    %c0_i32_1 = arith.constant 0 : i32
    return %c0_i32, %c0_i32_0 : i32, i32
  }
  func.func @transform_6(%arg0: i32) -> (i32, i32) {
    %c0_i32 = arith.constant 0 : i32
    %c0_i32_0 = arith.constant 0 : i32
    %c0_i32_1 = arith.constant 0 : i32
    return %c0_i32, %c0_i32_0 : i32, i32
  }
  func.func @transform_7(%arg0: i32) -> (i32, i32, i32) {
    %c0_i32 = arith.constant 0 : i32
    %c0_i32_0 = arith.constant 0 : i32
    %c0_i32_1 = arith.constant 0 : i32
    return %arg0, %c0_i32, %c0_i32_0 : i32, i32, i32
  }
}

</mosaic_0001>

<llo_original>
// kernel: convnet_forward.1
$region0: #{convnet_forward.1}
  #allocation0 [shape = 'u32[]', space=smem, size = 0x4, offset = 0x4, fixed_abs, tag = 'smem constant byte address 0x4 - core index']
  #allocation1 [shape = 'u32[144,128]{1,0:T(1,128)}', space=vmem, size = 0x12000, scoped, tag = 'internal scratch']
  %s0 = inlined_call_operand.vmem [shape: bf16[2,128,48], index: 0, kind: input, shape index: {}]
  %s1 = inlined_call_operand.vmem [shape: bf16[3,48,224], index: 1, kind: input, shape index: {}]
  %s2 = inlined_call_operand.vmem [shape: f32[1,224], index: 2, kind: input, shape index: {}]
  %s3 = inlined_call_operand.hbm [shape: bf16[3,224,384], index: 3, kind: input, shape index: {}]
  %s4 = inlined_call_operand.vmem [shape: f32[1,384], index: 4, kind: input, shape index: {}]
  %s5 = inlined_call_operand.vmem [shape: bf16[4608,128], index: 5, kind: input, shape index: {}]
  %s6 = inlined_call_operand.vmem [shape: f32[1,128], index: 6, kind: input, shape index: {}]
  %s7 = inlined_call_operand.hbm [shape: f32[2,8,128], index: 7, kind: output, shape index: {}]
  %s8 = sld [smem:[#allocation0]]
  $region65: #{convnet_forward.1} parent=0
    _
  %s10 = ssub.s32 1, %s8
  %s11 = scalar_select 0, %s10, %s8
  $region1: #{convnet_forward.1} parent=0
    #allocation2 [shape = 'u8[516096]{0}', space=vmem, size = 0x7e000, scoped, tag = 'input window, operand 3, single buffered']
    #allocation3 [shape = 's32[2]{0}', space=sflag, size = 0x8, scoped, tag = 'scoped memory for convnet_forward.1']
    #allocation4 [shape = 's32[2]{0}', space=sflag, size = 0x8, scoped, tag = 'scoped memory for convnet_forward.1']
    #allocation5 [shape = 'u8[8192]{0}', space=vmem, size = 0x2000, scoped, tag = 'output window, operand 0']
    %12 = vsyncpa [#allocation3], 0
    %13 = vsyncpa [#allocation4], 0
    %s14 = scalar_lea.sflag [#allocation4], 1
    %15 = vsyncpa %s14, 0
    loop: start=0, step=1, limit=4
    $region2: #{convnet_forward.1} parent=1 // loop_pre_header
      _
    $region3: #{convnet_forward.1} parent=1 // loop_header
      %s17 = sphi 0, %s21
      %p18 = scmp.ge.s32.totalorder %s17, 4
      %s27 = sphi 0, %s29
      %s30 = sphi 0, %s27
      %s31 = sphi 0, %s30
      %s47 = sphi 0, %s31
      %s51 = sphi 0, %s51
      %s53 = sphi 0, %s51
      %s54 = sphi 0, %s53
      %s68 = sphi 0, %s54
      %s72 = sphi 0, %s72
      %s74 = sphi 0, %s72
      %s75 = sphi 0, %s74
      %s89 = sphi 0, %s75
      %s93 = sphi 0, %s93
      %s95 = sphi 0, %s93
      %s96 = sphi 0, %s95
      %s110 = sphi 0, %s96
      %s114 = sphi 0, %s114
      %s116 = sphi 0, %s114
      %s117 = sphi 0, %s116
      %s131 = sphi 0, %s117
      %s135 = sphi 0, %s135
      %s137 = sphi 0, %s135
      %s138 = sphi 0, %s137
      %s152 = sphi 0, %s138
      %s156 = sphi 0, %s156
      %s158 = sphi 0, %s156
      %s159 = sphi 0, %s158
      %s173 = sphi 0, %s159
      %s179 = sphi 0, %s181
      %s182 = sphi 0, %s179
      %s183 = sphi 0, %s182
      %s199 = sphi 0, %s183
    $region4: #{convnet_forward.1} parent=1 // loop_header_branch
      %20 = sbr.rel (%p18) target = $region8
    $region5: #{convnet_forward.1} parent=1 // loop_body
      %s22 = ssub.s32 %s17, 1
      %s23 = ssub.s32 %s17, 2
      %s24 = sadd.s32 %s17, 1
      %s25 = ssub.s32 %s17, %s24
      %p26 = scmp.eq.s32.totalorder %s25, 0
      %s28 = sadd.s32 %s27, 1
      %s29 = scalar_select %p26, %s27, %s28
      %p32 = pneg %p26
      %p33 = scmp.eq.s32.totalorder %s17, 1
      %p34 = por %p32, %p33
      %p35 = scmp.ne.s32.totalorder %s27, %s30
      %p36 = scmp.eq.s32.totalorder %s17, 0
      %p37 = por %p35, %p36
      %p38 = scmp.ne.s32.totalorder %s27, %s30
      %p39 = scmp.eq.s32.totalorder %s22, 1
      %p40 = por %p38, %p39
      %p41 = scmp.ne.s32.totalorder %s30, %s31
      %p42 = scmp.eq.s32.totalorder %s22, 0
      %p43 = por %p41, %p42
      %p44 = scmp.ne.s32.totalorder %s30, %s31
      %p45 = scmp.eq.s32.totalorder %s23, 1
      %p46 = por %p44, %p45
      %p48 = scmp.ne.s32.totalorder %s31, %s47
      %p49 = scmp.eq.s32.totalorder %s23, 0
      %p50 = por %p48, %p49
      %s52 = sadd.s32 %s51, 1
      %p55 = scmp.eq.s32.totalorder %s17, 1
      %p56 = scmp.ne.s32.totalorder %s51, %s53
      %p57 = scmp.eq.s32.totalorder %s17, 0
      %p58 = por %p56, %p57
      %p59 = scmp.ne.s32.totalorder %s51, %s53
      %p60 = scmp.eq.s32.totalorder %s22, 1
      %p61 = por %p59, %p60
      %p62 = scmp.ne.s32.totalorder %s53, %s54
      %p63 = scmp.eq.s32.totalorder %s22, 0
      %p64 = por %p62, %p63
      %p65 = scmp.ne.s32.totalorder %s53, %s54
      %p66 = scmp.eq.s32.totalorder %s23, 1
      %p67 = por %p65, %p66
      %p69 = scmp.ne.s32.totalorder %s54, %s68
      %p70 = scmp.eq.s32.totalorder %s23, 0
      %p71 = por %p69, %p70
      %s73 = sadd.s32 %s72, 1
      %p76 = scmp.eq.s32.totalorder %s17, 1
      %p77 = scmp.ne.s32.totalorder %s72, %s74
      %p78 = scmp.eq.s32.totalorder %s17, 0
      %p79 = por %p77, %p78
      %p80 = scmp.ne.s32.totalorder %s72, %s74
      %p81 = scmp.eq.s32.totalorder %s22, 1
      %p82 = por %p80, %p81
      %p83 = scmp.ne.s32.totalorder %s74, %s75
      %p84 = scmp.eq.s32.totalorder %s22, 0
      %p85 = por %p83, %p84
      %p86 = scmp.ne.s32.totalorder %s74, %s75
      %p87 = scmp.eq.s32.totalorder %s23, 1
      %p88 = por %p86, %p87
      %p90 = scmp.ne.s32.totalorder %s75, %s89
      %p91 = scmp.eq.s32.totalorder %s23, 0
      %p92 = por %p90, %p91
      %s94 = sadd.s32 %s93, 1
      %p97 = scmp.eq.s32.totalorder %s17, 1
      %p98 = scmp.ne.s32.totalorder %s93, %s95
      %p99 = scmp.eq.s32.totalorder %s17, 0
      %p100 = por %p98, %p99
      %p101 = scmp.ne.s32.totalorder %s93, %s95
      %p102 = scmp.eq.s32.totalorder %s22, 1
      %p103 = por %p101, %p102
      %p104 = scmp.ne.s32.totalorder %s95, %s96
      %p105 = scmp.eq.s32.totalorder %s22, 0
      %p106 = por %p104, %p105
      %p107 = scmp.ne.s32.totalorder %s95, %s96
      %p108 = scmp.eq.s32.totalorder %s23, 1
      %p109 = por %p107, %p108
      %p111 = scmp.ne.s32.totalorder %s96, %s110
      %p112 = scmp.eq.s32.totalorder %s23, 0
      %p113 = por %p111, %p112
      %s115 = sadd.s32 %s114, 1
      %p118 = scmp.eq.s32.totalorder %s17, 1
      %p119 = scmp.ne.s32.totalorder %s114, %s116
      %p120 = scmp.eq.s32.totalorder %s17, 0
      %p121 = por %p119, %p120
      %p122 = scmp.ne.s32.totalorder %s114, %s116
      %p123 = scmp.eq.s32.totalorder %s22, 1
      %p124 = por %p122, %p123
      %p125 = scmp.ne.s32.totalorder %s116, %s117
      %p126 = scmp.eq.s32.totalorder %s22, 0
      %p127 = por %p125, %p126
      %p128 = scmp.ne.s32.totalorder %s116, %s117
      %p129 = scmp.eq.s32.totalorder %s23, 1
      %p130 = por %p128, %p129
      %p132 = scmp.ne.s32.totalorder %s117, %s131
      %p133 = scmp.eq.s32.totalorder %s23, 0
      %p134 = por %p132, %p133
      %s136 = sadd.s32 %s135, 1
      %p139 = scmp.eq.s32.totalorder %s17, 1
      %p140 = scmp.ne.s32.totalorder %s135, %s137
      %p141 = scmp.eq.s32.totalorder %s17, 0
      %p142 = por %p140, %p141
      %p143 = scmp.ne.s32.totalorder %s135, %s137
      %p144 = scmp.eq.s32.totalorder %s22, 1
      %p145 = por %p143, %p144
      %p146 = scmp.ne.s32.totalorder %s137, %s138
      %p147 = scmp.eq.s32.totalorder %s22, 0
      %p148 = por %p146, %p147
      %p149 = scmp.ne.s32.totalorder %s137, %s138
      %p150 = scmp.eq.s32.totalorder %s23, 1
      %p151 = por %p149, %p150
      %p153 = scmp.ne.s32.totalorder %s138, %s152
      %p154 = scmp.eq.s32.totalorder %s23, 0
      %p155 = por %p153, %p154
      %s157 = sadd.s32 %s156, 1
      %p160 = scmp.eq.s32.totalorder %s17, 1
      %p161 = scmp.ne.s32.totalorder %s156, %s158
      %p162 = scmp.eq.s32.totalorder %s17, 0
      %p163 = por %p161, %p162
      %p164 = scmp.ne.s32.totalorder %s156, %s158
      %p165 = scmp.eq.s32.totalorder %s22, 1
      %p166 = por %p164, %p165
      %p167 = scmp.ne.s32.totalorder %s158, %s159
      %p168 = scmp.eq.s32.totalorder %s22, 0
      %p169 = por %p167, %p168
      %p170 = scmp.ne.s32.totalorder %s158, %s159
      %p171 = scmp.eq.s32.totalorder %s23, 1
      %p172 = por %p170, %p171
      %p174 = scmp.ne.s32.totalorder %s159, %s173
      %p175 = scmp.eq.s32.totalorder %s23, 0
      %p176 = por %p174, %p175
      %s177 = ssub.s32 %s17, %s24
      %p178 = scmp.eq.s32.totalorder %s177, 0
      %s180 = sadd.s32 %s179, 1
      %s181 = scalar_select %p178, %s179, %s180
      %p184 = pneg %p178
      %p185 = scmp.eq.s32.totalorder %s17, 1
      %p186 = por %p184, %p185
      %p187 = scmp.ne.s32.totalorder %s179, %s182
      %p188 = scmp.eq.s32.totalorder %s17, 0
      %p189 = por %p187, %p188
      %p190 = scmp.ne.s32.totalorder %s179, %s182
      %p191 = scmp.eq.s32.totalorder %s22, 1
      %p192 = por %p190, %p191
      %p193 = scmp.ne.s32.totalorder %s182, %s183
      %p194 = scmp.eq.s32.totalorder %s22, 0
      %p195 = por %p193, %p194
      %p196 = scmp.ne.s32.totalorder %s182, %s183
      %p197 = scmp.eq.s32.totalorder %s23, 1
      %p198 = por %p196, %p197
      %p200 = scmp.ne.s32.totalorder %s183, %s199
      %p201 = scmp.eq.s32.totalorder %s23, 0
      %p202 = por %p200, %p201
      %p203 = scmp.le.s32.totalorder 1, %s17
      %p204 = scmp.lt.s32.totalorder %s17, 3
      %p205 = pnand %p203, %p204
      %p206 = pneg %p205
      // Predicated region
      $region9: #{convnet_forward.1} parent=5 // pred_check
        _
      $region10: #{convnet_forward.1} parent=5 // pred_check_branch
        %208 = sbr.rel (%p205) target = $region12
      $region11: #{convnet_forward.1} parent=5 // pred_region
        %s209 = ssub.s32 %s17, 1
        // Predicated region
        $region13: #{convnet_forward.1} parent=11 // pred_check
          %p210 = pneg %p64
        $region14: #{convnet_forward.1} parent=11 // pred_check_branch
          %212 = sbr.rel (%p210) target = $region16
        $region15: #{convnet_forward.1} parent=11 // pred_region
          _
        $region16: #{convnet_forward.1} parent=11 // pred_fallthru
          _
        // Predicated region
        $region17: #{convnet_forward.1} parent=11 // pred_check
          %p213 = pneg %p85
        $region18: #{convnet_forward.1} parent=11 // pred_check_branch
          %215 = sbr.rel (%p213) target = $region20
        $region19: #{convnet_forward.1} parent=11 // pred_region
          _
        $region20: #{convnet_forward.1} parent=11 // pred_fallthru
          _
        // Predicated region
        $region21: #{convnet_forward.1} parent=11 // pred_check
          %p216 = pneg %p106
        $region22: #{convnet_forward.1} parent=11 // pred_check_branch
          %218 = sbr.rel (%p216) target = $region24
        $region23: #{convnet_forward.1} parent=11 // pred_region
          %s220 = ssub.s32 16128, 16128
          %221 = vsyncadd [#allocation3], %s220
          %s222 = sshll.u32 [#allocation2], 4
          %s223 = int_to_ptr.vmem [resolvable:$true] %s222
          %228 = dma.hbm_to_vmem [thread:$0]  %s3, 16128, %s223, [#allocation3], 192, 192, 12
        $region24: #{convnet_forward.1} parent=11 // pred_fallthru
          _
        // Predicated region
        $region25: #{convnet_forward.1} parent=11 // pred_check
          %p229 = pneg %p127
        $region26: #{convnet_forward.1} parent=11 // pred_check_branch
          %231 = sbr.rel (%p229) target = $region28
        $region27: #{convnet_forward.1} parent=11 // pred_region
          _
        $region28: #{convnet_forward.1} parent=11 // pred_fallthru
          _
        // Predicated region
        $region29: #{convnet_forward.1} parent=11 // pred_check
          %p232 = pneg %p148
        $region30: #{convnet_forward.1} parent=11 // pred_check_branch
          %234 = sbr.rel (%p232) target = $region32
        $region31: #{convnet_forward.1} parent=11 // pred_region
          _
        $region32: #{convnet_forward.1} parent=11 // pred_fallthru
          _
        // Predicated region
        $region33: #{convnet_forward.1} parent=11 // pred_check
          %p235 = pneg %p169
        $region34: #{convnet_forward.1} parent=11 // pred_check_branch
          %237 = sbr.rel (%p235) target = $region36
        $region35: #{convnet_forward.1} parent=11 // pred_region
          _
        $region36: #{convnet_forward.1} parent=11 // pred_fallthru
          _
      $region12: #{convnet_forward.1} parent=5 // pred_fallthru
        _
      %p238 = scmp.lt.s32.totalorder %s17, 2
      // Predicated region
      $region37: #{convnet_forward.1} parent=5 // pred_check
        %p239 = pneg %p238
      $region38: #{convnet_forward.1} parent=5 // pred_check_branch
        %241 = sbr.rel (%p239) target = $region40
      $region39: #{convnet_forward.1} parent=5 // pred_region
        // Predicated region
        $region41: #{convnet_forward.1} parent=39 // pred_check
          %p242 = pneg %p37
        $region42: #{convnet_forward.1} parent=39 // pred_check_branch
          %244 = sbr.rel (%p242) target = $region44
        $region43: #{convnet_forward.1} parent=39 // pred_region
          %p245 = scmp.lt.s32.totalorder %s17, 1
          %s246 = scalar_select %p245, %s17, 1
          %s247 = smul.addr %s246, 16
          %s248 = smul.addr %s247, 4
          %s249 = scalar_lea.vmem %s0, %s248
        $region44: #{convnet_forward.1} parent=39 // pred_fallthru
          _
      $region40: #{convnet_forward.1} parent=5 // pred_fallthru
        _
      %p250 = scmp.le.s32.totalorder 1, %s17
      %p251 = scmp.lt.s32.totalorder %s17, 3
      %p252 = pnand %p250, %p251
      %p253 = pneg %p252
      // Predicated region
      $region45: #{convnet_forward.1} parent=5 // pred_check
        _
      $region46: #{convnet_forward.1} parent=5 // pred_check_branch
        %255 = sbr.rel (%p252) target = $region48
      $region47: #{convnet_forward.1} parent=5 // pred_region
        %s256 = ssub.s32 %s17, 1
        // Predicated region
        $region49: #{convnet_forward.1} parent=47 // pred_check
          %p257 = pneg %p106
        $region50: #{convnet_forward.1} parent=47 // pred_check_branch
          %259 = sbr.rel (%p257) target = $region52
        $region51: #{convnet_forward.1} parent=47 // pred_region
          %260 = dma.done [#allocation3], 16128
        $region52: #{convnet_forward.1} parent=47 // pred_fallthru
          _
        %p261 = scmp.lt.s32.totalorder %s22, 1
        %s262 = scalar_select %p261, %s22, 1
        %s263 = smul.addr %s262, 16
        %s264 = smul.addr %s263, 4
        %s265 = scalar_lea.vmem %s0, %s264
        %p266 = pneg %p43
        %p267 = pneg %p40
        %p268 = pneg %p64
        %p269 = pneg %p61
        %p270 = pneg %p85
        %p271 = pneg %p82
        %p272 = pneg %p106
        %p273 = pneg %p103
        %p274 = pneg %p127
        %p275 = pneg %p124
        %p276 = pneg %p148
        %p277 = pneg %p145
        %p278 = pneg %p169
        %p279 = pneg %p166
        %p280 = pneg %p195
        %p281 = pneg %p192
        %s282 = sand.u32 %s182, 1
        %s283 = scalar_lea.sflag [#allocation4], %s282
        %s284 = sand.u32 %s182, 1
        %s285 = smul.addr %s284, 8
        %s286 = scalar_lea.vmem [#allocation5], %s285
        %p287 = scmp.lt.s32.totalorder %s22, 1
        %s288 = scalar_select %p287, %s22, 1
        %s289 = smul.addr %s288, 16
        %s290 = smul.addr %s289, 4
        %s291 = scalar_lea.vmem %s0, %s290
        %v293 = vld [vmem:[%s291] sm:$0xf]
        %v294 = vld [vmem:[%s291 + $0x4] sm:$0xf]
        %v295 = vld [vmem:[%s291 + $0x8] sm:$0xf]
        %v296 = vld [vmem:[%s291 + $0xc] sm:$0xf]
        %v297 = vld [vmem:[%s291 + $0x10] sm:$0xf]
        %v298 = vld [vmem:[%s291 + $0x14] sm:$0xf]
        %v299 = vld [vmem:[%s291 + $0x18] sm:$0xf]
        %v300 = vld [vmem:[%s291 + $0x1c] sm:$0xf]
        %v301 = vld [vmem:[%s291 + $0x20] sm:$0xf]
        %v302 = vld [vmem:[%s291 + $0x24] sm:$0xf]
        %v303 = vld [vmem:[%s291 + $0x28] sm:$0xf]
        %v304 = vld [vmem:[%s291 + $0x2c] sm:$0xf]
        %v305 = vld [vmem:[%s291 + $0x30] sm:$0xf]
        %v306 = vld [vmem:[%s291 + $0x34] sm:$0xf]
        %v307 = vld [vmem:[%s291 + $0x38] sm:$0xf]
        %v308 = vld [vmem:[%s291 + $0x3c] sm:$0xf]
        %v309 = vld [vmem:[%s1] sm:$0xff]
        %v310 = vld [vmem:[%s1 + $0x8] sm:$0xff]
        %v311 = vld [vmem:[%s1 + $0x10] sm:$0xff]
        %v312 = vld [vmem:[%s1 + $0x18] sm:$0xff]
        %v313 = vld [vmem:[%s1 + $0x20] sm:$0xff]
        %v314 = vld [vmem:[%s1 + $0x28] sm:$0xff]
        %s315 = scalar_lea.vmem %s1, 48
        %v316 = vld [vmem:[%s315] sm:$0xff]
        %v317 = vld [vmem:[%s315 + $0x8] sm:$0xff]
        %v318 = vld [vmem:[%s315 + $0x10] sm:$0xff]
        %v319 = vld [vmem:[%s315 + $0x18] sm:$0xff]
        %v320 = vld [vmem:[%s315 + $0x20] sm:$0xff]
        %v321 = vld [vmem:[%s315 + $0x28] sm:$0xff]
        %v336 = vunpack.c.l.b16 %v294
        %v337 = vunpack.c.l.b16 %v295
        %v338 = vunpack.c.l.b16 %v296
        %v339 = vunpack.c.l.b16 %v297
        %v340 = vunpack.c.l.b16 %v298
        %v341 = vunpack.c.l.b16 %v299
        %v342 = vunpack.c.l.b16 %v300
        %v343 = vunpack.c.l.b16 %v301
        %v344 = vunpack.c.l.b16 %v302
        %v345 = vunpack.c.l.b16 %v303
        %v346 = vunpack.c.l.b16 %v304
        %v347 = vunpack.c.l.b16 %v305
        %v348 = vunpack.c.l.b16 %v306
        %v349 = vunpack.c.l.b16 %v307
        %v350 = vpack.c.b16 %v337, %v336
        %v351 = vpack.c.b16 %v339, %v338
        %v352 = vpack.c.b16 %v341, %v340
        %v353 = vpack.c.b16 %v343, %v342
        %v354 = vpack.c.b16 %v345, %v344
        %v355 = vpack.c.b16 %v347, %v346
        %v356 = vpack.c.b16 %v349, %v348
        %v363 = vunpack.c.l.b16 %v316
        %v364 = vunpack.c.h.b16 %v316
        %v365 = vunpack.c.l.b16 %v317
        %v366 = vunpack.c.h.b16 %v317
        %v367 = vunpack.c.l.b16 %v318
        %v368 = vunpack.c.h.b16 %v318
        %v369 = vunpack.c.l.b16 %v319
        %v370 = vunpack.c.h.b16 %v319
        %v371 = vunpack.c.l.b16 %v320
        %v372 = vunpack.c.h.b16 %v320
        %v373 = vunpack.c.l.b16 %v321
        %v374 = vunpack.c.h.b16 %v321
        %v375 = vpack.c.b16 %v365, %v363
        %v376 = vpack.c.b16 %v366, %v364
        %v377 = vpack.c.b16 %v369, %v367
        %v378 = vpack.c.b16 %v370, %v368
        %v379 = vpack.c.b16 %v373, %v371
        %v380 = vpack.c.b16 %v374, %v372
        %vm387 = vcmask 392192
        %v389 = vsel %vm387, %v350, 0
        %v392 = vsel %vm387, %v351, 0
        %v395 = vsel %vm387, %v352, 0
        %v398 = vsel %vm387, %v353, 0
        %v401 = vsel %vm387, %v354, 0
        %v404 = vsel %vm387, %v355, 0
        %v407 = vsel %vm387, %v356, 0
        %409 = vmatprep.subr.bf16.mxu0 %v376
        %410 = vmatpush1.bf16.msra.mxu0 %v375
        %411 = vmatprep.subr.bf16.mxu0 %v378
        %412 = vmatpush1.bf16.msra.mxu0 %v377
        %413 = vmatprep.subr.bf16.mxu0 %v380
        %414 = vmatpush1.bf16.msra.mxu0 %v379
        %415 = vmatprep.subr.bf16.mxu0 0
        %416 = vmatpush1.bf16.msra.mxu0 0
        %417 = vmatprep.subr.bf16.mxu0 0
        %418 = vmatpush1.bf16.msra.mxu0 0
        %419 = vmatprep.subr.bf16.mxu0 0
        %420 = vmatpush1.bf16.msra.mxu0 0
        %421 = vmatprep.subr.bf16.mxu0 0
        %422 = vmatpush1.bf16.msra.mxu0 0
        %423 = vmatprep.subr.bf16.mxu0 0
        %424 = vmatpush1.bf16.msra.mxu0 0
        %425 = vmatprep.subr.bf16.mxu0 0
        %426 = vmatpush1.bf16.msra.mxu0 0
        %427 = vmatprep.subr.bf16.mxu0 0
        %428 = vmatpush1.bf16.msra.mxu0 0
        %429 = vmatprep.subr.bf16.mxu0 0
        %430 = vmatpush1.bf16.msra.mxu0 0
        %431 = vmatprep.subr.bf16.mxu0 0
        %432 = vmatpush1.bf16.msra.mxu0 0
        %433 = vmatprep.subr.bf16.mxu0 0
        %434 = vmatpush1.bf16.msra.mxu0 0
        %435 = vmatprep.subr.bf16.mxu0 0
        %436 = vmatpush1.bf16.msra.mxu0 0
        %437 = vmatprep.subr.bf16.mxu0 0
        %438 = vmatpush1.bf16.msra.mxu0 0
        %439 = vmatprep.subr.bf16.mxu0 0
        %440 = vmatpush1.bf16.msra.mxu0 0
        %441 = vmatprep.mubr.bf16.mxu0 0
        %442 = vmatmul.mubr.bf16.gmra.mrb[0].mxu0 %v389
        %v443 = vpop.f32.mrb[0].mxu0
        %v444 = vadd.f32 0.0, %v443
        %v445 = vpop.f32.mrb[0].mxu0
        %v446 = vadd.f32 0.0, %v445
        %v447 = vpop.f32.mrb[0].mxu0
        %v448 = vadd.f32 0.0, %v447
        %v449 = vpop.f32.mrb[0].mxu0
        %v450 = vadd.f32 0.0, %v449
        %451 = vmatprep.mubr.bf16.mxu0 0
        %452 = vmatmul.mubr.bf16.gmra.mrb[0].mxu0 %v392
        %v453 = vpop.f32.mrb[0].mxu0
        %v454 = vadd.f32 0.0, %v453
        %v455 = vpop.f32.mrb[0].mxu0
        %v456 = vadd.f32 0.0, %v455
        %v457 = vpop.f32.mrb[0].mxu0
        %v458 = vadd.f32 0.0, %v457
        %v459 = vpop.f32.mrb[0].mxu0
        %v460 = vadd.f32 0.0, %v459
        %461 = vmatprep.mubr.bf16.mxu0 0
        %462 = vmatmul.mubr.bf16.gmra.mrb[0].mxu0 %v395
        %v463 = vpop.f32.mrb[0].mxu0
        %v464 = vadd.f32 0.0, %v463
        %v465 = vpop.f32.mrb[0].mxu0
        %v466 = vadd.f32 0.0, %v465
        %v467 = vpop.f32.mrb[0].mxu0
        %v468 = vadd.f32 0.0, %v467
        %v469 = vpop.f32.mrb[0].mxu0
        %v470 = vadd.f32 0.0, %v469
        %471 = vmatprep.mubr.bf16.mxu0 0
        %472 = vmatmul.mubr.bf16.gmra.mrb[0].mxu0 %v398
        %v473 = vpop.f32.mrb[0].mxu0
        %v474 = vadd.f32 0.0, %v473
        %v475 = vpop.f32.mrb[0].mxu0
        %v476 = vadd.f32 0.0, %v475
        %v477 = vpop.f32.mrb[0].mxu0
        %v478 = vadd.f32 0.0, %v477
        %v479 = vpop.f32.mrb[0].mxu0
        %v480 = vadd.f32 0.0, %v479
        %481 = vmatprep.mubr.bf16.mxu0 0
        %482 = vmatmul.mubr.bf16.gmra.mrb[0].mxu0 %v401
        %v483 = vpop.f32.mrb[0].mxu0
        %v484 = vadd.f32 0.0, %v483
        %v485 = vpop.f32.mrb[0].mxu0
        %v486 = vadd.f32 0.0, %v485
        %v487 = vpop.f32.mrb[0].mxu0
        %v488 = vadd.f32 0.0, %v487
        %v489 = vpop.f32.mrb[0].mxu0
        %v490 = vadd.f32 0.0, %v489
        %491 = vmatprep.mubr.bf16.mxu0 0
        %492 = vmatmul.mubr.bf16.gmra.mrb[0].mxu0 %v404
        %v493 = vpop.f32.mrb[0].mxu0
        %v494 = vadd.f32 0.0, %v493
        %v495 = vpop.f32.mrb[0].mxu0
        %v496 = vadd.f32 0.0, %v495
        %v497 = vpop.f32.mrb[0].mxu0
        %v498 = vadd.f32 0.0, %v497
        %v499 = vpop.f32.mrb[0].mxu0
        %v500 = vadd.f32 0.0, %v499
        %501 = vmatprep.mubr.bf16.mxu0 0
        %502 = vmatmul.mubr.bf16.gmra.mrb[0].mxu0 %v407
        %v503 = vpop.f32.mrb[0].mxu0
        %v504 = vadd.f32 0.0, %v503
        %v505 = vpop.f32.mrb[0].mxu0
        %v506 = vadd.f32 0.0, %v505
        %v507 = vpop.f32.mrb[0].mxu0
        %v508 = vadd.f32 0.0, %v507
        %v509 = vpop.f32.mrb[0].mxu0
        %v510 = vadd.f32 0.0, %v509
        %511 = vdwg.mxu0
        %v513 = vunpack.c.l.b16 %v293
        %v514 = vpack.c.b16 %v336, %v513
        %v515 = vpack.c.b16 %v338, %v337
        %v516 = vpack.c.b16 %v340, %v339
        %v517 = vpack.c.b16 %v342, %v341
        %v518 = vpack.c.b16 %v344, %v343
        %v519 = vpack.c.b16 %v346, %v345
        %v520 = vpack.c.b16 %v348, %v347
        %v527 = vunpack.c.l.b16 %v309
        %v528 = vunpack.c.h.b16 %v309
        %v529 = vunpack.c.l.b16 %v310
        %v530 = vunpack.c.h.b16 %v310
        %v531 = vunpack.c.l.b16 %v311
        %v532 = vunpack.c.h.b16 %v311
        %v533 = vunpack.c.l.b16 %v312
        %v534 = vunpack.c.h.b16 %v312
        %v535 = vunpack.c.l.b16 %v313
        %v536 = vunpack.c.h.b16 %v313
        %v537 = vunpack.c.l.b16 %v314
        %v538 = vunpack.c.h.b16 %v314
        %v539 = vpack.c.b16 %v529, %v527
        %v540 = vpack.c.b16 %v530, %v528
        %v541 = vpack.c.b16 %v533, %v531
        %v542 = vpack.c.b16 %v534, %v532
        %v543 = vpack.c.b16 %v537, %v535
        %v544 = vpack.c.b16 %v538, %v536
        %v552 = vsel %vm387, %v514, 0
        %v555 = vsel %vm387, %v515, 0
        %v558 = vsel %vm387, %v516, 0
        %v561 = vsel %vm387, %v517, 0
        %v564 = vsel %vm387, %v518, 0
        %v567 = vsel %vm387, %v519, 0
        %v570 = vsel %vm387, %v520, 0
        %572 = vmatprep.subr.bf16.mxu0 %v540
        %573 = vmatpush1.bf16.msra.mxu0 %v539
        %574 = vmatprep.subr.bf16.mxu0 %v542
        %575 = vmatpush1.bf16.msra.mxu0 %v541
        %576 = vmatprep.subr.bf16.mxu0 %v544
        %577 = vmatpush1.bf16.msra.mxu0 %v543
        %578 = vmatprep.subr.bf16.mxu0 0
        %579 = vmatpush1.bf16.msra.mxu0 0
        %580 = vmatprep.subr.bf16.mxu0 0
        %581 = vmatpush1.bf16.msra.mxu0 0
        %582 = vmatprep.subr.bf16.mxu0 0
        %583 = vmatpush1.bf16.msra.mxu0 0
        %584 = vmatprep.subr.bf16.mxu0 0
        %585 = vmatpush1.bf16.msra.mxu0 0
        %586 = vmatprep.subr.bf16.mxu0 0
        %587 = vmatpush1.bf16.msra.mxu0 0
        %588 = vmatprep.subr.bf16.mxu0 0
        %589 = vmatpush1.bf16.msra.mxu0 0
        %590 = vmatprep.subr.bf16.mxu0 0
        %591 = vmatpush1.bf16.msra.mxu0 0
        %592 = vmatprep.subr.bf16.mxu0 0
        %593 = vmatpush1.bf16.msra.mxu0 0
        %594 = vmatprep.subr.bf16.mxu0 0
        %595 = vmatpush1.bf16.msra.mxu0 0
        %596 = vmatprep.subr.bf16.mxu0 0
        %597 = vmatpush1.bf16.msra.mxu0 0
        %598 = vmatprep.subr.bf16.mxu0 0
        %599 = vmatpush1.bf16.msra.mxu0 0
        %600 = vmatprep.subr.bf16.mxu0 0
        %601 = vmatpush1.bf16.msra.mxu0 0
        %602 = vmatprep.subr.bf16.mxu0 0
        %603 = vmatpush1.bf16.msra.mxu0 0
        %604 = vmatprep.mubr.bf16.mxu0 0
        %605 = vmatmul.mubr.bf16.gmra.mrb[0].mxu0 %v552
        %v606 = vpop.f32.mrb[0].mxu0
        %v607 = vadd.f32 %v444, %v606
        %v608 = vpop.f32.mrb[0].mxu0
        %v609 = vadd.f32 %v446, %v608
        %v610 = vpop.f32.mrb[0].mxu0
        %v611 = vadd.f32 %v448, %v610
        %v612 = vpop.f32.mrb[0].mxu0
        %v613 = vadd.f32 %v450, %v612
        %614 = vmatprep.mubr.bf16.mxu0 0
        %615 = vmatmul.mubr.bf16.gmra.mrb[0].mxu0 %v555
        %v616 = vpop.f32.mrb[0].mxu0
        %v617 = vadd.f32 %v454, %v616
        %v618 = vpop.f32.mrb[0].mxu0
        %v619 = vadd.f32 %v456, %v618
        %v620 = vpop.f32.mrb[0].mxu0
        %v621 = vadd.f32 %v458, %v620
        %v622 = vpop.f32.mrb[0].mxu0
        %v623 = vadd.f32 %v460, %v622
        %624 = vmatprep.mubr.bf16.mxu0 0
        %625 = vmatmul.mubr.bf16.gmra.mrb[0].mxu0 %v558
        %v626 = vpop.f32.mrb[0].mxu0
        %v627 = vadd.f32 %v464, %v626
        %v628 = vpop.f32.mrb[0].mxu0
        %v629 = vadd.f32 %v466, %v628
        %v630 = vpop.f32.mrb[0].mxu0
        %v631 = vadd.f32 %v468, %v630
        %v632 = vpop.f32.mrb[0].mxu0
        %v633 = vadd.f32 %v470, %v632
        %634 = vmatprep.mubr.bf16.mxu0 0
        %635 = vmatmul.mubr.bf16.gmra.mrb[0].mxu0 %v561
        %v636 = vpop.f32.mrb[0].mxu0
        %v637 = vadd.f32 %v474, %v636
        %v638 = vpop.f32.mrb[0].mxu0
        %v639 = vadd.f32 %v476, %v638
        %v640 = vpop.f32.mrb[0].mxu0
        %v641 = vadd.f32 %v478, %v640
        %v642 = vpop.f32.mrb[0].mxu0
        %v643 = vadd.f32 %v480, %v642
        %644 = vmatprep.mubr.bf16.mxu0 0
        %645 = vmatmul.mubr.bf16.gmra.mrb[0].mxu0 %v564
        %v646 = vpop.f32.mrb[0].mxu0
        %v647 = vadd.f32 %v484, %v646
        %v648 = vpop.f32.mrb[0].mxu0
        %v649 = vadd.f32 %v486, %v648
        %v650 = vpop.f32.mrb[0].mxu0
        %v651 = vadd.f32 %v488, %v650
        %v652 = vpop.f32.mrb[0].mxu0
        %v653 = vadd.f32 %v490, %v652
        %654 = vmatprep.mubr.bf16.mxu0 0
        %655 = vmatmul.mubr.bf16.gmra.mrb[0].mxu0 %v567
        %v656 = vpop.f32.mrb[0].mxu0
        %v657 = vadd.f32 %v494, %v656
        %v658 = vpop.f32.mrb[0].mxu0
        %v659 = vadd.f32 %v496, %v658
        %v660 = vpop.f32.mrb[0].mxu0
        %v661 = vadd.f32 %v498, %v660
        %v662 = vpop.f32.mrb[0].mxu0
        %v663 = vadd.f32 %v500, %v662
        %664 = vmatprep.mubr.bf16.mxu0 0
        %665 = vmatmul.mubr.bf16.gmra.mrb[0].mxu0 %v570
        %v666 = vpop.f32.mrb[0].mxu0
        %v667 = vadd.f32 %v504, %v666
        %v668 = vpop.f32.mrb[0].mxu0
        %v669 = vadd.f32 %v506, %v668
        %v670 = vpop.f32.mrb[0].mxu0
        %v671 = vadd.f32 %v508, %v670
        %v672 = vpop.f32.mrb[0].mxu0
        %v673 = vadd.f32 %v510, %v672
        %674 = vdwg.mxu0
        %s675 = scalar_lea.vmem %s1, 96
        %v676 = vld [vmem:[%s675] sm:$0xff]
        %v677 = vld [vmem:[%s675 + $0x8] sm:$0xff]
        %v678 = vld [vmem:[%s675 + $0x10] sm:$0xff]
        %v679 = vld [vmem:[%s675 + $0x18] sm:$0xff]
        %v680 = vld [vmem:[%s675 + $0x20] sm:$0xff]
        %v681 = vld [vmem:[%s675 + $0x28] sm:$0xff]
        %v683 = vunpack.c.l.b16 %v308
        %v684 = vpack.c.b16 %v683, %v349
        %v691 = vunpack.c.l.b16 %v676
        %v692 = vunpack.c.h.b16 %v676
        %v693 = vunpack.c.l.b16 %v677
        %v694 = vunpack.c.h.b16 %v677
        %v695 = vunpack.c.l.b16 %v678
        %v696 = vunpack.c.h.b16 %v678
        %v697 = vunpack.c.l.b16 %v679
        %v698 = vunpack.c.h.b16 %v679
        %v699 = vunpack.c.l.b16 %v680
        %v700 = vunpack.c.h.b16 %v680
        %v701 = vunpack.c.l.b16 %v681
        %v702 = vunpack.c.h.b16 %v681
        %v703 = vpack.c.b16 %v693, %v691
        %v704 = vpack.c.b16 %v694, %v692
        %v705 = vpack.c.b16 %v697, %v695
        %v706 = vpack.c.b16 %v698, %v696
        %v707 = vpack.c.b16 %v701, %v699
        %v708 = vpack.c.b16 %v702, %v700
        %v716 = vsel %vm387, %v684, 0
        %718 = vmatprep.subr.bf16.mxu0 %v704
        %719 = vmatpush1.bf16.msra.mxu0 %v703
        %720 = vmatprep.subr.bf16.mxu0 %v706
        %721 = vmatpush1.bf16.msra.mxu0 %v705
        %722 = vmatprep.subr.bf16.mxu0 %v708
        %723 = vmatpush1.bf16.msra.mxu0 %v707
        %724 = vmatprep.subr.bf16.mxu0 0
        %725 = vmatpush1.bf16.msra.mxu0 0
        %726 = vmatprep.subr.bf16.mxu0 0
        %727 = vmatpush1.bf16.msra.mxu0 0
        %728 = vmatprep.subr.bf16.mxu0 0
        %729 = vmatpush1.bf16.msra.mxu0 0
        %730 = vmatprep.subr.bf16.mxu0 0
        %731 = vmatpush1.bf16.msra.mxu0 0
        %732 = vmatprep.subr.bf16.mxu0 0
        %733 = vmatpush1.bf16.msra.mxu0 0
        %734 = vmatprep.subr.bf16.mxu0 0
        %735 = vmatpush1.bf16.msra.mxu0 0
        %736 = vmatprep.subr.bf16.mxu0 0
        %737 = vmatpush1.bf16.msra.mxu0 0
        %738 = vmatprep.subr.bf16.mxu0 0
        %739 = vmatpush1.bf16.msra.mxu0 0
        %740 = vmatprep.subr.bf16.mxu0 0
        %741 = vmatpush1.bf16.msra.mxu0 0
        %742 = vmatprep.subr.bf16.mxu0 0
        %743 = vmatpush1.bf16.msra.mxu0 0
        %744 = vmatprep.subr.bf16.mxu0 0
        %745 = vmatpush1.bf16.msra.mxu0 0
        %746 = vmatprep.subr.bf16.mxu0 0
        %747 = vmatpush1.bf16.msra.mxu0 0
        %748 = vmatprep.subr.bf16.mxu0 0
        %749 = vmatpush1.bf16.msra.mxu0 0
        %750 = vmatprep.mubr.bf16.mxu0 0
        %751 = vmatmul.mubr.bf16.gmra.mrb[0].mxu0 %v555
        %v752 = vpop.f32.mrb[0].mxu0
        %v753 = vadd.f32 0.0, %v752
        %v754 = vpop.f32.mrb[0].mxu0
        %v755 = vadd.f32 0.0, %v754
        %v756 = vpop.f32.mrb[0].mxu0
        %v757 = vadd.f32 0.0, %v756
        %v758 = vpop.f32.mrb[0].mxu0
        %v759 = vadd.f32 0.0, %v758
        %760 = vmatprep.mubr.bf16.mxu0 0
        %761 = vmatmul.mubr.bf16.gmra.mrb[0].mxu0 %v558
        %v762 = vpop.f32.mrb[0].mxu0
        %v763 = vadd.f32 0.0, %v762
        %v764 = vpop.f32.mrb[0].mxu0
        %v765 = vadd.f32 0.0, %v764
        %v766 = vpop.f32.mrb[0].mxu0
        %v767 = vadd.f32 0.0, %v766
        %v768 = vpop.f32.mrb[0].mxu0
        %v769 = vadd.f32 0.0, %v768
        %770 = vmatprep.mubr.bf16.mxu0 0
        %771 = vmatmul.mubr.bf16.gmra.mrb[0].mxu0 %v561
        %v772 = vpop.f32.mrb[0].mxu0
        %v773 = vadd.f32 0.0, %v772
        %v774 = vpop.f32.mrb[0].mxu0
        %v775 = vadd.f32 0.0, %v774
        %v776 = vpop.f32.mrb[0].mxu0
        %v777 = vadd.f32 0.0, %v776
        %v778 = vpop.f32.mrb[0].mxu0
        %v779 = vadd.f32 0.0, %v778
        %780 = vmatprep.mubr.bf16.mxu0 0
        %781 = vmatmul.mubr.bf16.gmra.mrb[0].mxu0 %v564
        %v782 = vpop.f32.mrb[0].mxu0
        %v783 = vadd.f32 0.0, %v782
        %v784 = vpop.f32.mrb[0].mxu0
        %v785 = vadd.f32 0.0, %v784
        %v786 = vpop.f32.mrb[0].mxu0
        %v787 = vadd.f32 0.0, %v786
        %v788 = vpop.f32.mrb[0].mxu0
        %v789 = vadd.f32 0.0, %v788
        %790 = vmatprep.mubr.bf16.mxu0 0
        %791 = vmatmul.mubr.bf16.gmra.mrb[0].mxu0 %v567
        %v792 = vpop.f32.mrb[0].mxu0
        %v793 = vadd.f32 0.0, %v792
        %v794 = vpop.f32.mrb[0].mxu0
        %v795 = vadd.f32 0.0, %v794
        %v796 = vpop.f32.mrb[0].mxu0
        %v797 = vadd.f32 0.0, %v796
        %v798 = vpop.f32.mrb[0].mxu0
        %v799 = vadd.f32 0.0, %v798
        %800 = vmatprep.mubr.bf16.mxu0 0
        %801 = vmatmul.mubr.bf16.gmra.mrb[0].mxu0 %v570
        %v802 = vpop.f32.mrb[0].mxu0
        %v803 = vadd.f32 0.0, %v802
        %v804 = vpop.f32.mrb[0].mxu0
        %v805 = vadd.f32 0.0, %v804
        %v806 = vpop.f32.mrb[0].mxu0
        %v807 = vadd.f32 0.0, %v806
        %v808 = vpop.f32.mrb[0].mxu0
        %v809 = vadd.f32 0.0, %v808
        %810 = vmatprep.mubr.bf16.mxu0 0
        %811 = vmatmul.mubr.bf16.gmra.mrb[0].mxu0 %v716
        %v812 = vpop.f32.mrb[0].mxu0
        %v813 = vadd.f32 0.0, %v812
        %v814 = vpop.f32.mrb[0].mxu0
        %v815 = vadd.f32 0.0, %v814
        %v816 = vpop.f32.mrb[0].mxu0
        %v817 = vadd.f32 0.0, %v816
        %v818 = vpop.f32.mrb[0].mxu0
        %v819 = vadd.f32 0.0, %v818
        %820 = vdwg.mxu0
        %v821 = vadd.f32 %v607, %v753
        %v822 = vadd.f32 %v609, %v755
        %v823 = vadd.f32 %v611, %v757
        %v824 = vadd.f32 %v613, %v759
        %v825 = vadd.f32 %v617, %v763
        %v826 = vadd.f32 %v619, %v765
        %v827 = vadd.f32 %v621, %v767
        %v828 = vadd.f32 %v623, %v769
        %v829 = vadd.f32 %v627, %v773
        %v830 = vadd.f32 %v629, %v775
        %v831 = vadd.f32 %v631, %v777
        %v832 = vadd.f32 %v633, %v779
        %v833 = vadd.f32 %v637, %v783
        %v834 = vadd.f32 %v639, %v785
        %v835 = vadd.f32 %v641, %v787
        %v836 = vadd.f32 %v643, %v789
        %v837 = vadd.f32 %v647, %v793
        %v838 = vadd.f32 %v649, %v795
        %v839 = vadd.f32 %v651, %v797
        %v840 = vadd.f32 %v653, %v799
        %v841 = vadd.f32 %v657, %v803
        %v842 = vadd.f32 %v659, %v805
        %v843 = vadd.f32 %v661, %v807
        %v844 = vadd.f32 %v663, %v809
        %v845 = vadd.f32 %v667, %v813
        %v846 = vadd.f32 %v669, %v815
        %v847 = vadd.f32 %v671, %v817
        %v848 = vadd.f32 %v673, %v819
        %v849 = vld [vmem:[%s2] sm:$0x3]
        %v851 = vlaneseq
        %v852 = vshrl.u32 %v851, 7
        %v853 = vsub.s32 0, %v852
        %v854 = vrot.slane %v849, %v853
        %v855 = vlaneseq
        %v856 = vshrl.u32 %v855, 7
        %v857 = vsub.s32 1, %v856
        %v858 = vrot.slane %v849, %v857
        %v861 = vadd.f32 %v821, %v854
        %v862 = vadd.f32 %v822, %v858
        %v863 = vadd.f32 %v823, %v854
        %v864 = vadd.f32 %v824, %v858
        %v865 = vadd.f32 %v825, %v854
        %v866 = vadd.f32 %v826, %v858
        %v867 = vadd.f32 %v827, %v854
        %v868 = vadd.f32 %v828, %v858
        %v869 = vadd.f32 %v829, %v854
        %v870 = vadd.f32 %v830, %v858
        %v871 = vadd.f32 %v831, %v854
        %v872 = vadd.f32 %v832, %v858
        %v873 = vadd.f32 %v833, %v854
        %v874 = vadd.f32 %v834, %v858
        %v875 = vadd.f32 %v835, %v854
        %v876 = vadd.f32 %v836, %v858
        %v877 = vadd.f32 %v837, %v854
        %v878 = vadd.f32 %v838, %v858
        %v879 = vadd.f32 %v839, %v854
        %v880 = vadd.f32 %v840, %v858
        %v881 = vadd.f32 %v841, %v854
        %v882 = vadd.f32 %v842, %v858
        %v883 = vadd.f32 %v843, %v854
        %v884 = vadd.f32 %v844, %v858
        %v885 = vadd.f32 %v845, %v854
        %v886 = vadd.f32 %v846, %v858
        %v887 = vadd.f32 %v847, %v854
        %v888 = vadd.f32 %v848, %v858
        %v889 = vmax.f32 %v861, 0.0
        %v890 = vmax.f32 %v862, 0.0
        %v891 = vmax.f32 %v863, 0.0
        %v892 = vmax.f32 %v864, 0.0
        %v893 = vmax.f32 %v865, 0.0
        %v894 = vmax.f32 %v866, 0.0
        %v895 = vmax.f32 %v867, 0.0
        %v896 = vmax.f32 %v868, 0.0
        %v897 = vmax.f32 %v869, 0.0
        %v898 = vmax.f32 %v870, 0.0
        %v899 = vmax.f32 %v871, 0.0
        %v900 = vmax.f32 %v872, 0.0
        %v901 = vmax.f32 %v873, 0.0
        %v902 = vmax.f32 %v874, 0.0
        %v903 = vmax.f32 %v875, 0.0
        %v904 = vmax.f32 %v876, 0.0
        %v905 = vmax.f32 %v877, 0.0
        %v906 = vmax.f32 %v878, 0.0
        %v907 = vmax.f32 %v879, 0.0
        %v908 = vmax.f32 %v880, 0.0
        %v909 = vmax.f32 %v881, 0.0
        %v910 = vmax.f32 %v882, 0.0
        %v911 = vmax.f32 %v883, 0.0
        %v912 = vmax.f32 %v884, 0.0
        %v913 = vmax.f32 %v885, 0.0
        %v914 = vmax.f32 %v886, 0.0
        %v915 = vmax.f32 %v887, 0.0
        %v916 = vmax.f32 %v888, 0.0
        %v917 = vpack.c.bf16 %v891, %v889
        %v918 = vpack.c.bf16 %v892, %v890
        %v919 = vpack.c.bf16 %v895, %v893
        %v920 = vpack.c.bf16 %v896, %v894
        %v921 = vpack.c.bf16 %v899, %v897
        %v922 = vpack.c.bf16 %v900, %v898
        %v923 = vpack.c.bf16 %v903, %v901
        %v924 = vpack.c.bf16 %v904, %v902
        %v925 = vpack.c.bf16 %v907, %v905
        %v926 = vpack.c.bf16 %v908, %v906
        %v927 = vpack.c.bf16 %v911, %v909
        %v928 = vpack.c.bf16 %v912, %v910
        %v929 = vpack.c.bf16 %v915, %v913
        %v930 = vpack.c.bf16 %v916, %v914
        %v931 = vld [vmem:[#allocation2] sm:$0xff]
        %v932 = vld [vmem:[#allocation2 + $0x8] sm:$0xf]
        %v933 = vld [vmem:[#allocation2 + $0xc] sm:$0xff]
        %v934 = vld [vmem:[#allocation2 + $0x14] sm:$0xf]
        %v935 = vld [vmem:[#allocation2 + $0x18] sm:$0xff]
        %v936 = vld [vmem:[#allocation2 + $0x20] sm:$0xf]
        %v937 = vld [vmem:[#allocation2 + $0x24] sm:$0xff]
        %v938 = vld [vmem:[#allocation2 + $0x2c] sm:$0xf]
        %v939 = vld [vmem:[#allocation2 + $0x30] sm:$0xff]
        %v940 = vld [vmem:[#allocation2 + $0x38] sm:$0xf]
        %v941 = vld [vmem:[#allocation2 + $0x3c] sm:$0xff]
        %v942 = vld [vmem:[#allocation2 + $0x44] sm:$0xf]
        %v943 = vld [vmem:[#allocation2 + $0x48] sm:$0xff]
        %v944 = vld [vmem:[#allocation2 + $0x50] sm:$0xf]
        %v945 = vld [vmem:[#allocation2 + $0x54] sm:$0xff]
        %v946 = vld [vmem:[#allocation2 + $0x5c] sm:$0xf]
        %v947 = vld [vmem:[#allocation2 + $0x60] sm:$0xff]
        %v948 = vld [vmem:[#allocation2 + $0x68] sm:$0xf]
        %v949 = vld [vmem:[#allocation2 + $0x6c] sm:$0xff]
        %v950 = vld [vmem:[#allocation2 + $0x74] sm:$0xf]
        %v951 = vld [vmem:[#allocation2 + $0x78] sm:$0xff]
        %v952 = vld [vmem:[#allocation2 + $0x80] sm:$0xf]
        %v953 = vld [vmem:[#allocation2 + $0x84] sm:$0xff]
        %v954 = vld [vmem:[#allocation2 + $0x8c] sm:$0xf]
        %v955 = vld [vmem:[#allocation2 + $0x90] sm:$0xff]
        %v956 = vld [vmem:[#allocation2 + $0x98] sm:$0xf]
        %v957 = vld [vmem:[#allocation2 + $0x9c] sm:$0xff]
        %v958 = vld [vmem:[#allocation2 + $0xa4] sm:$0xf]
        %v959 = vld [vmem:[#allocation2 + $0xa8] sm:$0xff]
        %v960 = vld [vmem:[#allocation2 + $0xb0] sm:$0xf]
        %v961 = vld [vmem:[#allocation2 + $0xb4] sm:$0xff]
        %v962 = vld [vmem:[#allocation2 + $0xbc] sm:$0xf]
        %v963 = vld [vmem:[#allocation2 + $0xc0] sm:$0xff]
        %v964 = vld [vmem:[#allocation2 + $0xc8] sm:$0xf]
        %v965 = vld [vmem:[#allocation2 + $0xcc] sm:$0xff]
        %v966 = vld [vmem:[#allocation2 + $0xd4] sm:$0xf]
        %v967 = vld [vmem:[#allocation2 + $0xd8] sm:$0xff]
        %v968 = vld [vmem:[#allocation2 + $0xe0] sm:$0xf]
        %v969 = vld [vmem:[#allocation2 + $0xe4] sm:$0xff]
        %v970 = vld [vmem:[#allocation2 + $0xec] sm:$0xf]
        %v971 = vld [vmem:[#allocation2 + $0xf0] sm:$0xff]
        %v972 = vld [vmem:[#allocation2 + $0xf8] sm:$0xf]
        %v973 = vld [vmem:[#allocation2 + $0xfc] sm:$0xff]
        %v974 = vld [vmem:[#allocation2 + $0x104] sm:$0xf]
        %v975 = vld [vmem:[#allocation2 + $0x108] sm:$0xff]
        %v976 = vld [vmem:[#allocation2 + $0x110] sm:$0xf]
        %v977 = vld [vmem:[#allocation2 + $0x114] sm:$0xff]
        %v978 = vld [vmem:[#allocation2 + $0x11c] sm:$0xf]
        %v979 = vld [vmem:[#allocation2 + $0x120] sm:$0xff]
        %v980 = vld [vmem:[#allocation2 + $0x128] sm:$0xf]
        %v981 = vld [vmem:[#allocation2 + $0x12c] sm:$0xff]
        %v982 = vld [vmem:[#allocation2 + $0x134] sm:$0xf]
        %v983 = vld [vmem:[#allocation2 + $0x138] sm:$0xff]
        %v984 = vld [vmem:[#allocation2 + $0x140] sm:$0xf]
        %v985 = vld [vmem:[#allocation2 + $0x144] sm:$0xff]
        %v986 = vld [vmem:[#allocation2 + $0x14c] sm:$0xf]
        %s987 = scalar_lea.vmem [#allocation2], 336
        %v988 = vld [vmem:[%s987] sm:$0xff]
        %v989 = vld [vmem:[%s987 + $0x8] sm:$0xf]
        %v990 = vld [vmem:[%s987 + $0xc] sm:$0xff]
        %v991 = vld [vmem:[%s987 + $0x14] sm:$0xf]
        %v992 = vld [vmem:[%s987 + $0x18] sm:$0xff]
        %v993 = vld [vmem:[%s987 + $0x20] sm:$0xf]
        %v994 = vld [vmem:[%s987 + $0x24] sm:$0xff]
        %v995 = vld [vmem:[%s987 + $0x2c] sm:$0xf]
        %v996 = vld [vmem:[%s987 + $0x30] sm:$0xff]
        %v997 = vld [vmem:[%s987 + $0x38] sm:$0xf]
        %v998 = vld [vmem:[%s987 + $0x3c] sm:$0xff]
        %v999 = vld [vmem:[%s987 + $0x44] sm:$0xf]
        %v1000 = vld [vmem:[%s987 + $0x48] sm:$0xff]
        %v1001 = vld [vmem:[%s987 + $0x50] sm:$0xf]
        %v1002 = vld [vmem:[%s987 + $0x54] sm:$0xff]
        %v1003 = vld [vmem:[%s987 + $0x5c] sm:$0xf]
        %v1004 = vld [vmem:[%s987 + $0x60] sm:$0xff]
        %v1005 = vld [vmem:[%s987 + $0x68] sm:$0xf]
        %v1006 = vld [vmem:[%s987 + $0x6c] sm:$0xff]
        %v1007 = vld [vmem:[%s987 + $0x74] sm:$0xf]
        %v1008 = vld [vmem:[%s987 + $0x78] sm:$0xff]
        %v1009 = vld [vmem:[%s987 + $0x80] sm:$0xf]
        %v1010 = vld [vmem:[%s987 + $0x84] sm:$0xff]
        %v1011 = vld [vmem:[%s987 + $0x8c] sm:$0xf]
        %v1012 = vld [vmem:[%s987 + $0x90] sm:$0xff]
        %v1013 = vld [vmem:[%s987 + $0x98] sm:$0xf]
        %v1014 = vld [vmem:[%s987 + $0x9c] sm:$0xff]
        %v1015 = vld [vmem:[%s987 + $0xa4] sm:$0xf]
        %v1016 = vld [vmem:[%s987 + $0xa8] sm:$0xff]
        %v1017 = vld [vmem:[%s987 + $0xb0] sm:$0xf]
        %v1018 = vld [vmem:[%s987 + $0xb4] sm:$0xff]
        %v1019 = vld [vmem:[%s987 + $0xbc] sm:$0xf]
        %v1020 = vld [vmem:[%s987 + $0xc0] sm:$0xff]
        %v1021 = vld [vmem:[%s987 + $0xc8] sm:$0xf]
        %v1022 = vld [vmem:[%s987 + $0xcc] sm:$0xff]
        %v1023 = vld [vmem:[%s987 + $0xd4] sm:$0xf]
        %v1024 = vld [vmem:[%s987 + $0xd8] sm:$0xff]
        %v1025 = vld [vmem:[%s987 + $0xe0] sm:$0xf]
        %v1026 = vld [vmem:[%s987 + $0xe4] sm:$0xff]
        %v1027 = vld [vmem:[%s987 + $0xec] sm:$0xf]
        %v1028 = vld [vmem:[%s987 + $0xf0] sm:$0xff]
        %v1029 = vld [vmem:[%s987 + $0xf8] sm:$0xf]
        %v1030 = vld [vmem:[%s987 + $0xfc] sm:$0xff]
        %v1031 = vld [vmem:[%s987 + $0x104] sm:$0xf]
        %v1032 = vld [vmem:[%s987 + $0x108] sm:$0xff]
        %v1033 = vld [vmem:[%s987 + $0x110] sm:$0xf]
        %v1034 = vld [vmem:[%s987 + $0x114] sm:$0xff]
        %v1035 = vld [vmem:[%s987 + $0x11c] sm:$0xf]
        %v1036 = vld [vmem:[%s987 + $0x120] sm:$0xff]
        %v1037 = vld [vmem:[%s987 + $0x128] sm:$0xf]
        %v1038 = vld [vmem:[%s987 + $0x12c] sm:$0xff]
        %v1039 = vld [vmem:[%s987 + $0x134] sm:$0xf]
        %v1040 = vld [vmem:[%s987 + $0x138] sm:$0xff]
        %v1041 = vld [vmem:[%s987 + $0x140] sm:$0xf]
        %v1042 = vld [vmem:[%s987 + $0x144] sm:$0xff]
        %v1043 = vld [vmem:[%s987 + $0x14c] sm:$0xf]
        %vm1058 = vcmask 1043456
        %v1059 = vrot.slane %v917, 4
        %v1060 = vrot.slane %v919, 4
        %v1061 = vsel %vm1058, %v1059, %v1060
        %v1062 = vrot.slane %v918, 4
        %v1063 = vrot.slane %v920, 4
        %v1064 = vsel %vm1058, %v1062, %v1063
        %v1065 = vrot.slane %v921, 4
        %v1066 = vsel %vm1058, %v1060, %v1065
        %v1067 = vrot.slane %v922, 4
        %v1068 = vsel %vm1058, %v1063, %v1067
        %v1069 = vrot.slane %v923, 4
        %v1070 = vsel %vm1058, %v1065, %v1069
        %v1071 = vrot.slane %v924, 4
        %v1072 = vsel %vm1058, %v1067, %v1071
        %v1073 = vrot.slane %v925, 4
        %v1074 = vsel %vm1058, %v1069, %v1073
        %v1075 = vrot.slane %v926, 4
        %v1076 = vsel %vm1058, %v1071, %v1075
        %v1077 = vrot.slane %v927, 4
        %v1078 = vsel %vm1058, %v1073, %v1077
        %v1079 = vrot.slane %v928, 4
        %v1080 = vsel %vm1058, %v1075, %v1079
        %v1081 = vrot.slane %v929, 4
        %v1082 = vsel %vm1058, %v1077, %v1081
        %v1083 = vrot.slane %v930, 4
        %v1084 = vsel %vm1058, %v1079, %v1083
        %v1147 = vunpack.c.l.b16 %v988
        %v1148 = vunpack.c.h.b16 %v988
        %v1149 = vunpack.c.l.b16 %v989
        %v1150 = vunpack.c.l.b16 %v990
        %v1151 = vunpack.c.h.b16 %v990
        %v1152 = vunpack.c.l.b16 %v991
        %v1153 = vunpack.c.l.b16 %v992
        %v1154 = vunpack.c.h.b16 %v992
        %v1155 = vunpack.c.l.b16 %v993
        %v1156 = vunpack.c.l.b16 %v994
        %v1157 = vunpack.c.h.b16 %v994
        %v1158 = vunpack.c.l.b16 %v995
        %v1159 = vunpack.c.l.b16 %v996
        %v1160 = vunpack.c.h.b16 %v996
        %v1161 = vunpack.c.l.b16 %v997
        %v1162 = vunpack.c.l.b16 %v998
        %v1163 = vunpack.c.h.b16 %v998
        %v1164 = vunpack.c.l.b16 %v999
        %v1165 = vunpack.c.l.b16 %v1000
        %v1166 = vunpack.c.h.b16 %v1000
        %v1167 = vunpack.c.l.b16 %v1001
        %v1168 = vunpack.c.l.b16 %v1002
        %v1169 = vunpack.c.h.b16 %v1002
        %v1170 = vunpack.c.l.b16 %v1003
        %v1171 = vunpack.c.l.b16 %v1004
        %v1172 = vunpack.c.h.b16 %v1004
        %v1173 = vunpack.c.l.b16 %v1005
        %v1174 = vunpack.c.l.b16 %v1006
        %v1175 = vunpack.c.h.b16 %v1006
        %v1176 = vunpack.c.l.b16 %v1007
        %v1177 = vunpack.c.l.b16 %v1008
        %v1178 = vunpack.c.h.b16 %v1008
        %v1179 = vunpack.c.l.b16 %v1009
        %v1180 = vunpack.c.l.b16 %v1010
        %v1181 = vunpack.c.h.b16 %v1010
        %v1182 = vunpack.c.l.b16 %v1011
        %v1183 = vunpack.c.l.b16 %v1012
        %v1184 = vunpack.c.h.b16 %v1012
        %v1185 = vunpack.c.l.b16 %v1013
        %v1186 = vunpack.c.l.b16 %v1014
        %v1187 = vunpack.c.h.b16 %v1014
        %v1188 = vunpack.c.l.b16 %v1015
        %v1189 = vunpack.c.l.b16 %v1016
        %v1190 = vunpack.c.h.b16 %v1016
        %v1191 = vunpack.c.l.b16 %v1017
        %v1192 = vunpack.c.l.b16 %v1018
        %v1193 = vunpack.c.h.b16 %v1018
        %v1194 = vunpack.c.l.b16 %v1019
        %v1195 = vunpack.c.l.b16 %v1020
        %v1196 = vunpack.c.h.b16 %v1020
        %v1197 = vunpack.c.l.b16 %v1021
        %v1198 = vunpack.c.l.b16 %v1022
        %v1199 = vunpack.c.h.b16 %v1022
        %v1200 = vunpack.c.l.b16 %v1023
        %v1201 = vunpack.c.l.b16 %v1024
        %v1202 = vunpack.c.h.b16 %v1024
        %v1203 = vunpack.c.l.b16 %v1025
        %v1204 = vunpack.c.l.b16 %v1026
        %v1205 = vunpack.c.h.b16 %v1026
        %v1206 = vunpack.c.l.b16 %v1027
        %v1207 = vunpack.c.l.b16 %v1028
        %v1208 = vunpack.c.h.b16 %v1028
        %v1209 = vunpack.c.l.b16 %v1029
        %v1210 = vunpack.c.l.b16 %v1030
        %v1211 = vunpack.c.h.b16 %v1030
        %v1212 = vunpack.c.l.b16 %v1031
        %v1213 = vunpack.c.l.b16 %v1032
        %v1214 = vunpack.c.h.b16 %v1032
        %v1215 = vunpack.c.l.b16 %v1033
        %v1216 = vunpack.c.l.b16 %v1034
        %v1217 = vunpack.c.h.b16 %v1034
        %v1218 = vunpack.c.l.b16 %v1035
        %v1219 = vunpack.c.l.b16 %v1036
        %v1220 = vunpack.c.h.b16 %v1036
        %v1221 = vunpack.c.l.b16 %v1037
        %v1222 = vunpack.c.l.b16 %v1038
        %v1223 = vunpack.c.h.b16 %v1038
        %v1224 = vunpack.c.l.b16 %v1039
        %v1225 = vunpack.c.l.b16 %v1040
        %v1226 = vunpack.c.h.b16 %v1040
        %v1227 = vunpack.c.l.b16 %v1041
        %v1228 = vunpack.c.l.b16 %v1042
        %v1229 = vunpack.c.h.b16 %v1042
        %v1230 = vunpack.c.l.b16 %v1043
        %v1231 = vpack.c.b16 %v1150, %v1147
        %v1232 = vpack.c.b16 %v1151, %v1148
        %v1233 = vpack.c.b16 %v1152, %v1149
        %v1234 = vpack.c.b16 %v1156, %v1153
        %v1235 = vpack.c.b16 %v1157, %v1154
        %v1236 = vpack.c.b16 %v1158, %v1155
        %v1237 = vpack.c.b16 %v1162, %v1159
        %v1238 = vpack.c.b16 %v1163, %v1160
        %v1239 = vpack.c.b16 %v1164, %v1161
        %v1240 = vpack.c.b16 %v1168, %v1165
        %v1241 = vpack.c.b16 %v1169, %v1166
        %v1242 = vpack.c.b16 %v1170, %v1167
        %v1243 = vpack.c.b16 %v1174, %v1171
        %v1244 = vpack.c.b16 %v1175, %v1172
        %v1245 = vpack.c.b16 %v1176, %v1173
        %v1246 = vpack.c.b16 %v1180, %v1177
        %v1247 = vpack.c.b16 %v1181, %v1178
        %v1248 = vpack.c.b16 %v1182, %v1179
        %v1249 = vpack.c.b16 %v1186, %v1183
        %v1250 = vpack.c.b16 %v1187, %v1184
        %v1251 = vpack.c.b16 %v1188, %v1185
        %v1252 = vpack.c.b16 %v1192, %v1189
        %v1253 = vpack.c.b16 %v1193, %v1190
        %v1254 = vpack.c.b16 %v1194, %v1191
        %v1255 = vpack.c.b16 %v1198, %v1195
        %v1256 = vpack.c.b16 %v1199, %v1196
        %v1257 = vpack.c.b16 %v1200, %v1197
        %v1258 = vpack.c.b16 %v1204, %v1201
        %v1259 = vpack.c.b16 %v1205, %v1202
        %v1260 = vpack.c.b16 %v1206, %v1203
        %v1261 = vpack.c.b16 %v1210, %v1207
        %v1262 = vpack.c.b16 %v1211, %v1208
        %v1263 = vpack.c.b16 %v1212, %v1209
        %v1264 = vpack.c.b16 %v1216, %v1213
        %v1265 = vpack.c.b16 %v1217, %v1214
        %v1266 = vpack.c.b16 %v1218, %v1215
        %v1267 = vpack.c.b16 %v1222, %v1219
        %v1268 = vpack.c.b16 %v1223, %v1220
        %v1269 = vpack.c.b16 %v1224, %v1221
        %v1270 = vpack.c.b16 %v1228, %v1225
        %v1271 = vpack.c.b16 %v1229, %v1226
        %v1272 = vpack.c.b16 %v1230, %v1227
        %vm1315 = vcmask 785408
        %v1317 = vsel %vm1315, %v1064, 0
        %v1320 = vsel %vm1315, %v1068, 0
        %v1323 = vsel %vm1315, %v1072, 0
        %v1326 = vsel %vm1315, %v1076, 0
        %v1329 = vsel %vm1315, %v1080, 0
        %v1332 = vsel %vm1315, %v1084, 0
        %1334 = vmatprep.subr.bf16.mxu0 %v1232
        %1335 = vmatpush1.bf16.msra.mxu0 %v1231
        %1336 = vmatprep.subr.bf16.mxu0 %v1235
        %1337 = vmatpush1.bf16.msra.mxu0 %v1234
        %1338 = vmatprep.subr.bf16.mxu0 %v1238
        %1339 = vmatpush1.bf16.msra.mxu0 %v1237
        %1340 = vmatprep.subr.bf16.mxu0 %v1241
        %1341 = vmatpush1.bf16.msra.mxu0 %v1240
        %1342 = vmatprep.subr.bf16.mxu0 %v1244
        %1343 = vmatpush1.bf16.msra.mxu0 %v1243
        %1344 = vmatprep.subr.bf16.mxu0 %v1247
        %1345 = vmatpush1.bf16.msra.mxu0 %v1246
        %1346 = vmatprep.subr.bf16.mxu0 %v1250
        %1347 = vmatpush1.bf16.msra.mxu0 %v1249
        %1348 = vmatprep.subr.bf16.mxu0 %v1253
        %1349 = vmatpush1.bf16.msra.mxu0 %v1252
        %1350 = vmatprep.subr.bf16.mxu0 %v1256
        %1351 = vmatpush1.bf16.msra.mxu0 %v1255
        %1352 = vmatprep.subr.bf16.mxu0 %v1259
        %1353 = vmatpush1.bf16.msra.mxu0 %v1258
        %1354 = vmatprep.subr.bf16.mxu0 %v1262
        %1355 = vmatpush1.bf16.msra.mxu0 %v1261
        %1356 = vmatprep.subr.bf16.mxu0 %v1265
        %1357 = vmatpush1.bf16.msra.mxu0 %v1264
        %1358 = vmatprep.subr.bf16.mxu0 %v1268
        %1359 = vmatpush1.bf16.msra.mxu0 %v1267
        %1360 = vmatprep.subr.bf16.mxu0 %v1271
        %1361 = vmatpush1.bf16.msra.mxu0 %v1270
        %1362 = vmatprep.subr.bf16.mxu0 0
        %1363 = vmatpush1.bf16.msra.mxu0 0
        %1364 = vmatprep.subr.bf16.mxu0 0
        %1365 = vmatpush1.bf16.msra.mxu0 0
        %1366 = vmatprep.mubr.bf16.mxu0 %v1317
        %1367 = vmatmul.mubr.bf16.gmra.mrb[0].mxu0 %v1061
        %v1368 = vpop.f32.mrb[0].mxu0
        %v1369 = vadd.f32 0.0, %v1368
        %v1370 = vpop.f32.mrb[0].mxu0
        %v1371 = vadd.f32 0.0, %v1370
        %v1372 = vpop.f32.mrb[0].mxu0
        %v1373 = vadd.f32 0.0, %v1372
        %v1374 = vpop.f32.mrb[0].mxu0
        %v1375 = vadd.f32 0.0, %v1374
        %1376 = vmatprep.mubr.bf16.mxu0 %v1320
        %1377 = vmatmul.mubr.bf16.gmra.mrb[0].mxu0 %v1066
        %v1378 = vpop.f32.mrb[0].mxu0
        %v1379 = vadd.f32 0.0, %v1378
        %v1380 = vpop.f32.mrb[0].mxu0
        %v1381 = vadd.f32 0.0, %v1380
        %v1382 = vpop.f32.mrb[0].mxu0
        %v1383 = vadd.f32 0.0, %v1382
        %v1384 = vpop.f32.mrb[0].mxu0
        %v1385 = vadd.f32 0.0, %v1384
        %1386 = vmatprep.mubr.bf16.mxu0 %v1323
        %1387 = vmatmul.mubr.bf16.gmra.mrb[0].mxu0 %v1070
        %v1388 = vpop.f32.mrb[0].mxu0
        %v1389 = vadd.f32 0.0, %v1388
        %v1390 = vpop.f32.mrb[0].mxu0
        %v1391 = vadd.f32 0.0, %v1390
        %v1392 = vpop.f32.mrb[0].mxu0
        %v1393 = vadd.f32 0.0, %v1392
        %v1394 = vpop.f32.mrb[0].mxu0
        %v1395 = vadd.f32 0.0, %v1394
        %1396 = vmatprep.mubr.bf16.mxu0 %v1326
        %1397 = vmatmul.mubr.bf16.gmra.mrb[0].mxu0 %v1074
        %v1398 = vpop.f32.mrb[0].mxu0
        %v1399 = vadd.f32 0.0, %v1398
        %v1400 = vpop.f32.mrb[0].mxu0
        %v1401 = vadd.f32 0.0, %v1400
        %v1402 = vpop.f32.mrb[0].mxu0
        %v1403 = vadd.f32 0.0, %v1402
        %v1404 = vpop.f32.mrb[0].mxu0
        %v1405 = vadd.f32 0.0, %v1404
        %1406 = vmatprep.mubr.bf16.mxu0 %v1329
        %1407 = vmatmul.mubr.bf16.gmra.mrb[0].mxu0 %v1078
        %v1408 = vpop.f32.mrb[0].mxu0
        %v1409 = vadd.f32 0.0, %v1408
        %v1410 = vpop.f32.mrb[0].mxu0
        %v1411 = vadd.f32 0.0, %v1410
        %v1412 = vpop.f32.mrb[0].mxu0
        %v1413 = vadd.f32 0.0, %v1412
        %v1414 = vpop.f32.mrb[0].mxu0
        %v1415 = vadd.f32 0.0, %v1414
        %1416 = vmatprep.mubr.bf16.mxu0 %v1332
        %1417 = vmatmul.mubr.bf16.gmra.mrb[0].mxu0 %v1082
        %v1418 = vpop.f32.mrb[0].mxu0
        %v1419 = vadd.f32 0.0, %v1418
        %v1420 = vpop.f32.mrb[0].mxu0
        %v1421 = vadd.f32 0.0, %v1420
        %v1422 = vpop.f32.mrb[0].mxu0
        %v1423 = vadd.f32 0.0, %v1422
        %v1424 = vpop.f32.mrb[0].mxu0
        %v1425 = vadd.f32 0.0, %v1424
        %1426 = vdwg.mxu0
        %1427 = vmatprep.subr.bf16.mxu0 0
        %1428 = vmatpush1.bf16.msra.mxu0 %v1233
        %1429 = vmatprep.subr.bf16.mxu0 0
        %1430 = vmatpush1.bf16.msra.mxu0 %v1236
        %1431 = vmatprep.subr.bf16.mxu0 0
        %1432 = vmatpush1.bf16.msra.mxu0 %v1239
        %1433 = vmatprep.subr.bf16.mxu0 0
        %1434 = vmatpush1.bf16.msra.mxu0 %v1242
        %1435 = vmatprep.subr.bf16.mxu0 0
        %1436 = vmatpush1.bf16.msra.mxu0 %v1245
        %1437 = vmatprep.subr.bf16.mxu0 0
        %1438 = vmatpush1.bf16.msra.mxu0 %v1248
        %1439 = vmatprep.subr.bf16.mxu0 0
        %1440 = vmatpush1.bf16.msra.mxu0 %v1251
        %1441 = vmatprep.subr.bf16.mxu0 0
        %1442 = vmatpush1.bf16.msra.mxu0 %v1254
        %1443 = vmatprep.subr.bf16.mxu0 0
        %1444 = vmatpush1.bf16.msra.mxu0 %v1257
        %1445 = vmatprep.subr.bf16.mxu0 0
        %1446 = vmatpush1.bf16.msra.mxu0 %v1260
        %1447 = vmatprep.subr.bf16.mxu0 0
        %1448 = vmatpush1.bf16.msra.mxu0 %v1263
        %1449 = vmatprep.subr.bf16.mxu0 0
        %1450 = vmatpush1.bf16.msra.mxu0 %v1266
        %1451 = vmatprep.subr.bf16.mxu0 0
        %1452 = vmatpush1.bf16.msra.mxu0 %v1269
        %1453 = vmatprep.subr.bf16.mxu0 0
        %1454 = vmatpush1.bf16.msra.mxu0 %v1272
        %1455 = vmatprep.subr.bf16.mxu0 0
        %1456 = vmatpush1.bf16.msra.mxu0 0
        %1457 = vmatprep.subr.bf16.mxu0 0
        %1458 = vmatpush1.bf16.msra.mxu0 0
        %1459 = vmatprep.mubr.bf16.mxu0 %v1317
        %1460 = vmatmul.mubr.bf16.gmra.mrb[0].mxu0 %v1061
        %v1461 = vpop.f32.mrb[0].mxu0
        %v1462 = vadd.f32 0.0, %v1461
        %v1463 = vpop.f32.mrb[0].mxu0
        %v1464 = vpop.f32.mrb[0].mxu0
        %v1465 = vadd.f32 0.0, %v1464
        %v1466 = vpop.f32.mrb[0].mxu0
        %1467 = vmatprep.mubr.bf16.mxu0 %v1320
        %1468 = vmatmul.mubr.bf16.gmra.mrb[0].mxu0 %v1066
        %v1469 = vpop.f32.mrb[0].mxu0
        %v1470 = vadd.f32 0.0, %v1469
        %v1471 = vpop.f32.mrb[0].mxu0
        %v1472 = vpop.f32.mrb[0].mxu0
        %v1473 = vadd.f32 0.0, %v1472
        %v1474 = vpop.f32.mrb[0].mxu0
        %1475 = vmatprep.mubr.bf16.mxu0 %v1323
        %1476 = vmatmul.mubr.bf16.gmra.mrb[0].mxu0 %v1070
        %v1477 = vpop.f32.mrb[0].mxu0
        %v1478 = vadd.f32 0.0, %v1477
        %v1479 = vpop.f32.mrb[0].mxu0
        %v1480 = vpop.f32.mrb[0].mxu0
        %v1481 = vadd.f32 0.0, %v1480
        %v1482 = vpop.f32.mrb[0].mxu0
        %1483 = vmatprep.mubr.bf16.mxu0 %v1326
        %1484 = vmatmul.mubr.bf16.gmra.mrb[0].mxu0 %v1074
        %v1485 = vpop.f32.mrb[0].mxu0
        %v1486 = vadd.f32 0.0, %v1485
        %v1487 = vpop.f32.mrb[0].mxu0
        %v1488 = vpop.f32.mrb[0].mxu0
        %v1489 = vadd.f32 0.0, %v1488
        %v1490 = vpop.f32.mrb[0].mxu0
        %1491 = vmatprep.mubr.bf16.mxu0 %v1329
        %1492 = vmatmul.mubr.bf16.gmra.mrb[0].mxu0 %v1078
        %v1493 = vpop.f32.mrb[0].mxu0
        %v1494 = vadd.f32 0.0, %v1493
        %v1495 = vpop.f32.mrb[0].mxu0
        %v1496 = vpop.f32.mrb[0].mxu0
        %v1497 = vadd.f32 0.0, %v1496
        %v1498 = vpop.f32.mrb[0].mxu0
        %1499 = vmatprep.mubr.bf16.mxu0 %v1332
        %1500 = vmatmul.mubr.bf16.gmra.mrb[0].mxu0 %v1082
        %v1501 = vpop.f32.mrb[0].mxu0
        %v1502 = vadd.f32 0.0, %v1501
        %v1503 = vpop.f32.mrb[0].mxu0
        %v1504 = vpop.f32.mrb[0].mxu0
        %v1505 = vadd.f32 0.0, %v1504
        %v1506 = vpop.f32.mrb[0].mxu0
        %1507 = vdwg.mxu0
        %v1564 = vunpack.c.l.b16 %v931
        %v1565 = vunpack.c.h.b16 %v931
        %v1566 = vunpack.c.l.b16 %v932
        %v1567 = vunpack.c.l.b16 %v933
        %v1568 = vunpack.c.h.b16 %v933
        %v1569 = vunpack.c.l.b16 %v934
        %v1570 = vunpack.c.l.b16 %v935
        %v1571 = vunpack.c.h.b16 %v935
        %v1572 = vunpack.c.l.b16 %v936
        %v1573 = vunpack.c.l.b16 %v937
        %v1574 = vunpack.c.h.b16 %v937
        %v1575 = vunpack.c.l.b16 %v938
        %v1576 = vunpack.c.l.b16 %v939
        %v1577 = vunpack.c.h.b16 %v939
        %v1578 = vunpack.c.l.b16 %v940
        %v1579 = vunpack.c.l.b16 %v941
        %v1580 = vunpack.c.h.b16 %v941
        %v1581 = vunpack.c.l.b16 %v942
        %v1582 = vunpack.c.l.b16 %v943
        %v1583 = vunpack.c.h.b16 %v943
        %v1584 = vunpack.c.l.b16 %v944
        %v1585 = vunpack.c.l.b16 %v945
        %v1586 = vunpack.c.h.b16 %v945
        %v1587 = vunpack.c.l.b16 %v946
        %v1588 = vunpack.c.l.b16 %v947
        %v1589 = vunpack.c.h.b16 %v947
        %v1590 = vunpack.c.l.b16 %v948
        %v1591 = vunpack.c.l.b16 %v949
        %v1592 = vunpack.c.h.b16 %v949
        %v1593 = vunpack.c.l.b16 %v950
        %v1594 = vunpack.c.l.b16 %v951
        %v1595 = vunpack.c.h.b16 %v951
        %v1596 = vunpack.c.l.b16 %v952
        %v1597 = vunpack.c.l.b16 %v953
        %v1598 = vunpack.c.h.b16 %v953
        %v1599 = vunpack.c.l.b16 %v954
        %v1600 = vunpack.c.l.b16 %v955
        %v1601 = vunpack.c.h.b16 %v955
        %v1602 = vunpack.c.l.b16 %v956
        %v1603 = vunpack.c.l.b16 %v957
        %v1604 = vunpack.c.h.b16 %v957
        %v1605 = vunpack.c.l.b16 %v958
        %v1606 = vunpack.c.l.b16 %v959
        %v1607 = vunpack.c.h.b16 %v959
        %v1608 = vunpack.c.l.b16 %v960
        %v1609 = vunpack.c.l.b16 %v961
        %v1610 = vunpack.c.h.b16 %v961
        %v1611 = vunpack.c.l.b16 %v962
        %v1612 = vunpack.c.l.b16 %v963
        %v1613 = vunpack.c.h.b16 %v963
        %v1614 = vunpack.c.l.b16 %v964
        %v1615 = vunpack.c.l.b16 %v965
        %v1616 = vunpack.c.h.b16 %v965
        %v1617 = vunpack.c.l.b16 %v966
        %v1618 = vunpack.c.l.b16 %v967
        %v1619 = vunpack.c.h.b16 %v967
        %v1620 = vunpack.c.l.b16 %v968
        %v1621 = vunpack.c.l.b16 %v969
        %v1622 = vunpack.c.h.b16 %v969
        %v1623 = vunpack.c.l.b16 %v970
        %v1624 = vunpack.c.l.b16 %v971
        %v1625 = vunpack.c.h.b16 %v971
        %v1626 = vunpack.c.l.b16 %v972
        %v1627 = vunpack.c.l.b16 %v973
        %v1628 = vunpack.c.h.b16 %v973
        %v1629 = vunpack.c.l.b16 %v974
        %v1630 = vunpack.c.l.b16 %v975
        %v1631 = vunpack.c.h.b16 %v975
        %v1632 = vunpack.c.l.b16 %v976
        %v1633 = vunpack.c.l.b16 %v977
        %v1634 = vunpack.c.h.b16 %v977
        %v1635 = vunpack.c.l.b16 %v978
        %v1636 = vunpack.c.l.b16 %v979
        %v1637 = vunpack.c.h.b16 %v979
        %v1638 = vunpack.c.l.b16 %v980
        %v1639 = vunpack.c.l.b16 %v981
        %v1640 = vunpack.c.h.b16 %v981
        %v1641 = vunpack.c.l.b16 %v982
        %v1642 = vunpack.c.l.b16 %v983
        %v1643 = vunpack.c.h.b16 %v983
        %v1644 = vunpack.c.l.b16 %v984
        %v1645 = vunpack.c.l.b16 %v985
        %v1646 = vunpack.c.h.b16 %v985
        %v1647 = vunpack.c.l.b16 %v986
        %v1648 = vpack.c.b16 %v1567, %v1564
        %v1649 = vpack.c.b16 %v1568, %v1565
        %v1650 = vpack.c.b16 %v1569, %v1566
        %v1651 = vpack.c.b16 %v1573, %v1570
        %v1652 = vpack.c.b16 %v1574, %v1571
        %v1653 = vpack.c.b16 %v1575, %v1572
        %v1654 = vpack.c.b16 %v1579, %v1576
        %v1655 = vpack.c.b16 %v1580, %v1577
        %v1656 = vpack.c.b16 %v1581, %v1578
        %v1657 = vpack.c.b16 %v1585, %v1582
        %v1658 = vpack.c.b16 %v1586, %v1583
        %v1659 = vpack.c.b16 %v1587, %v1584
        %v1660 = vpack.c.b16 %v1591, %v1588
        %v1661 = vpack.c.b16 %v1592, %v1589
        %v1662 = vpack.c.b16 %v1593, %v1590
        %v1663 = vpack.c.b16 %v1597, %v1594
        %v1664 = vpack.c.b16 %v1598, %v1595
        %v1665 = vpack.c.b16 %v1599, %v1596
        %v1666 = vpack.c.b16 %v1603, %v1600
        %v1667 = vpack.c.b16 %v1604, %v1601
        %v1668 = vpack.c.b16 %v1605, %v1602
        %v1669 = vpack.c.b16 %v1609, %v1606
        %v1670 = vpack.c.b16 %v1610, %v1607
        %v1671 = vpack.c.b16 %v1611, %v1608
        %v1672 = vpack.c.b16 %v1615, %v1612
        %v1673 = vpack.c.b16 %v1616, %v1613
        %v1674 = vpack.c.b16 %v1617, %v1614
        %v1675 = vpack.c.b16 %v1621, %v1618
        %v1676 = vpack.c.b16 %v1622, %v1619
        %v1677 = vpack.c.b16 %v1623, %v1620
        %v1678 = vpack.c.b16 %v1627, %v1624
        %v1679 = vpack.c.b16 %v1628, %v1625
        %v1680 = vpack.c.b16 %v1629, %v1626
        %v1681 = vpack.c.b16 %v1633, %v1630
        %v1682 = vpack.c.b16 %v1634, %v1631
        %v1683 = vpack.c.b16 %v1635, %v1632
        %v1684 = vpack.c.b16 %v1639, %v1636
        %v1685 = vpack.c.b16 %v1640, %v1637
        %v1686 = vpack.c.b16 %v1641, %v1638
        %v1687 = vpack.c.b16 %v1645, %v1642
        %v1688 = vpack.c.b16 %v1646, %v1643
        %v1689 = vpack.c.b16 %v1647, %v1644
        %v1733 = vsel %vm1315, %v918, 0
        %v1736 = vsel %vm1315, %v920, 0
        %v1739 = vsel %vm1315, %v922, 0
        %v1742 = vsel %vm1315, %v924, 0
        %v1745 = vsel %vm1315, %v926, 0
        %v1748 = vsel %vm1315, %v928, 0
        %1750 = vmatprep.subr.bf16.mxu0 %v1649
        %1751 = vmatpush1.bf16.msra.mxu0 %v1648
        %1752 = vmatprep.subr.bf16.mxu0 %v1652
        %1753 = vmatpush1.bf16.msra.mxu0 %v1651
        %1754 = vmatprep.subr.bf16.mxu0 %v1655
        %1755 = vmatpush1.bf16.msra.mxu0 %v1654
        %1756 = vmatprep.subr.bf16.mxu0 %v1658
        %1757 = vmatpush1.bf16.msra.mxu0 %v1657
        %1758 = vmatprep.subr.bf16.mxu0 %v1661
        %1759 = vmatpush1.bf16.msra.mxu0 %v1660
        %1760 = vmatprep.subr.bf16.mxu0 %v1664
        %1761 = vmatpush1.bf16.msra.mxu0 %v1663
        %1762 = vmatprep.subr.bf16.mxu0 %v1667
        %1763 = vmatpush1.bf16.msra.mxu0 %v1666
        %1764 = vmatprep.subr.bf16.mxu0 %v1670
        %1765 = vmatpush1.bf16.msra.mxu0 %v1669
        %1766 = vmatprep.subr.bf16.mxu0 %v1673
        %1767 = vmatpush1.bf16.msra.mxu0 %v1672
        %1768 = vmatprep.subr.bf16.mxu0 %v1676
        %1769 = vmatpush1.bf16.msra.mxu0 %v1675
        %1770 = vmatprep.subr.bf16.mxu0 %v1679
        %1771 = vmatpush1.bf16.msra.mxu0 %v1678
        %1772 = vmatprep.subr.bf16.mxu0 %v1682
        %1773 = vmatpush1.bf16.msra.mxu0 %v1681
        %1774 = vmatprep.subr.bf16.mxu0 %v1685
        %1775 = vmatpush1.bf16.msra.mxu0 %v1684
        %1776 = vmatprep.subr.bf16.mxu0 %v1688
        %1777 = vmatpush1.bf16.msra.mxu0 %v1687
        %1778 = vmatprep.subr.bf16.mxu0 0
        %1779 = vmatpush1.bf16.msra.mxu0 0
        %1780 = vmatprep.subr.bf16.mxu0 0
        %1781 = vmatpush1.bf16.msra.mxu0 0
        %1782 = vmatprep.mubr.bf16.mxu0 %v1733
        %1783 = vmatmul.mubr.bf16.gmra.mrb[0].mxu0 %v917
        %v1784 = vpop.f32.mrb[0].mxu0
        %v1785 = vadd.f32 %v1369, %v1784
        %v1786 = vpop.f32.mrb[0].mxu0
        %v1787 = vadd.f32 %v1371, %v1786
        %v1788 = vpop.f32.mrb[0].mxu0
        %v1789 = vadd.f32 %v1373, %v1788
        %v1790 = vpop.f32.mrb[0].mxu0
        %v1791 = vadd.f32 %v1375, %v1790
        %1792 = vmatprep.mubr.bf16.mxu0 %v1736
        %1793 = vmatmul.mubr.bf16.gmra.mrb[0].mxu0 %v919
        %v1794 = vpop.f32.mrb[0].mxu0
        %v1795 = vadd.f32 %v1379, %v1794
        %v1796 = vpop.f32.mrb[0].mxu0
        %v1797 = vadd.f32 %v1381, %v1796
        %v1798 = vpop.f32.mrb[0].mxu0
        %v1799 = vadd.f32 %v1383, %v1798
        %v1800 = vpop.f32.mrb[0].mxu0
        %v1801 = vadd.f32 %v1385, %v1800
        %1802 = vmatprep.mubr.bf16.mxu0 %v1739
        %1803 = vmatmul.mubr.bf16.gmra.mrb[0].mxu0 %v921
        %v1804 = vpop.f32.mrb[0].mxu0
        %v1805 = vadd.f32 %v1389, %v1804
        %v1806 = vpop.f32.mrb[0].mxu0
        %v1807 = vadd.f32 %v1391, %v1806
        %v1808 = vpop.f32.mrb[0].mxu0
        %v1809 = vadd.f32 %v1393, %v1808
        %v1810 = vpop.f32.mrb[0].mxu0
        %v1811 = vadd.f32 %v1395, %v1810
        %1812 = vmatprep.mubr.bf16.mxu0 %v1742
        %1813 = vmatmul.mubr.bf16.gmra.mrb[0].mxu0 %v923
        %v1814 = vpop.f32.mrb[0].mxu0
        %v1815 = vadd.f32 %v1399, %v1814
        %v1816 = vpop.f32.mrb[0].mxu0
        %v1817 = vadd.f32 %v1401, %v1816
        %v1818 = vpop.f32.mrb[0].mxu0
        %v1819 = vadd.f32 %v1403, %v1818
        %v1820 = vpop.f32.mrb[0].mxu0
        %v1821 = vadd.f32 %v1405, %v1820
        %1822 = vmatprep.mubr.bf16.mxu0 %v1745
        %1823 = vmatmul.mubr.bf16.gmra.mrb[0].mxu0 %v925
        %v1824 = vpop.f32.mrb[0].mxu0
        %v1825 = vadd.f32 %v1409, %v1824
        %v1826 = vpop.f32.mrb[0].mxu0
        %v1827 = vadd.f32 %v1411, %v1826
        %v1828 = vpop.f32.mrb[0].mxu0
        %v1829 = vadd.f32 %v1413, %v1828
        %v1830 = vpop.f32.mrb[0].mxu0
        %v1831 = vadd.f32 %v1415, %v1830
        %1832 = vmatprep.mubr.bf16.mxu0 %v1748
        %1833 = vmatmul.mubr.bf16.gmra.mrb[0].mxu0 %v927
        %v1834 = vpop.f32.mrb[0].mxu0
        %v1835 = vadd.f32 %v1419, %v1834
        %v1836 = vpop.f32.mrb[0].mxu0
        %v1837 = vadd.f32 %v1421, %v1836
        %v1838 = vpop.f32.mrb[0].mxu0
        %v1839 = vadd.f32 %v1423, %v1838
        %v1840 = vpop.f32.mrb[0].mxu0
        %v1841 = vadd.f32 %v1425, %v1840
        %1842 = vdwg.mxu0
        %1843 = vmatprep.subr.bf16.mxu0 0
        %1844 = vmatpush1.bf16.msra.mxu0 %v1650
        %1845 = vmatprep.subr.bf16.mxu0 0
        %1846 = vmatpush1.bf16.msra.mxu0 %v1653
        %1847 = vmatprep.subr.bf16.mxu0 0
        %1848 = vmatpush1.bf16.msra.mxu0 %v1656
        %1849 = vmatprep.subr.bf16.mxu0 0
        %1850 = vmatpush1.bf16.msra.mxu0 %v1659
        %1851 = vmatprep.subr.bf16.mxu0 0
        %1852 = vmatpush1.bf16.msra.mxu0 %v1662
        %1853 = vmatprep.subr.bf16.mxu0 0
        %1854 = vmatpush1.bf16.msra.mxu0 %v1665
        %1855 = vmatprep.subr.bf16.mxu0 0
        %1856 = vmatpush1.bf16.msra.mxu0 %v1668
        %1857 = vmatprep.subr.bf16.mxu0 0
        %1858 = vmatpush1.bf16.msra.mxu0 %v1671
        %1859 = vmatprep.subr.bf16.mxu0 0
        %1860 = vmatpush1.bf16.msra.mxu0 %v1674
        %1861 = vmatprep.subr.bf16.mxu0 0
        %1862 = vmatpush1.bf16.msra.mxu0 %v1677
        %1863 = vmatprep.subr.bf16.mxu0 0
        %1864 = vmatpush1.bf16.msra.mxu0 %v1680
        %1865 = vmatprep.subr.bf16.mxu0 0
        %1866 = vmatpush1.bf16.msra.mxu0 %v1683
        %1867 = vmatprep.subr.bf16.mxu0 0
        %1868 = vmatpush1.bf16.msra.mxu0 %v1686
        %1869 = vmatprep.subr.bf16.mxu0 0
        %1870 = vmatpush1.bf16.msra.mxu0 %v1689
        %1871 = vmatprep.subr.bf16.mxu0 0
        %1872 = vmatpush1.bf16.msra.mxu0 0
        %1873 = vmatprep.subr.bf16.mxu0 0
        %1874 = vmatpush1.bf16.msra.mxu0 0
        %1875 = vmatprep.mubr.bf16.mxu0 %v1733
        %1876 = vmatmul.mubr.bf16.gmra.mrb[0].mxu0 %v917
        %v1877 = vpop.f32.mrb[0].mxu0
        %v1878 = vadd.f32 %v1462, %v1877
        %v1879 = vpop.f32.mrb[0].mxu0
        %v1880 = vpop.f32.mrb[0].mxu0
        %v1881 = vadd.f32 %v1465, %v1880
        %v1882 = vpop.f32.mrb[0].mxu0
        %1883 = vmatprep.mubr.bf16.mxu0 %v1736
        %1884 = vmatmul.mubr.bf16.gmra.mrb[0].mxu0 %v919
        %v1885 = vpop.f32.mrb[0].mxu0
        %v1886 = vadd.f32 %v1470, %v1885
        %v1887 = vpop.f32.mrb[0].mxu0
        %v1888 = vpop.f32.mrb[0].mxu0
        %v1889 = vadd.f32 %v1473, %v1888
        %v1890 = vpop.f32.mrb[0].mxu0
        %1891 = vmatprep.mubr.bf16.mxu0 %v1739
        %1892 = vmatmul.mubr.bf16.gmra.mrb[0].mxu0 %v921
        %v1893 = vpop.f32.mrb[0].mxu0
        %v1894 = vadd.f32 %v1478, %v1893
        %v1895 = vpop.f32.mrb[0].mxu0
        %v1896 = vpop.f32.mrb[0].mxu0
        %v1897 = vadd.f32 %v1481, %v1896
        %v1898 = vpop.f32.mrb[0].mxu0
        %1899 = vmatprep.mubr.bf16.mxu0 %v1742
        %1900 = vmatmul.mubr.bf16.gmra.mrb[0].mxu0 %v923
        %v1901 = vpop.f32.mrb[0].mxu0
        %v1902 = vadd.f32 %v1486, %v1901
        %v1903 = vpop.f32.mrb[0].mxu0
        %v1904 = vpop.f32.mrb[0].mxu0
        %v1905 = vadd.f32 %v1489, %v1904
        %v1906 = vpop.f32.mrb[0].mxu0
        %1907 = vmatprep.mubr.bf16.mxu0 %v1745
        %1908 = vmatmul.mubr.bf16.gmra.mrb[0].mxu0 %v925
        %v1909 = vpop.f32.mrb[0].mxu0
        %v1910 = vadd.f32 %v1494, %v1909
        %v1911 = vpop.f32.mrb[0].mxu0
        %v1912 = vpop.f32.mrb[0].mxu0
        %v1913 = vadd.f32 %v1497, %v1912
        %v1914 = vpop.f32.mrb[0].mxu0
        %1915 = vmatprep.mubr.bf16.mxu0 %v1748
        %1916 = vmatmul.mubr.bf16.gmra.mrb[0].mxu0 %v927
        %v1917 = vpop.f32.mrb[0].mxu0
        %v1918 = vadd.f32 %v1502, %v1917
        %v1919 = vpop.f32.mrb[0].mxu0
        %v1920 = vpop.f32.mrb[0].mxu0
        %v1921 = vadd.f32 %v1505, %v1920
        %v1922 = vpop.f32.mrb[0].mxu0
        %1923 = vdwg.mxu0
        %s1924 = scalar_lea.vmem [#allocation2], 672
        %v1925 = vld [vmem:[%s1924] sm:$0xff]
        %v1926 = vld [vmem:[%s1924 + $0x8] sm:$0xf]
        %v1927 = vld [vmem:[%s1924 + $0xc] sm:$0xff]
        %v1928 = vld [vmem:[%s1924 + $0x14] sm:$0xf]
        %v1929 = vld [vmem:[%s1924 + $0x18] sm:$0xff]
        %v1930 = vld [vmem:[%s1924 + $0x20] sm:$0xf]
        %v1931 = vld [vmem:[%s1924 + $0x24] sm:$0xff]
        %v1932 = vld [vmem:[%s1924 + $0x2c] sm:$0xf]
        %v1933 = vld [vmem:[%s1924 + $0x30] sm:$0xff]
        %v1934 = vld [vmem:[%s1924 + $0x38] sm:$0xf]
        %v1935 = vld [vmem:[%s1924 + $0x3c] sm:$0xff]
        %v1936 = vld [vmem:[%s1924 + $0x44] sm:$0xf]
        %v1937 = vld [vmem:[%s1924 + $0x48] sm:$0xff]
        %v1938 = vld [vmem:[%s1924 + $0x50] sm:$0xf]
        %v1939 = vld [vmem:[%s1924 + $0x54] sm:$0xff]
        %v1940 = vld [vmem:[%s1924 + $0x5c] sm:$0xf]
        %v1941 = vld [vmem:[%s1924 + $0x60] sm:$0xff]
        %v1942 = vld [vmem:[%s1924 + $0x68] sm:$0xf]
        %v1943 = vld [vmem:[%s1924 + $0x6c] sm:$0xff]
        %v1944 = vld [vmem:[%s1924 + $0x74] sm:$0xf]
        %v1945 = vld [vmem:[%s1924 + $0x78] sm:$0xff]
        %v1946 = vld [vmem:[%s1924 + $0x80] sm:$0xf]
        %v1947 = vld [vmem:[%s1924 + $0x84] sm:$0xff]
        %v1948 = vld [vmem:[%s1924 + $0x8c] sm:$0xf]
        %v1949 = vld [vmem:[%s1924 + $0x90] sm:$0xff]
        %v1950 = vld [vmem:[%s1924 + $0x98] sm:$0xf]
        %v1951 = vld [vmem:[%s1924 + $0x9c] sm:$0xff]
        %v1952 = vld [vmem:[%s1924 + $0xa4] sm:$0xf]
        %v1953 = vld [vmem:[%s1924 + $0xa8] sm:$0xff]
        %v1954 = vld [vmem:[%s1924 + $0xb0] sm:$0xf]
        %v1955 = vld [vmem:[%s1924 + $0xb4] sm:$0xff]
        %v1956 = vld [vmem:[%s1924 + $0xbc] sm:$0xf]
        %v1957 = vld [vmem:[%s1924 + $0xc0] sm:$0xff]
        %v1958 = vld [vmem:[%s1924 + $0xc8] sm:$0xf]
        %v1959 = vld [vmem:[%s1924 + $0xcc] sm:$0xff]
        %v1960 = vld [vmem:[%s1924 + $0xd4] sm:$0xf]
        %v1961 = vld [vmem:[%s1924 + $0xd8] sm:$0xff]
        %v1962 = vld [vmem:[%s1924 + $0xe0] sm:$0xf]
        %v1963 = vld [vmem:[%s1924 + $0xe4] sm:$0xff]
        %v1964 = vld [vmem:[%s1924 + $0xec] sm:$0xf]
        %v1965 = vld [vmem:[%s1924 + $0xf0] sm:$0xff]
        %v1966 = vld [vmem:[%s1924 + $0xf8] sm:$0xf]
        %v1967 = vld [vmem:[%s1924 + $0xfc] sm:$0xff]
        %v1968 = vld [vmem:[%s1924 + $0x104] sm:$0xf]
        %v1969 = vld [vmem:[%s1924 + $0x108] sm:$0xff]
        %v1970 = vld [vmem:[%s1924 + $0x110] sm:$0xf]
        %v1971 = vld [vmem:[%s1924 + $0x114] sm:$0xff]
        %v1972 = vld [vmem:[%s1924 + $0x11c] sm:$0xf]
        %v1973 = vld [vmem:[%s1924 + $0x120] sm:$0xff]
        %v1974 = vld [vmem:[%s1924 + $0x128] sm:$0xf]
        %v1975 = vld [vmem:[%s1924 + $0x12c] sm:$0xff]
        %v1976 = vld [vmem:[%s1924 + $0x134] sm:$0xf]
        %v1977 = vld [vmem:[%s1924 + $0x138] sm:$0xff]
        %v1978 = vld [vmem:[%s1924 + $0x140] sm:$0xf]
        %v1979 = vld [vmem:[%s1924 + $0x144] sm:$0xff]
        %v1980 = vld [vmem:[%s1924 + $0x14c] sm:$0xf]
        %v2037 = vunpack.c.l.b16 %v1925
        %v2038 = vunpack.c.h.b16 %v1925
        %v2039 = vunpack.c.l.b16 %v1926
        %v2040 = vunpack.c.l.b16 %v1927
        %v2041 = vunpack.c.h.b16 %v1927
        %v2042 = vunpack.c.l.b16 %v1928
        %v2043 = vunpack.c.l.b16 %v1929
        %v2044 = vunpack.c.h.b16 %v1929
        %v2045 = vunpack.c.l.b16 %v1930
        %v2046 = vunpack.c.l.b16 %v1931
        %v2047 = vunpack.c.h.b16 %v1931
        %v2048 = vunpack.c.l.b16 %v1932
        %v2049 = vunpack.c.l.b16 %v1933
        %v2050 = vunpack.c.h.b16 %v1933
        %v2051 = vunpack.c.l.b16 %v1934
        %v2052 = vunpack.c.l.b16 %v1935
        %v2053 = vunpack.c.h.b16 %v1935
        %v2054 = vunpack.c.l.b16 %v1936
        %v2055 = vunpack.c.l.b16 %v1937
        %v2056 = vunpack.c.h.b16 %v1937
        %v2057 = vunpack.c.l.b16 %v1938
        %v2058 = vunpack.c.l.b16 %v1939
        %v2059 = vunpack.c.h.b16 %v1939
        %v2060 = vunpack.c.l.b16 %v1940
        %v2061 = vunpack.c.l.b16 %v1941
        %v2062 = vunpack.c.h.b16 %v1941
        %v2063 = vunpack.c.l.b16 %v1942
        %v2064 = vunpack.c.l.b16 %v1943
        %v2065 = vunpack.c.h.b16 %v1943
        %v2066 = vunpack.c.l.b16 %v1944
        %v2067 = vunpack.c.l.b16 %v1945
        %v2068 = vunpack.c.h.b16 %v1945
        %v2069 = vunpack.c.l.b16 %v1946
        %v2070 = vunpack.c.l.b16 %v1947
        %v2071 = vunpack.c.h.b16 %v1947
        %v2072 = vunpack.c.l.b16 %v1948
        %v2073 = vunpack.c.l.b16 %v1949
        %v2074 = vunpack.c.h.b16 %v1949
        %v2075 = vunpack.c.l.b16 %v1950
        %v2076 = vunpack.c.l.b16 %v1951
        %v2077 = vunpack.c.h.b16 %v1951
        %v2078 = vunpack.c.l.b16 %v1952
        %v2079 = vunpack.c.l.b16 %v1953
        %v2080 = vunpack.c.h.b16 %v1953
        %v2081 = vunpack.c.l.b16 %v1954
        %v2082 = vunpack.c.l.b16 %v1955
        %v2083 = vunpack.c.h.b16 %v1955
        %v2084 = vunpack.c.l.b16 %v1956
        %v2085 = vunpack.c.l.b16 %v1957
        %v2086 = vunpack.c.h.b16 %v1957
        %v2087 = vunpack.c.l.b16 %v1958
        %v2088 = vunpack.c.l.b16 %v1959
        %v2089 = vunpack.c.h.b16 %v1959
        %v2090 = vunpack.c.l.b16 %v1960
        %v2091 = vunpack.c.l.b16 %v1961
        %v2092 = vunpack.c.h.b16 %v1961
        %v2093 = vunpack.c.l.b16 %v1962
        %v2094 = vunpack.c.l.b16 %v1963
        %v2095 = vunpack.c.h.b16 %v1963
        %v2096 = vunpack.c.l.b16 %v1964
        %v2097 = vunpack.c.l.b16 %v1965
        %v2098 = vunpack.c.h.b16 %v1965
        %v2099 = vunpack.c.l.b16 %v1966
        %v2100 = vunpack.c.l.b16 %v1967
        %v2101 = vunpack.c.h.b16 %v1967
        %v2102 = vunpack.c.l.b16 %v1968
        %v2103 = vunpack.c.l.b16 %v1969
        %v2104 = vunpack.c.h.b16 %v1969
        %v2105 = vunpack.c.l.b16 %v1970
        %v2106 = vunpack.c.l.b16 %v1971
        %v2107 = vunpack.c.h.b16 %v1971
        %v2108 = vunpack.c.l.b16 %v1972
        %v2109 = vunpack.c.l.b16 %v1973
        %v2110 = vunpack.c.h.b16 %v1973
        %v2111 = vunpack.c.l.b16 %v1974
        %v2112 = vunpack.c.l.b16 %v1975
        %v2113 = vunpack.c.h.b16 %v1975
        %v2114 = vunpack.c.l.b16 %v1976
        %v2115 = vunpack.c.l.b16 %v1977
        %v2116 = vunpack.c.h.b16 %v1977
        %v2117 = vunpack.c.l.b16 %v1978
        %v2118 = vunpack.c.l.b16 %v1979
        %v2119 = vunpack.c.h.b16 %v1979
        %v2120 = vunpack.c.l.b16 %v1980
        %v2121 = vpack.c.b16 %v2040, %v2037
        %v2122 = vpack.c.b16 %v2041, %v2038
        %v2123 = vpack.c.b16 %v2042, %v2039
        %v2124 = vpack.c.b16 %v2046, %v2043
        %v2125 = vpack.c.b16 %v2047, %v2044
        %v2126 = vpack.c.b16 %v2048, %v2045
        %v2127 = vpack.c.b16 %v2052, %v2049
        %v2128 = vpack.c.b16 %v2053, %v2050
        %v2129 = vpack.c.b16 %v2054, %v2051
        %v2130 = vpack.c.b16 %v2058, %v2055
        %v2131 = vpack.c.b16 %v2059, %v2056
        %v2132 = vpack.c.b16 %v2060, %v2057
        %v2133 = vpack.c.b16 %v2064, %v2061
        %v2134 = vpack.c.b16 %v2065, %v2062
        %v2135 = vpack.c.b16 %v2066, %v2063
        %v2136 = vpack.c.b16 %v2070, %v2067
        %v2137 = vpack.c.b16 %v2071, %v2068
        %v2138 = vpack.c.b16 %v2072, %v2069
        %v2139 = vpack.c.b16 %v2076, %v2073
        %v2140 = vpack.c.b16 %v2077, %v2074
        %v2141 = vpack.c.b16 %v2078, %v2075
        %v2142 = vpack.c.b16 %v2082, %v2079
        %v2143 = vpack.c.b16 %v2083, %v2080
        %v2144 = vpack.c.b16 %v2084, %v2081
        %v2145 = vpack.c.b16 %v2088, %v2085
        %v2146 = vpack.c.b16 %v2089, %v2086
        %v2147 = vpack.c.b16 %v2090, %v2087
        %v2148 = vpack.c.b16 %v2094, %v2091
        %v2149 = vpack.c.b16 %v2095, %v2092
        %v2150 = vpack.c.b16 %v2096, %v2093
        %v2151 = vpack.c.b16 %v2100, %v2097
        %v2152 = vpack.c.b16 %v2101, %v2098
        %v2153 = vpack.c.b16 %v2102, %v2099
        %v2154 = vpack.c.b16 %v2106, %v2103
        %v2155 = vpack.c.b16 %v2107, %v2104
        %v2156 = vpack.c.b16 %v2108, %v2105
        %v2157 = vpack.c.b16 %v2112, %v2109
        %v2158 = vpack.c.b16 %v2113, %v2110
        %v2159 = vpack.c.b16 %v2114, %v2111
        %v2160 = vpack.c.b16 %v2118, %v2115
        %v2161 = vpack.c.b16 %v2119, %v2116
        %v2162 = vpack.c.b16 %v2120, %v2117
        %v2206 = vsel %vm1315, %v930, 0
        %2208 = vmatprep.subr.bf16.mxu0 %v2122
        %2209 = vmatpush1.bf16.msra.mxu0 %v2121
        %2210 = vmatprep.subr.bf16.mxu0 %v2125
        %2211 = vmatpush1.bf16.msra.mxu0 %v2124
        %2212 = vmatprep.subr.bf16.mxu0 %v2128
        %2213 = vmatpush1.bf16.msra.mxu0 %v2127
        %2214 = vmatprep.subr.bf16.mxu0 %v2131
        %2215 = vmatpush1.bf16.msra.mxu0 %v2130
        %2216 = vmatprep.subr.bf16.mxu0 %v2134
        %2217 = vmatpush1.bf16.msra.mxu0 %v2133
        %2218 = vmatprep.subr.bf16.mxu0 %v2137
        %2219 = vmatpush1.bf16.msra.mxu0 %v2136
        %2220 = vmatprep.subr.bf16.mxu0 %v2140
        %2221 = vmatpush1.bf16.msra.mxu0 %v2139
        %2222 = vmatprep.subr.bf16.mxu0 %v2143
        %2223 = vmatpush1.bf16.msra.mxu0 %v2142
        %2224 = vmatprep.subr.bf16.mxu0 %v2146
        %2225 = vmatpush1.bf16.msra.mxu0 %v2145
        %2226 = vmatprep.subr.bf16.mxu0 %v2149
        %2227 = vmatpush1.bf16.msra.mxu0 %v2148
        %2228 = vmatprep.subr.bf16.mxu0 %v2152
        %2229 = vmatpush1.bf16.msra.mxu0 %v2151
        %2230 = vmatprep.subr.bf16.mxu0 %v2155
        %2231 = vmatpush1.bf16.msra.mxu0 %v2154
        %2232 = vmatprep.subr.bf16.mxu0 %v2158
        %2233 = vmatpush1.bf16.msra.mxu0 %v2157
        %2234 = vmatprep.subr.bf16.mxu0 %v2161
        %2235 = vmatpush1.bf16.msra.mxu0 %v2160
        %2236 = vmatprep.subr.bf16.mxu0 0
        %2237 = vmatpush1.bf16.msra.mxu0 0
        %2238 = vmatprep.subr.bf16.mxu0 0
        %2239 = vmatpush1.bf16.msra.mxu0 0
        %2240 = vmatprep.mubr.bf16.mxu0 %v1736
        %2241 = vmatmul.mubr.bf16.gmra.mrb[0].mxu0 %v919
        %v2242 = vpop.f32.mrb[0].mxu0
        %v2243 = vadd.f32 0.0, %v2242
        %v2244 = vpop.f32.mrb[0].mxu0
        %v2245 = vadd.f32 0.0, %v2244
        %v2246 = vpop.f32.mrb[0].mxu0
        %v2247 = vadd.f32 0.0, %v2246
        %v2248 = vpop.f32.mrb[0].mxu0
        %v2249 = vadd.f32 0.0, %v2248
        %2250 = vmatprep.mubr.bf16.mxu0 %v1739
        %2251 = vmatmul.mubr.bf16.gmra.mrb[0].mxu0 %v921
        %v2252 = vpop.f32.mrb[0].mxu0
        %v2253 = vadd.f32 0.0, %v2252
        %v2254 = vpop.f32.mrb[0].mxu0
        %v2255 = vadd.f32 0.0, %v2254
        %v2256 = vpop.f32.mrb[0].mxu0
        %v2257 = vadd.f32 0.0, %v2256
        %v2258 = vpop.f32.mrb[0].mxu0
        %v2259 = vadd.f32 0.0, %v2258
        %2260 = vmatprep.mubr.bf16.mxu0 %v1742
        %2261 = vmatmul.mubr.bf16.gmra.mrb[0].mxu0 %v923
        %v2262 = vpop.f32.mrb[0].mxu0
        %v2263 = vadd.f32 0.0, %v2262
        %v2264 = vpop.f32.mrb[0].mxu0
        %v2265 = vadd.f32 0.0, %v2264
        %v2266 = vpop.f32.mrb[0].mxu0
        %v2267 = vadd.f32 0.0, %v2266
        %v2268 = vpop.f32.mrb[0].mxu0
        %v2269 = vadd.f32 0.0, %v2268
        %2270 = vmatprep.mubr.bf16.mxu0 %v1745
        %2271 = vmatmul.mubr.bf16.gmra.mrb[0].mxu0 %v925
        %v2272 = vpop.f32.mrb[0].mxu0
        %v2273 = vadd.f32 0.0, %v2272
        %v2274 = vpop.f32.mrb[0].mxu0
        %v2275 = vadd.f32 0.0, %v2274
        %v2276 = vpop.f32.mrb[0].mxu0
        %v2277 = vadd.f32 0.0, %v2276
        %v2278 = vpop.f32.mrb[0].mxu0
        %v2279 = vadd.f32 0.0, %v2278
        %2280 = vmatprep.mubr.bf16.mxu0 %v1748
        %2281 = vmatmul.mubr.bf16.gmra.mrb[0].mxu0 %v927
        %v2282 = vpop.f32.mrb[0].mxu0
        %v2283 = vadd.f32 0.0, %v2282
        %v2284 = vpop.f32.mrb[0].mxu0
        %v2285 = vadd.f32 0.0, %v2284
        %v2286 = vpop.f32.mrb[0].mxu0
        %v2287 = vadd.f32 0.0, %v2286
        %v2288 = vpop.f32.mrb[0].mxu0
        %v2289 = vadd.f32 0.0, %v2288
        %2290 = vmatprep.mubr.bf16.mxu0 %v2206
        %2291 = vmatmul.mubr.bf16.gmra.mrb[0].mxu0 %v929
        %v2292 = vpop.f32.mrb[0].mxu0
        %v2293 = vadd.f32 0.0, %v2292
        %v2294 = vpop.f32.mrb[0].mxu0
        %v2295 = vadd.f32 0.0, %v2294
        %v2296 = vpop.f32.mrb[0].mxu0
        %v2297 = vadd.f32 0.0, %v2296
        %v2298 = vpop.f32.mrb[0].mxu0
        %v2299 = vadd.f32 0.0, %v2298
        %2300 = vdwg.mxu0
        %2301 = vmatprep.subr.bf16.mxu0 0
        %2302 = vmatpush1.bf16.msra.mxu0 %v2123
        %2303 = vmatprep.subr.bf16.mxu0 0
        %2304 = vmatpush1.bf16.msra.mxu0 %v2126
        %2305 = vmatprep.subr.bf16.mxu0 0
        %2306 = vmatpush1.bf16.msra.mxu0 %v2129
        %2307 = vmatprep.subr.bf16.mxu0 0
        %2308 = vmatpush1.bf16.msra.mxu0 %v2132
        %2309 = vmatprep.subr.bf16.mxu0 0
        %2310 = vmatpush1.bf16.msra.mxu0 %v2135
        %2311 = vmatprep.subr.bf16.mxu0 0
        %2312 = vmatpush1.bf16.msra.mxu0 %v2138
        %2313 = vmatprep.subr.bf16.mxu0 0
        %2314 = vmatpush1.bf16.msra.mxu0 %v2141
        %2315 = vmatprep.subr.bf16.mxu0 0
        %2316 = vmatpush1.bf16.msra.mxu0 %v2144
        %2317 = vmatprep.subr.bf16.mxu0 0
        %2318 = vmatpush1.bf16.msra.mxu0 %v2147
        %2319 = vmatprep.subr.bf16.mxu0 0
        %2320 = vmatpush1.bf16.msra.mxu0 %v2150
        %2321 = vmatprep.subr.bf16.mxu0 0
        %2322 = vmatpush1.bf16.msra.mxu0 %v2153
        %2323 = vmatprep.subr.bf16.mxu0 0
        %2324 = vmatpush1.bf16.msra.mxu0 %v2156
        %2325 = vmatprep.subr.bf16.mxu0 0
        %2326 = vmatpush1.bf16.msra.mxu0 %v2159
        %2327 = vmatprep.subr.bf16.mxu0 0
        %2328 = vmatpush1.bf16.msra.mxu0 %v2162
        %2329 = vmatprep.subr.bf16.mxu0 0
        %2330 = vmatpush1.bf16.msra.mxu0 0
        %2331 = vmatprep.subr.bf16.mxu0 0
        %2332 = vmatpush1.bf16.msra.mxu0 0
        %2333 = vmatprep.mubr.bf16.mxu0 %v1736
        %2334 = vmatmul.mubr.bf16.gmra.mrb[0].mxu0 %v919
        %v2335 = vpop.f32.mrb[0].mxu0
        %v2336 = vadd.f32 0.0, %v2335
        %v2337 = vpop.f32.mrb[0].mxu0
        %v2338 = vpop.f32.mrb[0].mxu0
        %v2339 = vadd.f32 0.0, %v2338
        %v2340 = vpop.f32.mrb[0].mxu0
        %2341 = vmatprep.mubr.bf16.mxu0 %v1739
        %2342 = vmatmul.mubr.bf16.gmra.mrb[0].mxu0 %v921
        %v2343 = vpop.f32.mrb[0].mxu0
        %v2344 = vadd.f32 0.0, %v2343
        %v2345 = vpop.f32.mrb[0].mxu0
        %v2346 = vpop.f32.mrb[0].mxu0
        %v2347 = vadd.f32 0.0, %v2346
        %v2348 = vpop.f32.mrb[0].mxu0
        %2349 = vmatprep.mubr.bf16.mxu0 %v1742
        %2350 = vmatmul.mubr.bf16.gmra.mrb[0].mxu0 %v923
        %v2351 = vpop.f32.mrb[0].mxu0
        %v2352 = vadd.f32 0.0, %v2351
        %v2353 = vpop.f32.mrb[0].mxu0
        %v2354 = vpop.f32.mrb[0].mxu0
        %v2355 = vadd.f32 0.0, %v2354
        %v2356 = vpop.f32.mrb[0].mxu0
        %2357 = vmatprep.mubr.bf16.mxu0 %v1745
        %2358 = vmatmul.mubr.bf16.gmra.mrb[0].mxu0 %v925
        %v2359 = vpop.f32.mrb[0].mxu0
        %v2360 = vadd.f32 0.0, %v2359
        %v2361 = vpop.f32.mrb[0].mxu0
        %v2362 = vpop.f32.mrb[0].mxu0
        %v2363 = vadd.f32 0.0, %v2362
        %v2364 = vpop.f32.mrb[0].mxu0
        %2365 = vmatprep.mubr.bf16.mxu0 %v1748
        %2366 = vmatmul.mubr.bf16.gmra.mrb[0].mxu0 %v927
        %v2367 = vpop.f32.mrb[0].mxu0
        %v2368 = vadd.f32 0.0, %v2367
        %v2369 = vpop.f32.mrb[0].mxu0
        %v2370 = vpop.f32.mrb[0].mxu0
        %v2371 = vadd.f32 0.0, %v2370
        %v2372 = vpop.f32.mrb[0].mxu0
        %2373 = vmatprep.mubr.bf16.mxu0 %v2206
        %2374 = vmatmul.mubr.bf16.gmra.mrb[0].mxu0 %v929
        %v2375 = vpop.f32.mrb[0].mxu0
        %v2376 = vadd.f32 0.0, %v2375
        %v2377 = vpop.f32.mrb[0].mxu0
        %v2378 = vpop.f32.mrb[0].mxu0
        %v2379 = vadd.f32 0.0, %v2378
        %v2380 = vpop.f32.mrb[0].mxu0
        %2381 = vdwg.mxu0
        %v2382 = vadd.f32 %v1785, %v2243
        %v2383 = vadd.f32 %v1787, %v2245
        %v2384 = vadd.f32 %v1878, %v2336
        %v2385 = vadd.f32 %v1789, %v2247
        %v2386 = vadd.f32 %v1791, %v2249
        %v2387 = vadd.f32 %v1881, %v2339
        %v2388 = vadd.f32 %v1795, %v2253
        %v2389 = vadd.f32 %v1797, %v2255
        %v2390 = vadd.f32 %v1886, %v2344
        %v2391 = vadd.f32 %v1799, %v2257
        %v2392 = vadd.f32 %v1801, %v2259
        %v2393 = vadd.f32 %v1889, %v2347
        %v2394 = vadd.f32 %v1805, %v2263
        %v2395 = vadd.f32 %v1807, %v2265
        %v2396 = vadd.f32 %v1894, %v2352
        %v2397 = vadd.f32 %v1809, %v2267
        %v2398 = vadd.f32 %v1811, %v2269
        %v2399 = vadd.f32 %v1897, %v2355
        %v2400 = vadd.f32 %v1815, %v2273
        %v2401 = vadd.f32 %v1817, %v2275
        %v2402 = vadd.f32 %v1902, %v2360
        %v2403 = vadd.f32 %v1819, %v2277
        %v2404 = vadd.f32 %v1821, %v2279
        %v2405 = vadd.f32 %v1905, %v2363
        %v2406 = vadd.f32 %v1825, %v2283
        %v2407 = vadd.f32 %v1827, %v2285
        %v2408 = vadd.f32 %v1910, %v2368
        %v2409 = vadd.f32 %v1829, %v2287
        %v2410 = vadd.f32 %v1831, %v2289
        %v2411 = vadd.f32 %v1913, %v2371
        %v2412 = vadd.f32 %v1835, %v2293
        %v2413 = vadd.f32 %v1837, %v2295
        %v2414 = vadd.f32 %v1918, %v2376
        %v2415 = vadd.f32 %v1839, %v2297
        %v2416 = vadd.f32 %v1841, %v2299
        %v2417 = vadd.f32 %v1921, %v2379
        %v2418 = vld [vmem:[%s4] sm:$0x7]
        %v2420 = vlaneseq
        %v2421 = vshrl.u32 %v2420, 7
        %v2422 = vsub.s32 0, %v2421
        %v2423 = vrot.slane %v2418, %v2422
        %v2424 = vlaneseq
        %v2425 = vshrl.u32 %v2424, 7
        %v2426 = vsub.s32 1, %v2425
        %v2427 = vrot.slane %v2418, %v2426
        %v2428 = vlaneseq
        %v2429 = vshrl.u32 %v2428, 7
        %v2430 = vsub.s32 2, %v2429
        %v2431 = vrot.slane %v2418, %v2430
        %v2435 = vadd.f32 %v2382, %v2423
        %v2436 = vadd.f32 %v2383, %v2427
        %v2437 = vadd.f32 %v2384, %v2431
        %v2438 = vadd.f32 %v2385, %v2423
        %v2439 = vadd.f32 %v2386, %v2427
        %v2440 = vadd.f32 %v2387, %v2431
        %v2441 = vadd.f32 %v2388, %v2423
        %v2442 = vadd.f32 %v2389, %v2427
        %v2443 = vadd.f32 %v2390, %v2431
        %v2444 = vadd.f32 %v2391, %v2423
        %v2445 = vadd.f32 %v2392, %v2427
        %v2446 = vadd.f32 %v2393, %v2431
        %v2447 = vadd.f32 %v2394, %v2423
        %v2448 = vadd.f32 %v2395, %v2427
        %v2449 = vadd.f32 %v2396, %v2431
        %v2450 = vadd.f32 %v2397, %v2423
        %v2451 = vadd.f32 %v2398, %v2427
        %v2452 = vadd.f32 %v2399, %v2431
        %v2453 = vadd.f32 %v2400, %v2423
        %v2454 = vadd.f32 %v2401, %v2427
        %v2455 = vadd.f32 %v2402, %v2431
        %v2456 = vadd.f32 %v2403, %v2423
        %v2457 = vadd.f32 %v2404, %v2427
        %v2458 = vadd.f32 %v2405, %v2431
        %v2459 = vadd.f32 %v2406, %v2423
        %v2460 = vadd.f32 %v2407, %v2427
        %v2461 = vadd.f32 %v2408, %v2431
        %v2462 = vadd.f32 %v2409, %v2423
        %v2463 = vadd.f32 %v2410, %v2427
        %v2464 = vadd.f32 %v2411, %v2431
        %v2465 = vadd.f32 %v2412, %v2423
        %v2466 = vadd.f32 %v2413, %v2427
        %v2467 = vadd.f32 %v2414, %v2431
        %v2468 = vadd.f32 %v2415, %v2423
        %v2469 = vadd.f32 %v2416, %v2427
        %v2470 = vadd.f32 %v2417, %v2431
        %v2471 = vmax.f32 %v2435, 0.0
        %v2472 = vmax.f32 %v2436, 0.0
        %v2473 = vmax.f32 %v2437, 0.0
        %v2474 = vmax.f32 %v2438, 0.0
        %v2475 = vmax.f32 %v2439, 0.0
        %v2476 = vmax.f32 %v2440, 0.0
        %v2477 = vmax.f32 %v2441, 0.0
        %v2478 = vmax.f32 %v2442, 0.0
        %v2479 = vmax.f32 %v2443, 0.0
        %v2480 = vmax.f32 %v2444, 0.0
        %v2481 = vmax.f32 %v2445, 0.0
        %v2482 = vmax.f32 %v2446, 0.0
        %v2483 = vmax.f32 %v2447, 0.0
        %v2484 = vmax.f32 %v2448, 0.0
        %v2485 = vmax.f32 %v2449, 0.0
        %v2486 = vmax.f32 %v2450, 0.0
        %v2487 = vmax.f32 %v2451, 0.0
        %v2488 = vmax.f32 %v2452, 0.0
        %v2489 = vmax.f32 %v2453, 0.0
        %v2490 = vmax.f32 %v2454, 0.0
        %v2491 = vmax.f32 %v2455, 0.0
        %v2492 = vmax.f32 %v2456, 0.0
        %v2493 = vmax.f32 %v2457, 0.0
        %v2494 = vmax.f32 %v2458, 0.0
        %v2495 = vmax.f32 %v2459, 0.0
        %v2496 = vmax.f32 %v2460, 0.0
        %v2497 = vmax.f32 %v2461, 0.0
        %v2498 = vmax.f32 %v2462, 0.0
        %v2499 = vmax.f32 %v2463, 0.0
        %v2500 = vmax.f32 %v2464, 0.0
        %v2501 = vmax.f32 %v2465, 0.0
        %v2502 = vmax.f32 %v2466, 0.0
        %v2503 = vmax.f32 %v2467, 0.0
        %v2504 = vmax.f32 %v2468, 0.0
        %v2505 = vmax.f32 %v2469, 0.0
        %v2506 = vmax.f32 %v2470, 0.0
        %v2507 = vpack.c.bf16 %v2474, %v2471
        %v2508 = vpack.c.bf16 %v2475, %v2472
        %v2509 = vpack.c.bf16 %v2476, %v2473
        %v2510 = vpack.c.bf16 %v2480, %v2477
        %v2511 = vpack.c.bf16 %v2481, %v2478
        %v2512 = vpack.c.bf16 %v2482, %v2479
        %v2513 = vpack.c.bf16 %v2486, %v2483
        %v2514 = vpack.c.bf16 %v2487, %v2484
        %v2515 = vpack.c.bf16 %v2488, %v2485
        %v2516 = vpack.c.bf16 %v2492, %v2489
        %v2517 = vpack.c.bf16 %v2493, %v2490
        %v2518 = vpack.c.bf16 %v2494, %v2491
        %v2519 = vpack.c.bf16 %v2498, %v2495
        %v2520 = vpack.c.bf16 %v2499, %v2496
        %v2521 = vpack.c.bf16 %v2500, %v2497
        %v2522 = vpack.c.bf16 %v2504, %v2501
        %v2523 = vpack.c.bf16 %v2505, %v2502
        %v2524 = vpack.c.bf16 %v2506, %v2503
        %v2528 = vrot.slane %v2507, 4
        %v2529 = vrot.slane %v2508, 4
        %v2530 = vrot.slane %v2509, 4
        %v2537 = vrot.slane %v2510, 4
        %v2538 = vrot.slane %v2511, 4
        %v2539 = vrot.slane %v2512, 4
        %v2546 = vrot.slane %v2513, 4
        %v2547 = vrot.slane %v2514, 4
        %v2548 = vrot.slane %v2515, 4
        %v2555 = vrot.slane %v2516, 4
        %v2556 = vrot.slane %v2517, 4
        %v2557 = vrot.slane %v2518, 4
        %v2564 = vrot.slane %v2519, 4
        %v2565 = vrot.slane %v2520, 4
        %v2566 = vrot.slane %v2521, 4
        %v2573 = vrot.slane %v2522, 4
        %v2574 = vrot.slane %v2523, 4
        %v2575 = vrot.slane %v2524, 4
        %v2579 = vld [vmem:[%s5] sm:$0xf]
        %v2580 = vld [vmem:[%s5 + $0x4] sm:$0xf]
        %v2581 = vld [vmem:[%s5 + $0x8] sm:$0xf]
        %v2582 = vld [vmem:[%s5 + $0xc] sm:$0xf]
        %v2583 = vld [vmem:[%s5 + $0x10] sm:$0xf]
        %v2584 = vld [vmem:[%s5 + $0x14] sm:$0xf]
        %v2585 = vld [vmem:[%s5 + $0x18] sm:$0xf]
        %v2586 = vld [vmem:[%s5 + $0x1c] sm:$0xf]
        %v2587 = vld [vmem:[%s5 + $0x20] sm:$0xf]
        %v2588 = vld [vmem:[%s5 + $0x24] sm:$0xf]
        %v2589 = vld [vmem:[%s5 + $0x28] sm:$0xf]
        %v2590 = vld [vmem:[%s5 + $0x2c] sm:$0xf]
        %v2591 = vld [vmem:[%s5 + $0x30] sm:$0xf]
        %v2592 = vld [vmem:[%s5 + $0x34] sm:$0xf]
        %v2593 = vld [vmem:[%s5 + $0x38] sm:$0xf]
        %v2594 = vld [vmem:[%s5 + $0x3c] sm:$0xf]
        %v2595 = vld [vmem:[%s5 + $0x40] sm:$0xf]
        %v2596 = vld [vmem:[%s5 + $0x44] sm:$0xf]
        %v2597 = vld [vmem:[%s5 + $0x48] sm:$0xf]
        %v2598 = vld [vmem:[%s5 + $0x4c] sm:$0xf]
        %v2599 = vld [vmem:[%s5 + $0x50] sm:$0xf]
        %v2600 = vld [vmem:[%s5 + $0x54] sm:$0xf]
        %v2601 = vld [vmem:[%s5 + $0x58] sm:$0xf]
        %v2602 = vld [vmem:[%s5 + $0x5c] sm:$0xf]
        %v2603 = vld [vmem:[%s5 + $0x60] sm:$0xf]
        %v2604 = vld [vmem:[%s5 + $0x64] sm:$0xf]
        %v2605 = vld [vmem:[%s5 + $0x68] sm:$0xf]
        %v2606 = vld [vmem:[%s5 + $0x6c] sm:$0xf]
        %v2607 = vld [vmem:[%s5 + $0x70] sm:$0xf]
        %v2608 = vld [vmem:[%s5 + $0x74] sm:$0xf]
        %v2609 = vld [vmem:[%s5 + $0x78] sm:$0xf]
        %v2610 = vld [vmem:[%s5 + $0x7c] sm:$0xf]
        %v2611 = vld [vmem:[%s5 + $0x80] sm:$0xf]
        %v2612 = vld [vmem:[%s5 + $0x84] sm:$0xf]
        %v2613 = vld [vmem:[%s5 + $0x88] sm:$0xf]
        %v2614 = vld [vmem:[%s5 + $0x8c] sm:$0xf]
        %v2615 = vld [vmem:[%s5 + $0x90] sm:$0xf]
        %v2616 = vld [vmem:[%s5 + $0x94] sm:$0xf]
        %v2617 = vld [vmem:[%s5 + $0x98] sm:$0xf]
        %v2618 = vld [vmem:[%s5 + $0x9c] sm:$0xf]
        %v2619 = vld [vmem:[%s5 + $0xa0] sm:$0xf]
        %v2620 = vld [vmem:[%s5 + $0xa4] sm:$0xf]
        %v2621 = vld [vmem:[%s5 + $0xa8] sm:$0xf]
        %v2622 = vld [vmem:[%s5 + $0xac] sm:$0xf]
        %v2623 = vld [vmem:[%s5 + $0xb0] sm:$0xf]
        %v2624 = vld [vmem:[%s5 + $0xb4] sm:$0xf]
        %v2625 = vld [vmem:[%s5 + $0xb8] sm:$0xf]
        %v2626 = vld [vmem:[%s5 + $0xbc] sm:$0xf]
        %v2627 = vld [vmem:[%s5 + $0xc0] sm:$0xf]
        %v2628 = vld [vmem:[%s5 + $0xc4] sm:$0xf]
        %v2629 = vld [vmem:[%s5 + $0xc8] sm:$0xf]
        %v2630 = vld [vmem:[%s5 + $0xcc] sm:$0xf]
        %v2631 = vld [vmem:[%s5 + $0xd0] sm:$0xf]
        %v2632 = vld [vmem:[%s5 + $0xd4] sm:$0xf]
        %v2633 = vld [vmem:[%s5 + $0xd8] sm:$0xf]
        %v2634 = vld [vmem:[%s5 + $0xdc] sm:$0xf]
        %v2635 = vld [vmem:[%s5 + $0xe0] sm:$0xf]
        %v2636 = vld [vmem:[%s5 + $0xe4] sm:$0xf]
        %v2637 = vld [vmem:[%s5 + $0xe8] sm:$0xf]
        %v2638 = vld [vmem:[%s5 + $0xec] sm:$0xf]
        %v2639 = vld [vmem:[%s5 + $0xf0] sm:$0xf]
        %v2640 = vld [vmem:[%s5 + $0xf4] sm:$0xf]
        %v2641 = vld [vmem:[%s5 + $0xf8] sm:$0xf]
        %v2642 = vld [vmem:[%s5 + $0xfc] sm:$0xf]
        %v2643 = vld [vmem:[%s5 + $0x100] sm:$0xf]
        %v2644 = vld [vmem:[%s5 + $0x104] sm:$0xf]
        %v2645 = vld [vmem:[%s5 + $0x108] sm:$0xf]
        %v2646 = vld [vmem:[%s5 + $0x10c] sm:$0xf]
        %v2647 = vld [vmem:[%s5 + $0x110] sm:$0xf]
        %v2648 = vld [vmem:[%s5 + $0x114] sm:$0xf]
        %v2649 = vld [vmem:[%s5 + $0x118] sm:$0xf]
        %v2650 = vld [vmem:[%s5 + $0x11c] sm:$0xf]
        %v2651 = vld [vmem:[%s5 + $0x120] sm:$0xf]
        %v2652 = vld [vmem:[%s5 + $0x124] sm:$0xf]
        %v2653 = vld [vmem:[%s5 + $0x128] sm:$0xf]
        %v2654 = vld [vmem:[%s5 + $0x12c] sm:$0xf]
        %v2655 = vld [vmem:[%s5 + $0x130] sm:$0xf]
        %v2656 = vld [vmem:[%s5 + $0x134] sm:$0xf]
        %v2657 = vld [vmem:[%s5 + $0x138] sm:$0xf]
        %v2658 = vld [vmem:[%s5 + $0x13c] sm:$0xf]
        %v2659 = vld [vmem:[%s5 + $0x140] sm:$0xf]
        %v2660 = vld [vmem:[%s5 + $0x144] sm:$0xf]
        %v2661 = vld [vmem:[%s5 + $0x148] sm:$0xf]
        %v2662 = vld [vmem:[%s5 + $0x14c] sm:$0xf]
        %v2663 = vld [vmem:[%s5 + $0x150] sm:$0xf]
        %v2664 = vld [vmem:[%s5 + $0x154] sm:$0xf]
        %v2665 = vld [vmem:[%s5 + $0x158] sm:$0xf]
        %v2666 = vld [vmem:[%s5 + $0x15c] sm:$0xf]
        %v2667 = vld [vmem:[%s5 + $0x160] sm:$0xf]
        %v2668 = vld [vmem:[%s5 + $0x164] sm:$0xf]
        %v2669 = vld [vmem:[%s5 + $0x168] sm:$0xf]
        %v2670 = vld [vmem:[%s5 + $0x16c] sm:$0xf]
        %v2671 = vld [vmem:[%s5 + $0x170] sm:$0xf]
        %v2672 = vld [vmem:[%s5 + $0x174] sm:$0xf]
        %v2673 = vld [vmem:[%s5 + $0x178] sm:$0xf]
        %v2674 = vld [vmem:[%s5 + $0x17c] sm:$0xf]
        %v2675 = vld [vmem:[%s5 + $0x180] sm:$0xf]
        %v2676 = vld [vmem:[%s5 + $0x184] sm:$0xf]
        %v2677 = vld [vmem:[%s5 + $0x188] sm:$0xf]
        %v2678 = vld [vmem:[%s5 + $0x18c] sm:$0xf]
        %v2679 = vld [vmem:[%s5 + $0x190] sm:$0xf]
        %v2680 = vld [vmem:[%s5 + $0x194] sm:$0xf]
        %v2681 = vld [vmem:[%s5 + $0x198] sm:$0xf]
        %v2682 = vld [vmem:[%s5 + $0x19c] sm:$0xf]
        %v2683 = vld [vmem:[%s5 + $0x1a0] sm:$0xf]
        %v2684 = vld [vmem:[%s5 + $0x1a4] sm:$0xf]
        %v2685 = vld [vmem:[%s5 + $0x1a8] sm:$0xf]
        %v2686 = vld [vmem:[%s5 + $0x1ac] sm:$0xf]
        %v2687 = vld [vmem:[%s5 + $0x1b0] sm:$0xf]
        %v2688 = vld [vmem:[%s5 + $0x1b4] sm:$0xf]
        %v2689 = vld [vmem:[%s5 + $0x1b8] sm:$0xf]
        %v2690 = vld [vmem:[%s5 + $0x1bc] sm:$0xf]
        %v2691 = vld [vmem:[%s5 + $0x1c0] sm:$0xf]
        %v2692 = vld [vmem:[%s5 + $0x1c4] sm:$0xf]
        %v2693 = vld [vmem:[%s5 + $0x1c8] sm:$0xf]
        %v2694 = vld [vmem:[%s5 + $0x1cc] sm:$0xf]
        %v2695 = vld [vmem:[%s5 + $0x1d0] sm:$0xf]
        %v2696 = vld [vmem:[%s5 + $0x1d4] sm:$0xf]
        %v2697 = vld [vmem:[%s5 + $0x1d8] sm:$0xf]
        %v2698 = vld [vmem:[%s5 + $0x1dc] sm:$0xf]
        %v2699 = vld [vmem:[%s5 + $0x1e0] sm:$0xf]
        %v2700 = vld [vmem:[%s5 + $0x1e4] sm:$0xf]
        %v2701 = vld [vmem:[%s5 + $0x1e8] sm:$0xf]
        %v2702 = vld [vmem:[%s5 + $0x1ec] sm:$0xf]
        %v2703 = vld [vmem:[%s5 + $0x1f0] sm:$0xf]
        %v2704 = vld [vmem:[%s5 + $0x1f4] sm:$0xf]
        %v2705 = vld [vmem:[%s5 + $0x1f8] sm:$0xf]
        %v2706 = vld [vmem:[%s5 + $0x1fc] sm:$0xf]
        %v2707 = vld [vmem:[%s5 + $0x200] sm:$0xf]
        %v2708 = vld [vmem:[%s5 + $0x204] sm:$0xf]
        %v2709 = vld [vmem:[%s5 + $0x208] sm:$0xf]
        %v2710 = vld [vmem:[%s5 + $0x20c] sm:$0xf]
        %v2711 = vld [vmem:[%s5 + $0x210] sm:$0xf]
        %v2712 = vld [vmem:[%s5 + $0x214] sm:$0xf]
        %v2713 = vld [vmem:[%s5 + $0x218] sm:$0xf]
        %v2714 = vld [vmem:[%s5 + $0x21c] sm:$0xf]
        %v2715 = vld [vmem:[%s5 + $0x220] sm:$0xf]
        %v2716 = vld [vmem:[%s5 + $0x224] sm:$0xf]
        %v2717 = vld [vmem:[%s5 + $0x228] sm:$0xf]
        %v2718 = vld [vmem:[%s5 + $0x22c] sm:$0xf]
        %v2719 = vld [vmem:[%s5 + $0x230] sm:$0xf]
        %v2720 = vld [vmem:[%s5 + $0x234] sm:$0xf]
        %v2721 = vld [vmem:[%s5 + $0x238] sm:$0xf]
        %v2722 = vld [vmem:[%s5 + $0x23c] sm:$0xf]
        %v2723 = vld [vmem:[%s5 + $0x240] sm:$0xf]
        %v2724 = vld [vmem:[%s5 + $0x244] sm:$0xf]
        %v2725 = vld [vmem:[%s5 + $0x248] sm:$0xf]
        %v2726 = vld [vmem:[%s5 + $0x24c] sm:$0xf]
        %v2727 = vld [vmem:[%s5 + $0x250] sm:$0xf]
        %v2728 = vld [vmem:[%s5 + $0x254] sm:$0xf]
        %v2729 = vld [vmem:[%s5 + $0x258] sm:$0xf]
        %v2730 = vld [vmem:[%s5 + $0x25c] sm:$0xf]
        %v2731 = vld [vmem:[%s5 + $0x260] sm:$0xf]
        %v2732 = vld [vmem:[%s5 + $0x264] sm:$0xf]
        %v2733 = vld [vmem:[%s5 + $0x268] sm:$0xf]
        %v2734 = vld [vmem:[%s5 + $0x26c] sm:$0xf]
        %v2735 = vld [vmem:[%s5 + $0x270] sm:$0xf]
        %v2736 = vld [vmem:[%s5 + $0x274] sm:$0xf]
        %v2737 = vld [vmem:[%s5 + $0x278] sm:$0xf]
        %v2738 = vld [vmem:[%s5 + $0x27c] sm:$0xf]
        %v2739 = vld [vmem:[%s5 + $0x280] sm:$0xf]
        %v2740 = vld [vmem:[%s5 + $0x284] sm:$0xf]
        %v2741 = vld [vmem:[%s5 + $0x288] sm:$0xf]
        %v2742 = vld [vmem:[%s5 + $0x28c] sm:$0xf]
        %v2743 = vld [vmem:[%s5 + $0x290] sm:$0xf]
        %v2744 = vld [vmem:[%s5 + $0x294] sm:$0xf]
        %v2745 = vld [vmem:[%s5 + $0x298] sm:$0xf]
        %v2746 = vld [vmem:[%s5 + $0x29c] sm:$0xf]
        %v2747 = vld [vmem:[%s5 + $0x2a0] sm:$0xf]
        %v2748 = vld [vmem:[%s5 + $0x2a4] sm:$0xf]
        %v2749 = vld [vmem:[%s5 + $0x2a8] sm:$0xf]
        %v2750 = vld [vmem:[%s5 + $0x2ac] sm:$0xf]
        %v2751 = vld [vmem:[%s5 + $0x2b0] sm:$0xf]
        %v2752 = vld [vmem:[%s5 + $0x2b4] sm:$0xf]
        %v2753 = vld [vmem:[%s5 + $0x2b8] sm:$0xf]
        %v2754 = vld [vmem:[%s5 + $0x2bc] sm:$0xf]
        %v2755 = vld [vmem:[%s5 + $0x2c0] sm:$0xf]
        %v2756 = vld [vmem:[%s5 + $0x2c4] sm:$0xf]
        %v2757 = vld [vmem:[%s5 + $0x2c8] sm:$0xf]
        %v2758 = vld [vmem:[%s5 + $0x2cc] sm:$0xf]
        %v2759 = vld [vmem:[%s5 + $0x2d0] sm:$0xf]
        %v2760 = vld [vmem:[%s5 + $0x2d4] sm:$0xf]
        %v2761 = vld [vmem:[%s5 + $0x2d8] sm:$0xf]
        %v2762 = vld [vmem:[%s5 + $0x2dc] sm:$0xf]
        %v2763 = vld [vmem:[%s5 + $0x2e0] sm:$0xf]
        %v2764 = vld [vmem:[%s5 + $0x2e4] sm:$0xf]
        %v2765 = vld [vmem:[%s5 + $0x2e8] sm:$0xf]
        %v2766 = vld [vmem:[%s5 + $0x2ec] sm:$0xf]
        %v2767 = vld [vmem:[%s5 + $0x2f0] sm:$0xf]
        %v2768 = vld [vmem:[%s5 + $0x2f4] sm:$0xf]
        %v2769 = vld [vmem:[%s5 + $0x2f8] sm:$0xf]
        %v2770 = vld [vmem:[%s5 + $0x2fc] sm:$0xf]
        %v2771 = vld [vmem:[%s5 + $0x300] sm:$0xf]
        %v2772 = vld [vmem:[%s5 + $0x304] sm:$0xf]
        %v2773 = vld [vmem:[%s5 + $0x308] sm:$0xf]
        %v2774 = vld [vmem:[%s5 + $0x30c] sm:$0xf]
        %v2775 = vld [vmem:[%s5 + $0x310] sm:$0xf]
        %v2776 = vld [vmem:[%s5 + $0x314] sm:$0xf]
        %v2777 = vld [vmem:[%s5 + $0x318] sm:$0xf]
        %v2778 = vld [vmem:[%s5 + $0x31c] sm:$0xf]
        %v2779 = vld [vmem:[%s5 + $0x320] sm:$0xf]
        %v2780 = vld [vmem:[%s5 + $0x324] sm:$0xf]
        %v2781 = vld [vmem:[%s5 + $0x328] sm:$0xf]
        %v2782 = vld [vmem:[%s5 + $0x32c] sm:$0xf]
        %v2783 = vld [vmem:[%s5 + $0x330] sm:$0xf]
        %v2784 = vld [vmem:[%s5 + $0x334] sm:$0xf]
        %v2785 = vld [vmem:[%s5 + $0x338] sm:$0xf]
        %v2786 = vld [vmem:[%s5 + $0x33c] sm:$0xf]
        %v2787 = vld [vmem:[%s5 + $0x340] sm:$0xf]
        %v2788 = vld [vmem:[%s5 + $0x344] sm:$0xf]
        %v2789 = vld [vmem:[%s5 + $0x348] sm:$0xf]
        %v2790 = vld [vmem:[%s5 + $0x34c] sm:$0xf]
        %v2791 = vld [vmem:[%s5 + $0x350] sm:$0xf]
        %v2792 = vld [vmem:[%s5 + $0x354] sm:$0xf]
        %v2793 = vld [vmem:[%s5 + $0x358] sm:$0xf]
        %v2794 = vld [vmem:[%s5 + $0x35c] sm:$0xf]
        %v2795 = vld [vmem:[%s5 + $0x360] sm:$0xf]
        %v2796 = vld [vmem:[%s5 + $0x364] sm:$0xf]
        %v2797 = vld [vmem:[%s5 + $0x368] sm:$0xf]
        %v2798 = vld [vmem:[%s5 + $0x36c] sm:$0xf]
        %v2799 = vld [vmem:[%s5 + $0x370] sm:$0xf]
        %v2800 = vld [vmem:[%s5 + $0x374] sm:$0xf]
        %v2801 = vld [vmem:[%s5 + $0x378] sm:$0xf]
        %v2802 = vld [vmem:[%s5 + $0x37c] sm:$0xf]
        %v2803 = vld [vmem:[%s5 + $0x380] sm:$0xf]
        %v2804 = vld [vmem:[%s5 + $0x384] sm:$0xf]
        %v2805 = vld [vmem:[%s5 + $0x388] sm:$0xf]
        %v2806 = vld [vmem:[%s5 + $0x38c] sm:$0xf]
        %v2807 = vld [vmem:[%s5 + $0x390] sm:$0xf]
        %v2808 = vld [vmem:[%s5 + $0x394] sm:$0xf]
        %v2809 = vld [vmem:[%s5 + $0x398] sm:$0xf]
        %v2810 = vld [vmem:[%s5 + $0x39c] sm:$0xf]
        %v2811 = vld [vmem:[%s5 + $0x3a0] sm:$0xf]
        %v2812 = vld [vmem:[%s5 + $0x3a4] sm:$0xf]
        %v2813 = vld [vmem:[%s5 + $0x3a8] sm:$0xf]
        %v2814 = vld [vmem:[%s5 + $0x3ac] sm:$0xf]
        %v2815 = vld [vmem:[%s5 + $0x3b0] sm:$0xf]
        %v2816 = vld [vmem:[%s5 + $0x3b4] sm:$0xf]
        %v2817 = vld [vmem:[%s5 + $0x3b8] sm:$0xf]
        %v2818 = vld [vmem:[%s5 + $0x3bc] sm:$0xf]
        %v2819 = vld [vmem:[%s5 + $0x3c0] sm:$0xf]
        %v2820 = vld [vmem:[%s5 + $0x3c4] sm:$0xf]
        %v2821 = vld [vmem:[%s5 + $0x3c8] sm:$0xf]
        %v2822 = vld [vmem:[%s5 + $0x3cc] sm:$0xf]
        %v2823 = vld [vmem:[%s5 + $0x3d0] sm:$0xf]
        %v2824 = vld [vmem:[%s5 + $0x3d4] sm:$0xf]
        %v2825 = vld [vmem:[%s5 + $0x3d8] sm:$0xf]
        %v2826 = vld [vmem:[%s5 + $0x3dc] sm:$0xf]
        %v2827 = vld [vmem:[%s5 + $0x3e0] sm:$0xf]
        %v2828 = vld [vmem:[%s5 + $0x3e4] sm:$0xf]
        %v2829 = vld [vmem:[%s5 + $0x3e8] sm:$0xf]
        %v2830 = vld [vmem:[%s5 + $0x3ec] sm:$0xf]
        %v2831 = vld [vmem:[%s5 + $0x3f0] sm:$0xf]
        %v2832 = vld [vmem:[%s5 + $0x3f4] sm:$0xf]
        %v2833 = vld [vmem:[%s5 + $0x3f8] sm:$0xf]
        %v2834 = vld [vmem:[%s5 + $0x3fc] sm:$0xf]
        %v2835 = vld [vmem:[%s5 + $0x400] sm:$0xf]
        %v2836 = vld [vmem:[%s5 + $0x404] sm:$0xf]
        %v2837 = vld [vmem:[%s5 + $0x408] sm:$0xf]
        %v2838 = vld [vmem:[%s5 + $0x40c] sm:$0xf]
        %v2839 = vld [vmem:[%s5 + $0x410] sm:$0xf]
        %v2840 = vld [vmem:[%s5 + $0x414] sm:$0xf]
        %v2841 = vld [vmem:[%s5 + $0x418] sm:$0xf]
        %v2842 = vld [vmem:[%s5 + $0x41c] sm:$0xf]
        %v2843 = vld [vmem:[%s5 + $0x420] sm:$0xf]
        %v2844 = vld [vmem:[%s5 + $0x424] sm:$0xf]
        %v2845 = vld [vmem:[%s5 + $0x428] sm:$0xf]
        %v2846 = vld [vmem:[%s5 + $0x42c] sm:$0xf]
        %v2847 = vld [vmem:[%s5 + $0x430] sm:$0xf]
        %v2848 = vld [vmem:[%s5 + $0x434] sm:$0xf]
        %v2849 = vld [vmem:[%s5 + $0x438] sm:$0xf]
        %v2850 = vld [vmem:[%s5 + $0x43c] sm:$0xf]
        %v2851 = vld [vmem:[%s5 + $0x440] sm:$0xf]
        %v2852 = vld [vmem:[%s5 + $0x444] sm:$0xf]
        %v2853 = vld [vmem:[%s5 + $0x448] sm:$0xf]
        %v2854 = vld [vmem:[%s5 + $0x44c] sm:$0xf]
        %v2855 = vld [vmem:[%s5 + $0x450] sm:$0xf]
        %v2856 = vld [vmem:[%s5 + $0x454] sm:$0xf]
        %v2857 = vld [vmem:[%s5 + $0x458] sm:$0xf]
        %v2858 = vld [vmem:[%s5 + $0x45c] sm:$0xf]
        %v2859 = vld [vmem:[%s5 + $0x460] sm:$0xf]
        %v2860 = vld [vmem:[%s5 + $0x464] sm:$0xf]
        %v2861 = vld [vmem:[%s5 + $0x468] sm:$0xf]
        %v2862 = vld [vmem:[%s5 + $0x46c] sm:$0xf]
        %v2863 = vld [vmem:[%s5 + $0x470] sm:$0xf]
        %v2864 = vld [vmem:[%s5 + $0x474] sm:$0xf]
        %v2865 = vld [vmem:[%s5 + $0x478] sm:$0xf]
        %v2866 = vld [vmem:[%s5 + $0x47c] sm:$0xf]
        %v2867 = vld [vmem:[%s5 + $0x480] sm:$0xf]
        %v2868 = vld [vmem:[%s5 + $0x484] sm:$0xf]
        %v2869 = vld [vmem:[%s5 + $0x488] sm:$0xf]
        %v2870 = vld [vmem:[%s5 + $0x48c] sm:$0xf]
        %v2871 = vld [vmem:[%s5 + $0x490] sm:$0xf]
        %v2872 = vld [vmem:[%s5 + $0x494] sm:$0xf]
        %v2873 = vld [vmem:[%s5 + $0x498] sm:$0xf]
        %v2874 = vld [vmem:[%s5 + $0x49c] sm:$0xf]
        %v2875 = vld [vmem:[%s5 + $0x4a0] sm:$0xf]
        %v2876 = vld [vmem:[%s5 + $0x4a4] sm:$0xf]
        %v2877 = vld [vmem:[%s5 + $0x4a8] sm:$0xf]
        %v2878 = vld [vmem:[%s5 + $0x4ac] sm:$0xf]
        %v2879 = vld [vmem:[%s5 + $0x4b0] sm:$0xf]
        %v2880 = vld [vmem:[%s5 + $0x4b4] sm:$0xf]
        %v2881 = vld [vmem:[%s5 + $0x4b8] sm:$0xf]
        %v2882 = vld [vmem:[%s5 + $0x4bc] sm:$0xf]
        %v2883 = vld [vmem:[%s5 + $0x4c0] sm:$0xf]
        %v2884 = vld [vmem:[%s5 + $0x4c4] sm:$0xf]
        %v2885 = vld [vmem:[%s5 + $0x4c8] sm:$0xf]
        %v2886 = vld [vmem:[%s5 + $0x4cc] sm:$0xf]
        %v2887 = vld [vmem:[%s5 + $0x4d0] sm:$0xf]
        %v2888 = vld [vmem:[%s5 + $0x4d4] sm:$0xf]
        %v2889 = vld [vmem:[%s5 + $0x4d8] sm:$0xf]
        %v2890 = vld [vmem:[%s5 + $0x4dc] sm:$0xf]
        %v2891 = vld [vmem:[%s5 + $0x4e0] sm:$0xf]
        %v2892 = vld [vmem:[%s5 + $0x4e4] sm:$0xf]
        %v2893 = vld [vmem:[%s5 + $0x4e8] sm:$0xf]
        %v2894 = vld [vmem:[%s5 + $0x4ec] sm:$0xf]
        %v2895 = vld [vmem:[%s5 + $0x4f0] sm:$0xf]
        %v2896 = vld [vmem:[%s5 + $0x4f4] sm:$0xf]
        %v2897 = vld [vmem:[%s5 + $0x4f8] sm:$0xf]
        %v2898 = vld [vmem:[%s5 + $0x4fc] sm:$0xf]
        %v2899 = vld [vmem:[%s5 + $0x500] sm:$0xf]
        %v2900 = vld [vmem:[%s5 + $0x504] sm:$0xf]
        %v2901 = vld [vmem:[%s5 + $0x508] sm:$0xf]
        %v2902 = vld [vmem:[%s5 + $0x50c] sm:$0xf]
        %v2903 = vld [vmem:[%s5 + $0x510] sm:$0xf]
        %v2904 = vld [vmem:[%s5 + $0x514] sm:$0xf]
        %v2905 = vld [vmem:[%s5 + $0x518] sm:$0xf]
        %v2906 = vld [vmem:[%s5 + $0x51c] sm:$0xf]
        %v2907 = vld [vmem:[%s5 + $0x520] sm:$0xf]
        %v2908 = vld [vmem:[%s5 + $0x524] sm:$0xf]
        %v2909 = vld [vmem:[%s5 + $0x528] sm:$0xf]
        %v2910 = vld [vmem:[%s5 + $0x52c] sm:$0xf]
        %v2911 = vld [vmem:[%s5 + $0x530] sm:$0xf]
        %v2912 = vld [vmem:[%s5 + $0x534] sm:$0xf]
        %v2913 = vld [vmem:[%s5 + $0x538] sm:$0xf]
        %v2914 = vld [vmem:[%s5 + $0x53c] sm:$0xf]
        %v2915 = vld [vmem:[%s5 + $0x540] sm:$0xf]
        %v2916 = vld [vmem:[%s5 + $0x544] sm:$0xf]
        %v2917 = vld [vmem:[%s5 + $0x548] sm:$0xf]
        %v2918 = vld [vmem:[%s5 + $0x54c] sm:$0xf]
        %v2919 = vld [vmem:[%s5 + $0x550] sm:$0xf]
        %v2920 = vld [vmem:[%s5 + $0x554] sm:$0xf]
        %v2921 = vld [vmem:[%s5 + $0x558] sm:$0xf]
        %v2922 = vld [vmem:[%s5 + $0x55c] sm:$0xf]
        %v2923 = vld [vmem:[%s5 + $0x560] sm:$0xf]
        %v2924 = vld [vmem:[%s5 + $0x564] sm:$0xf]
        %v2925 = vld [vmem:[%s5 + $0x568] sm:$0xf]
        %v2926 = vld [vmem:[%s5 + $0x56c] sm:$0xf]
        %v2927 = vld [vmem:[%s5 + $0x570] sm:$0xf]
        %v2928 = vld [vmem:[%s5 + $0x574] sm:$0xf]
        %v2929 = vld [vmem:[%s5 + $0x578] sm:$0xf]
        %v2930 = vld [vmem:[%s5 + $0x57c] sm:$0xf]
        %v2931 = vld [vmem:[%s5 + $0x580] sm:$0xf]
        %v2932 = vld [vmem:[%s5 + $0x584] sm:$0xf]
        %v2933 = vld [vmem:[%s5 + $0x588] sm:$0xf]
        %v2934 = vld [vmem:[%s5 + $0x58c] sm:$0xf]
        %v2935 = vld [vmem:[%s5 + $0x590] sm:$0xf]
        %v2936 = vld [vmem:[%s5 + $0x594] sm:$0xf]
        %v2937 = vld [vmem:[%s5 + $0x598] sm:$0xf]
        %v2938 = vld [vmem:[%s5 + $0x59c] sm:$0xf]
        %v2939 = vld [vmem:[%s5 + $0x5a0] sm:$0xf]
        %v2940 = vld [vmem:[%s5 + $0x5a4] sm:$0xf]
        %v2941 = vld [vmem:[%s5 + $0x5a8] sm:$0xf]
        %v2942 = vld [vmem:[%s5 + $0x5ac] sm:$0xf]
        %v2943 = vld [vmem:[%s5 + $0x5b0] sm:$0xf]
        %v2944 = vld [vmem:[%s5 + $0x5b4] sm:$0xf]
        %v2945 = vld [vmem:[%s5 + $0x5b8] sm:$0xf]
        %v2946 = vld [vmem:[%s5 + $0x5bc] sm:$0xf]
        %v2947 = vld [vmem:[%s5 + $0x5c0] sm:$0xf]
        %v2948 = vld [vmem:[%s5 + $0x5c4] sm:$0xf]
        %v2949 = vld [vmem:[%s5 + $0x5c8] sm:$0xf]
        %v2950 = vld [vmem:[%s5 + $0x5cc] sm:$0xf]
        %v2951 = vld [vmem:[%s5 + $0x5d0] sm:$0xf]
        %v2952 = vld [vmem:[%s5 + $0x5d4] sm:$0xf]
        %v2953 = vld [vmem:[%s5 + $0x5d8] sm:$0xf]
        %v2954 = vld [vmem:[%s5 + $0x5dc] sm:$0xf]
        %v2955 = vld [vmem:[%s5 + $0x5e0] sm:$0xf]
        %v2956 = vld [vmem:[%s5 + $0x5e4] sm:$0xf]
        %v2957 = vld [vmem:[%s5 + $0x5e8] sm:$0xf]
        %v2958 = vld [vmem:[%s5 + $0x5ec] sm:$0xf]
        %v2959 = vld [vmem:[%s5 + $0x5f0] sm:$0xf]
        %v2960 = vld [vmem:[%s5 + $0x5f4] sm:$0xf]
        %v2961 = vld [vmem:[%s5 + $0x5f8] sm:$0xf]
        %v2962 = vld [vmem:[%s5 + $0x5fc] sm:$0xf]
        %v2963 = vld [vmem:[%s5 + $0x600] sm:$0xf]
        %v2964 = vld [vmem:[%s5 + $0x604] sm:$0xf]
        %v2965 = vld [vmem:[%s5 + $0x608] sm:$0xf]
        %v2966 = vld [vmem:[%s5 + $0x60c] sm:$0xf]
        %v2967 = vld [vmem:[%s5 + $0x610] sm:$0xf]
        %v2968 = vld [vmem:[%s5 + $0x614] sm:$0xf]
        %v2969 = vld [vmem:[%s5 + $0x618] sm:$0xf]
        %v2970 = vld [vmem:[%s5 + $0x61c] sm:$0xf]
        %v2971 = vld [vmem:[%s5 + $0x620] sm:$0xf]
        %v2972 = vld [vmem:[%s5 + $0x624] sm:$0xf]
        %v2973 = vld [vmem:[%s5 + $0x628] sm:$0xf]
        %v2974 = vld [vmem:[%s5 + $0x62c] sm:$0xf]
        %v2975 = vld [vmem:[%s5 + $0x630] sm:$0xf]
        %v2976 = vld [vmem:[%s5 + $0x634] sm:$0xf]
        %v2977 = vld [vmem:[%s5 + $0x638] sm:$0xf]
        %v2978 = vld [vmem:[%s5 + $0x63c] sm:$0xf]
        %v2979 = vld [vmem:[%s5 + $0x640] sm:$0xf]
        %v2980 = vld [vmem:[%s5 + $0x644] sm:$0xf]
        %v2981 = vld [vmem:[%s5 + $0x648] sm:$0xf]
        %v2982 = vld [vmem:[%s5 + $0x64c] sm:$0xf]
        %v2983 = vld [vmem:[%s5 + $0x650] sm:$0xf]
        %v2984 = vld [vmem:[%s5 + $0x654] sm:$0xf]
        %v2985 = vld [vmem:[%s5 + $0x658] sm:$0xf]
        %v2986 = vld [vmem:[%s5 + $0x65c] sm:$0xf]
        %v2987 = vld [vmem:[%s5 + $0x660] sm:$0xf]
        %v2988 = vld [vmem:[%s5 + $0x664] sm:$0xf]
        %v2989 = vld [vmem:[%s5 + $0x668] sm:$0xf]
        %v2990 = vld [vmem:[%s5 + $0x66c] sm:$0xf]
        %v2991 = vld [vmem:[%s5 + $0x670] sm:$0xf]
        %v2992 = vld [vmem:[%s5 + $0x674] sm:$0xf]
        %v2993 = vld [vmem:[%s5 + $0x678] sm:$0xf]
        %v2994 = vld [vmem:[%s5 + $0x67c] sm:$0xf]
        %v2995 = vld [vmem:[%s5 + $0x680] sm:$0xf]
        %v2996 = vld [vmem:[%s5 + $0x684] sm:$0xf]
        %v2997 = vld [vmem:[%s5 + $0x688] sm:$0xf]
        %v2998 = vld [vmem:[%s5 + $0x68c] sm:$0xf]
        %v2999 = vld [vmem:[%s5 + $0x690] sm:$0xf]
        %v3000 = vld [vmem:[%s5 + $0x694] sm:$0xf]
        %v3001 = vld [vmem:[%s5 + $0x698] sm:$0xf]
        %v3002 = vld [vmem:[%s5 + $0x69c] sm:$0xf]
        %v3003 = vld [vmem:[%s5 + $0x6a0] sm:$0xf]
        %v3004 = vld [vmem:[%s5 + $0x6a4] sm:$0xf]
        %v3005 = vld [vmem:[%s5 + $0x6a8] sm:$0xf]
        %v3006 = vld [vmem:[%s5 + $0x6ac] sm:$0xf]
        %v3007 = vld [vmem:[%s5 + $0x6b0] sm:$0xf]
        %v3008 = vld [vmem:[%s5 + $0x6b4] sm:$0xf]
        %v3009 = vld [vmem:[%s5 + $0x6b8] sm:$0xf]
        %v3010 = vld [vmem:[%s5 + $0x6bc] sm:$0xf]
        %v3011 = vld [vmem:[%s5 + $0x6c0] sm:$0xf]
        %v3012 = vld [vmem:[%s5 + $0x6c4] sm:$0xf]
        %v3013 = vld [vmem:[%s5 + $0x6c8] sm:$0xf]
        %v3014 = vld [vmem:[%s5 + $0x6cc] sm:$0xf]
        %v3015 = vld [vmem:[%s5 + $0x6d0] sm:$0xf]
        %v3016 = vld [vmem:[%s5 + $0x6d4] sm:$0xf]
        %v3017 = vld [vmem:[%s5 + $0x6d8] sm:$0xf]
        %v3018 = vld [vmem:[%s5 + $0x6dc] sm:$0xf]
        %v3019 = vld [vmem:[%s5 + $0x6e0] sm:$0xf]
        %v3020 = vld [vmem:[%s5 + $0x6e4] sm:$0xf]
        %v3021 = vld [vmem:[%s5 + $0x6e8] sm:$0xf]
        %v3022 = vld [vmem:[%s5 + $0x6ec] sm:$0xf]
        %v3023 = vld [vmem:[%s5 + $0x6f0] sm:$0xf]
        %v3024 = vld [vmem:[%s5 + $0x6f4] sm:$0xf]
        %v3025 = vld [vmem:[%s5 + $0x6f8] sm:$0xf]
        %v3026 = vld [vmem:[%s5 + $0x6fc] sm:$0xf]
        %v3027 = vld [vmem:[%s5 + $0x700] sm:$0xf]
        %v3028 = vld [vmem:[%s5 + $0x704] sm:$0xf]
        %v3029 = vld [vmem:[%s5 + $0x708] sm:$0xf]
        %v3030 = vld [vmem:[%s5 + $0x70c] sm:$0xf]
        %v3031 = vld [vmem:[%s5 + $0x710] sm:$0xf]
        %v3032 = vld [vmem:[%s5 + $0x714] sm:$0xf]
        %v3033 = vld [vmem:[%s5 + $0x718] sm:$0xf]
        %v3034 = vld [vmem:[%s5 + $0x71c] sm:$0xf]
        %v3035 = vld [vmem:[%s5 + $0x720] sm:$0xf]
        %v3036 = vld [vmem:[%s5 + $0x724] sm:$0xf]
        %v3037 = vld [vmem:[%s5 + $0x728] sm:$0xf]
        %v3038 = vld [vmem:[%s5 + $0x72c] sm:$0xf]
        %v3039 = vld [vmem:[%s5 + $0x730] sm:$0xf]
        %v3040 = vld [vmem:[%s5 + $0x734] sm:$0xf]
        %v3041 = vld [vmem:[%s5 + $0x738] sm:$0xf]
        %v3042 = vld [vmem:[%s5 + $0x73c] sm:$0xf]
        %v3043 = vld [vmem:[%s5 + $0x740] sm:$0xf]
        %v3044 = vld [vmem:[%s5 + $0x744] sm:$0xf]
        %v3045 = vld [vmem:[%s5 + $0x748] sm:$0xf]
        %v3046 = vld [vmem:[%s5 + $0x74c] sm:$0xf]
        %v3047 = vld [vmem:[%s5 + $0x750] sm:$0xf]
        %v3048 = vld [vmem:[%s5 + $0x754] sm:$0xf]
        %v3049 = vld [vmem:[%s5 + $0x758] sm:$0xf]
        %v3050 = vld [vmem:[%s5 + $0x75c] sm:$0xf]
        %v3051 = vld [vmem:[%s5 + $0x760] sm:$0xf]
        %v3052 = vld [vmem:[%s5 + $0x764] sm:$0xf]
        %v3053 = vld [vmem:[%s5 + $0x768] sm:$0xf]
        %v3054 = vld [vmem:[%s5 + $0x76c] sm:$0xf]
        %v3055 = vld [vmem:[%s5 + $0x770] sm:$0xf]
        %v3056 = vld [vmem:[%s5 + $0x774] sm:$0xf]
        %v3057 = vld [vmem:[%s5 + $0x778] sm:$0xf]
        %v3058 = vld [vmem:[%s5 + $0x77c] sm:$0xf]
        %v3059 = vld [vmem:[%s5 + $0x780] sm:$0xf]
        %v3060 = vld [vmem:[%s5 + $0x784] sm:$0xf]
        %v3061 = vld [vmem:[%s5 + $0x788] sm:$0xf]
        %v3062 = vld [vmem:[%s5 + $0x78c] sm:$0xf]
        %v3063 = vld [vmem:[%s5 + $0x790] sm:$0xf]
        %v3064 = vld [vmem:[%s5 + $0x794] sm:$0xf]
        %v3065 = vld [vmem:[%s5 + $0x798] sm:$0xf]
        %v3066 = vld [vmem:[%s5 + $0x79c] sm:$0xf]
        %v3067 = vld [vmem:[%s5 + $0x7a0] sm:$0xf]
        %v3068 = vld [vmem:[%s5 + $0x7a4] sm:$0xf]
        %v3069 = vld [vmem:[%s5 + $0x7a8] sm:$0xf]
        %v3070 = vld [vmem:[%s5 + $0x7ac] sm:$0xf]
        %v3071 = vld [vmem:[%s5 + $0x7b0] sm:$0xf]
        %v3072 = vld [vmem:[%s5 + $0x7b4] sm:$0xf]
        %v3073 = vld [vmem:[%s5 + $0x7b8] sm:$0xf]
        %v3074 = vld [vmem:[%s5 + $0x7bc] sm:$0xf]
        %v3075 = vld [vmem:[%s5 + $0x7c0] sm:$0xf]
        %v3076 = vld [vmem:[%s5 + $0x7c4] sm:$0xf]
        %v3077 = vld [vmem:[%s5 + $0x7c8] sm:$0xf]
        %v3078 = vld [vmem:[%s5 + $0x7cc] sm:$0xf]
        %v3079 = vld [vmem:[%s5 + $0x7d0] sm:$0xf]
        %v3080 = vld [vmem:[%s5 + $0x7d4] sm:$0xf]
        %v3081 = vld [vmem:[%s5 + $0x7d8] sm:$0xf]
        %v3082 = vld [vmem:[%s5 + $0x7dc] sm:$0xf]
        %v3083 = vld [vmem:[%s5 + $0x7e0] sm:$0xf]
        %v3084 = vld [vmem:[%s5 + $0x7e4] sm:$0xf]
        %v3085 = vld [vmem:[%s5 + $0x7e8] sm:$0xf]
        %v3086 = vld [vmem:[%s5 + $0x7ec] sm:$0xf]
        %v3087 = vld [vmem:[%s5 + $0x7f0] sm:$0xf]
        %v3088 = vld [vmem:[%s5 + $0x7f4] sm:$0xf]
        %v3089 = vld [vmem:[%s5 + $0x7f8] sm:$0xf]
        %v3090 = vld [vmem:[%s5 + $0x7fc] sm:$0xf]
        %v3091 = vld [vmem:[%s5 + $0x800] sm:$0xf]
        %v3092 = vld [vmem:[%s5 + $0x804] sm:$0xf]
        %v3093 = vld [vmem:[%s5 + $0x808] sm:$0xf]
        %v3094 = vld [vmem:[%s5 + $0x80c] sm:$0xf]
        %v3095 = vld [vmem:[%s5 + $0x810] sm:$0xf]
        %v3096 = vld [vmem:[%s5 + $0x814] sm:$0xf]
        %v3097 = vld [vmem:[%s5 + $0x818] sm:$0xf]
        %v3098 = vld [vmem:[%s5 + $0x81c] sm:$0xf]
        %v3099 = vld [vmem:[%s5 + $0x820] sm:$0xf]
        %v3100 = vld [vmem:[%s5 + $0x824] sm:$0xf]
        %v3101 = vld [vmem:[%s5 + $0x828] sm:$0xf]
        %v3102 = vld [vmem:[%s5 + $0x82c] sm:$0xf]
        %v3103 = vld [vmem:[%s5 + $0x830] sm:$0xf]
        %v3104 = vld [vmem:[%s5 + $0x834] sm:$0xf]
        %v3105 = vld [vmem:[%s5 + $0x838] sm:$0xf]
        %v3106 = vld [vmem:[%s5 + $0x83c] sm:$0xf]
        %v3107 = vld [vmem:[%s5 + $0x840] sm:$0xf]
        %v3108 = vld [vmem:[%s5 + $0x844] sm:$0xf]
        %v3109 = vld [vmem:[%s5 + $0x848] sm:$0xf]
        %v3110 = vld [vmem:[%s5 + $0x84c] sm:$0xf]
        %v3111 = vld [vmem:[%s5 + $0x850] sm:$0xf]
        %v3112 = vld [vmem:[%s5 + $0x854] sm:$0xf]
        %v3113 = vld [vmem:[%s5 + $0x858] sm:$0xf]
        %v3114 = vld [vmem:[%s5 + $0x85c] sm:$0xf]
        %v3115 = vld [vmem:[%s5 + $0x860] sm:$0xf]
        %v3116 = vld [vmem:[%s5 + $0x864] sm:$0xf]
        %v3117 = vld [vmem:[%s5 + $0x868] sm:$0xf]
        %v3118 = vld [vmem:[%s5 + $0x86c] sm:$0xf]
        %v3119 = vld [vmem:[%s5 + $0x870] sm:$0xf]
        %v3120 = vld [vmem:[%s5 + $0x874] sm:$0xf]
        %v3121 = vld [vmem:[%s5 + $0x878] sm:$0xf]
        %v3122 = vld [vmem:[%s5 + $0x87c] sm:$0xf]
        %v3123 = vld [vmem:[%s5 + $0x880] sm:$0xf]
        %v3124 = vld [vmem:[%s5 + $0x884] sm:$0xf]
        %v3125 = vld [vmem:[%s5 + $0x888] sm:$0xf]
        %v3126 = vld [vmem:[%s5 + $0x88c] sm:$0xf]
        %v3127 = vld [vmem:[%s5 + $0x890] sm:$0xf]
        %v3128 = vld [vmem:[%s5 + $0x894] sm:$0xf]
        %v3129 = vld [vmem:[%s5 + $0x898] sm:$0xf]
        %v3130 = vld [vmem:[%s5 + $0x89c] sm:$0xf]
        %v3131 = vld [vmem:[%s5 + $0x8a0] sm:$0xf]
        %v3132 = vld [vmem:[%s5 + $0x8a4] sm:$0xf]
        %v3133 = vld [vmem:[%s5 + $0x8a8] sm:$0xf]
        %v3134 = vld [vmem:[%s5 + $0x8ac] sm:$0xf]
        %v3135 = vld [vmem:[%s5 + $0x8b0] sm:$0xf]
        %v3136 = vld [vmem:[%s5 + $0x8b4] sm:$0xf]
        %v3137 = vld [vmem:[%s5 + $0x8b8] sm:$0xf]
        %v3138 = vld [vmem:[%s5 + $0x8bc] sm:$0xf]
        %v3139 = vld [vmem:[%s5 + $0x8c0] sm:$0xf]
        %v3140 = vld [vmem:[%s5 + $0x8c4] sm:$0xf]
        %v3141 = vld [vmem:[%s5 + $0x8c8] sm:$0xf]
        %v3142 = vld [vmem:[%s5 + $0x8cc] sm:$0xf]
        %v3143 = vld [vmem:[%s5 + $0x8d0] sm:$0xf]
        %v3144 = vld [vmem:[%s5 + $0x8d4] sm:$0xf]
        %v3145 = vld [vmem:[%s5 + $0x8d8] sm:$0xf]
        %v3146 = vld [vmem:[%s5 + $0x8dc] sm:$0xf]
        %v3147 = vld [vmem:[%s5 + $0x8e0] sm:$0xf]
        %v3148 = vld [vmem:[%s5 + $0x8e4] sm:$0xf]
        %v3149 = vld [vmem:[%s5 + $0x8e8] sm:$0xf]
        %v3150 = vld [vmem:[%s5 + $0x8ec] sm:$0xf]
        %v3151 = vld [vmem:[%s5 + $0x8f0] sm:$0xf]
        %v3152 = vld [vmem:[%s5 + $0x8f4] sm:$0xf]
        %v3153 = vld [vmem:[%s5 + $0x8f8] sm:$0xf]
        %v3154 = vld [vmem:[%s5 + $0x8fc] sm:$0xf]
        %v3155 = vld [vmem:[%s6] sm:$0x1]
        %v3157 = vlaneseq
        %v3158 = vshrl.u32 %v3157, 7
        %v3159 = vsub.s32 0, %v3158
        %v3160 = vrot.slane %v3155, %v3159
        %v3738 = vunpack.c.l.b16 %v2579
        %v3739 = vunpack.c.l.b16 %v2580
        %v3740 = vunpack.c.l.b16 %v2581
        %v3741 = vunpack.c.l.b16 %v2582
        %v3742 = vunpack.c.l.b16 %v2583
        %v3743 = vunpack.c.l.b16 %v2584
        %v3744 = vunpack.c.l.b16 %v2585
        %v3745 = vunpack.c.l.b16 %v2586
        %v3746 = vunpack.c.l.b16 %v2587
        %v3747 = vunpack.c.l.b16 %v2588
        %v3748 = vunpack.c.l.b16 %v2589
        %v3749 = vunpack.c.l.b16 %v2590
        %v3750 = vunpack.c.l.b16 %v2591
        %v3751 = vunpack.c.l.b16 %v2592
        %v3752 = vunpack.c.l.b16 %v2593
        %v3753 = vunpack.c.l.b16 %v2594
        %v3754 = vunpack.c.l.b16 %v2595
        %v3755 = vunpack.c.l.b16 %v2596
        %v3756 = vunpack.c.l.b16 %v2597
        %v3757 = vunpack.c.l.b16 %v2598
        %v3758 = vunpack.c.l.b16 %v2599
        %v3759 = vunpack.c.l.b16 %v2600
        %v3760 = vunpack.c.l.b16 %v2601
        %v3761 = vunpack.c.l.b16 %v2602
        %v3762 = vunpack.c.l.b16 %v2603
        %v3763 = vunpack.c.l.b16 %v2604
        %v3764 = vunpack.c.l.b16 %v2605
        %v3765 = vunpack.c.l.b16 %v2606
        %v3766 = vunpack.c.l.b16 %v2607
        %v3767 = vunpack.c.l.b16 %v2608
        %v3768 = vunpack.c.l.b16 %v2609
        %v3769 = vunpack.c.l.b16 %v2610
        %v3770 = vunpack.c.l.b16 %v2611
        %v3771 = vunpack.c.l.b16 %v2612
        %v3772 = vunpack.c.l.b16 %v2613
        %v3773 = vunpack.c.l.b16 %v2614
        %v3774 = vunpack.c.l.b16 %v2615
        %v3775 = vunpack.c.l.b16 %v2616
        %v3776 = vunpack.c.l.b16 %v2617
        %v3777 = vunpack.c.l.b16 %v2618
        %v3778 = vunpack.c.l.b16 %v2619
        %v3779 = vunpack.c.l.b16 %v2620
        %v3780 = vunpack.c.l.b16 %v2621
        %v3781 = vunpack.c.l.b16 %v2622
        %v3782 = vunpack.c.l.b16 %v2623
        %v3783 = vunpack.c.l.b16 %v2624
        %v3784 = vunpack.c.l.b16 %v2625
        %v3785 = vunpack.c.l.b16 %v2626
        %v3786 = vunpack.c.l.b16 %v2627
        %v3787 = vunpack.c.l.b16 %v2628
        %v3788 = vunpack.c.l.b16 %v2629
        %v3789 = vunpack.c.l.b16 %v2630
        %v3790 = vunpack.c.l.b16 %v2631
        %v3791 = vunpack.c.l.b16 %v2632
        %v3792 = vunpack.c.l.b16 %v2633
        %v3793 = vunpack.c.l.b16 %v2634
        %v3794 = vunpack.c.l.b16 %v2635
        %v3795 = vunpack.c.l.b16 %v2636
        %v3796 = vunpack.c.l.b16 %v2637
        %v3797 = vunpack.c.l.b16 %v2638
        %v3798 = vunpack.c.l.b16 %v2639
        %v3799 = vunpack.c.l.b16 %v2640
        %v3800 = vunpack.c.l.b16 %v2641
        %v3801 = vunpack.c.l.b16 %v2642
        %v3802 = vunpack.c.l.b16 %v2643
        %v3803 = vunpack.c.l.b16 %v2644
        %v3804 = vunpack.c.l.b16 %v2645
        %v3805 = vunpack.c.l.b16 %v2646
        %v3806 = vunpack.c.l.b16 %v2647
        %v3807 = vunpack.c.l.b16 %v2648
        %v3808 = vunpack.c.l.b16 %v2649
        %v3809 = vunpack.c.l.b16 %v2650
        %v3810 = vunpack.c.l.b16 %v2651
        %v3811 = vunpack.c.l.b16 %v2652
        %v3812 = vunpack.c.l.b16 %v2653
        %v3813 = vunpack.c.l.b16 %v2654
        %v3814 = vunpack.c.l.b16 %v2655
        %v3815 = vunpack.c.l.b16 %v2656
        %v3816 = vunpack.c.l.b16 %v2657
        %v3817 = vunpack.c.l.b16 %v2658
        %v3818 = vunpack.c.l.b16 %v2659
        %v3819 = vunpack.c.l.b16 %v2660
        %v3820 = vunpack.c.l.b16 %v2661
        %v3821 = vunpack.c.l.b16 %v2662
        %v3822 = vunpack.c.l.b16 %v2663
        %v3823 = vunpack.c.l.b16 %v2664
        %v3824 = vunpack.c.l.b16 %v2665
        %v3825 = vunpack.c.l.b16 %v2666
        %v3826 = vunpack.c.l.b16 %v2667
        %v3827 = vunpack.c.l.b16 %v2668
        %v3828 = vunpack.c.l.b16 %v2669
        %v3829 = vunpack.c.l.b16 %v2670
        %v3830 = vunpack.c.l.b16 %v2671
        %v3831 = vunpack.c.l.b16 %v2672
        %v3832 = vunpack.c.l.b16 %v2673
        %v3833 = vunpack.c.l.b16 %v2674
        %v3834 = vunpack.c.l.b16 %v2675
        %v3835 = vunpack.c.l.b16 %v2676
        %v3836 = vunpack.c.l.b16 %v2677
        %v3837 = vunpack.c.l.b16 %v2678
        %v3838 = vunpack.c.l.b16 %v2679
        %v3839 = vunpack.c.l.b16 %v2680
        %v3840 = vunpack.c.l.b16 %v2681
        %v3841 = vunpack.c.l.b16 %v2682
        %v3842 = vunpack.c.l.b16 %v2683
        %v3843 = vunpack.c.l.b16 %v2684
        %v3844 = vunpack.c.l.b16 %v2685
        %v3845 = vunpack.c.l.b16 %v2686
        %v3846 = vunpack.c.l.b16 %v2687
        %v3847 = vunpack.c.l.b16 %v2688
        %v3848 = vunpack.c.l.b16 %v2689
        %v3849 = vunpack.c.l.b16 %v2690
        %v3850 = vunpack.c.l.b16 %v2691
        %v3851 = vunpack.c.l.b16 %v2692
        %v3852 = vunpack.c.l.b16 %v2693
        %v3853 = vunpack.c.l.b16 %v2694
        %v3854 = vunpack.c.l.b16 %v2695
        %v3855 = vunpack.c.l.b16 %v2696
        %v3856 = vunpack.c.l.b16 %v2697
        %v3857 = vunpack.c.l.b16 %v2698
        %v3858 = vunpack.c.l.b16 %v2699
        %v3859 = vunpack.c.l.b16 %v2700
        %v3860 = vunpack.c.l.b16 %v2701
        %v3861 = vunpack.c.l.b16 %v2702
        %v3862 = vunpack.c.l.b16 %v2703
        %v3863 = vunpack.c.l.b16 %v2704
        %v3864 = vunpack.c.l.b16 %v2705
        %v3865 = vunpack.c.l.b16 %v2706
        %v3866 = vunpack.c.l.b16 %v2707
        %v3867 = vunpack.c.l.b16 %v2708
        %v3868 = vunpack.c.l.b16 %v2709
        %v3869 = vunpack.c.l.b16 %v2710
        %v3870 = vunpack.c.l.b16 %v2711
        %v3871 = vunpack.c.l.b16 %v2712
        %v3872 = vunpack.c.l.b16 %v2713
        %v3873 = vunpack.c.l.b16 %v2714
        %v3874 = vunpack.c.l.b16 %v2715
        %v3875 = vunpack.c.l.b16 %v2716
        %v3876 = vunpack.c.l.b16 %v2717
        %v3877 = vunpack.c.l.b16 %v2718
        %v3878 = vunpack.c.l.b16 %v2719
        %v3879 = vunpack.c.l.b16 %v2720
        %v3880 = vunpack.c.l.b16 %v2721
        %v3881 = vunpack.c.l.b16 %v2722
        %v3882 = vunpack.c.l.b16 %v2723
        %v3883 = vunpack.c.l.b16 %v2724
        %v3884 = vunpack.c.l.b16 %v2725
        %v3885 = vunpack.c.l.b16 %v2726
        %v3886 = vunpack.c.l.b16 %v2727
        %v3887 = vunpack.c.l.b16 %v2728
        %v3888 = vunpack.c.l.b16 %v2729
        %v3889 = vunpack.c.l.b16 %v2730
        %v3890 = vunpack.c.l.b16 %v2731
        %v3891 = vunpack.c.l.b16 %v2732
        %v3892 = vunpack.c.l.b16 %v2733
        %v3893 = vunpack.c.l.b16 %v2734
        %v3894 = vunpack.c.l.b16 %v2735
        %v3895 = vunpack.c.l.b16 %v2736
        %v3896 = vunpack.c.l.b16 %v2737
        %v3897 = vunpack.c.l.b16 %v2738
        %v3898 = vunpack.c.l.b16 %v2739
        %v3899 = vunpack.c.l.b16 %v2740
        %v3900 = vunpack.c.l.b16 %v2741
        %v3901 = vunpack.c.l.b16 %v2742
        %v3902 = vunpack.c.l.b16 %v2743
        %v3903 = vunpack.c.l.b16 %v2744
        %v3904 = vunpack.c.l.b16 %v2745
        %v3905 = vunpack.c.l.b16 %v2746
        %v3906 = vunpack.c.l.b16 %v2747
        %v3907 = vunpack.c.l.b16 %v2748
        %v3908 = vunpack.c.l.b16 %v2749
        %v3909 = vunpack.c.l.b16 %v2750
        %v3910 = vunpack.c.l.b16 %v2751
        %v3911 = vunpack.c.l.b16 %v2752
        %v3912 = vunpack.c.l.b16 %v2753
        %v3913 = vunpack.c.l.b16 %v2754
        %v3914 = vunpack.c.l.b16 %v2755
        %v3915 = vunpack.c.l.b16 %v2756
        %v3916 = vunpack.c.l.b16 %v2757
        %v3917 = vunpack.c.l.b16 %v2758
        %v3918 = vunpack.c.l.b16 %v2759
        %v3919 = vunpack.c.l.b16 %v2760
        %v3920 = vunpack.c.l.b16 %v2761
        %v3921 = vunpack.c.l.b16 %v2762
        %v3922 = vunpack.c.l.b16 %v2763
        %v3923 = vunpack.c.l.b16 %v2764
        %v3924 = vunpack.c.l.b16 %v2765
        %v3925 = vunpack.c.l.b16 %v2766
        %v3926 = vunpack.c.l.b16 %v2767
        %v3927 = vunpack.c.l.b16 %v2768
        %v3928 = vunpack.c.l.b16 %v2769
        %v3929 = vunpack.c.l.b16 %v2770
        %v3930 = vunpack.c.l.b16 %v2771
        %v3931 = vunpack.c.l.b16 %v2772
        %v3932 = vunpack.c.l.b16 %v2773
        %v3933 = vunpack.c.l.b16 %v2774
        %v3934 = vunpack.c.l.b16 %v2775
        %v3935 = vunpack.c.l.b16 %v2776
        %v3936 = vunpack.c.l.b16 %v2777
        %v3937 = vunpack.c.l.b16 %v2778
        %v3938 = vunpack.c.l.b16 %v2779
        %v3939 = vunpack.c.l.b16 %v2780
        %v3940 = vunpack.c.l.b16 %v2781
        %v3941 = vunpack.c.l.b16 %v2782
        %v3942 = vunpack.c.l.b16 %v2783
        %v3943 = vunpack.c.l.b16 %v2784
        %v3944 = vunpack.c.l.b16 %v2785
        %v3945 = vunpack.c.l.b16 %v2786
        %v3946 = vunpack.c.l.b16 %v2787
        %v3947 = vunpack.c.l.b16 %v2788
        %v3948 = vunpack.c.l.b16 %v2789
        %v3949 = vunpack.c.l.b16 %v2790
        %v3950 = vunpack.c.l.b16 %v2791
        %v3951 = vunpack.c.l.b16 %v2792
        %v3952 = vunpack.c.l.b16 %v2793
        %v3953 = vunpack.c.l.b16 %v2794
        %v3954 = vunpack.c.l.b16 %v2795
        %v3955 = vunpack.c.l.b16 %v2796
        %v3956 = vunpack.c.l.b16 %v2797
        %v3957 = vunpack.c.l.b16 %v2798
        %v3958 = vunpack.c.l.b16 %v2799
        %v3959 = vunpack.c.l.b16 %v2800
        %v3960 = vunpack.c.l.b16 %v2801
        %v3961 = vunpack.c.l.b16 %v2802
        %v3962 = vunpack.c.l.b16 %v2803
        %v3963 = vunpack.c.l.b16 %v2804
        %v3964 = vunpack.c.l.b16 %v2805
        %v3965 = vunpack.c.l.b16 %v2806
        %v3966 = vunpack.c.l.b16 %v2807
        %v3967 = vunpack.c.l.b16 %v2808
        %v3968 = vunpack.c.l.b16 %v2809
        %v3969 = vunpack.c.l.b16 %v2810
        %v3970 = vunpack.c.l.b16 %v2811
        %v3971 = vunpack.c.l.b16 %v2812
        %v3972 = vunpack.c.l.b16 %v2813
        %v3973 = vunpack.c.l.b16 %v2814
        %v3974 = vunpack.c.l.b16 %v2815
        %v3975 = vunpack.c.l.b16 %v2816
        %v3976 = vunpack.c.l.b16 %v2817
        %v3977 = vunpack.c.l.b16 %v2818
        %v3978 = vunpack.c.l.b16 %v2819
        %v3979 = vunpack.c.l.b16 %v2820
        %v3980 = vunpack.c.l.b16 %v2821
        %v3981 = vunpack.c.l.b16 %v2822
        %v3982 = vunpack.c.l.b16 %v2823
        %v3983 = vunpack.c.l.b16 %v2824
        %v3984 = vunpack.c.l.b16 %v2825
        %v3985 = vunpack.c.l.b16 %v2826
        %v3986 = vunpack.c.l.b16 %v2827
        %v3987 = vunpack.c.l.b16 %v2828
        %v3988 = vunpack.c.l.b16 %v2829
        %v3989 = vunpack.c.l.b16 %v2830
        %v3990 = vunpack.c.l.b16 %v2831
        %v3991 = vunpack.c.l.b16 %v2832
        %v3992 = vunpack.c.l.b16 %v2833
        %v3993 = vunpack.c.l.b16 %v2834
        %v3994 = vunpack.c.l.b16 %v2835
        %v3995 = vunpack.c.l.b16 %v2836
        %v3996 = vunpack.c.l.b16 %v2837
        %v3997 = vunpack.c.l.b16 %v2838
        %v3998 = vunpack.c.l.b16 %v2839
        %v3999 = vunpack.c.l.b16 %v2840
        %v4000 = vunpack.c.l.b16 %v2841
        %v4001 = vunpack.c.l.b16 %v2842
        %v4002 = vunpack.c.l.b16 %v2843
        %v4003 = vunpack.c.l.b16 %v2844
        %v4004 = vunpack.c.l.b16 %v2845
        %v4005 = vunpack.c.l.b16 %v2846
        %v4006 = vunpack.c.l.b16 %v2847
        %v4007 = vunpack.c.l.b16 %v2848
        %v4008 = vunpack.c.l.b16 %v2849
        %v4009 = vunpack.c.l.b16 %v2850
        %v4010 = vunpack.c.l.b16 %v2851
        %v4011 = vunpack.c.l.b16 %v2852
        %v4012 = vunpack.c.l.b16 %v2853
        %v4013 = vunpack.c.l.b16 %v2854
        %v4014 = vunpack.c.l.b16 %v2855
        %v4015 = vunpack.c.l.b16 %v2856
        %v4016 = vunpack.c.l.b16 %v2857
        %v4017 = vunpack.c.l.b16 %v2858
        %v4018 = vunpack.c.l.b16 %v2859
        %v4019 = vunpack.c.l.b16 %v2860
        %v4020 = vunpack.c.l.b16 %v2861
        %v4021 = vunpack.c.l.b16 %v2862
        %v4022 = vunpack.c.l.b16 %v2863
        %v4023 = vunpack.c.l.b16 %v2864
        %v4024 = vunpack.c.l.b16 %v2865
        %v4025 = vunpack.c.l.b16 %v2866
        %v4026 = vunpack.c.l.b16 %v2867
        %v4027 = vunpack.c.l.b16 %v2868
        %v4028 = vunpack.c.l.b16 %v2869
        %v4029 = vunpack.c.l.b16 %v2870
        %v4030 = vunpack.c.l.b16 %v2871
        %v4031 = vunpack.c.l.b16 %v2872
        %v4032 = vunpack.c.l.b16 %v2873
        %v4033 = vunpack.c.l.b16 %v2874
        %v4034 = vunpack.c.l.b16 %v2875
        %v4035 = vunpack.c.l.b16 %v2876
        %v4036 = vunpack.c.l.b16 %v2877
        %v4037 = vunpack.c.l.b16 %v2878
        %v4038 = vunpack.c.l.b16 %v2879
        %v4039 = vunpack.c.l.b16 %v2880
        %v4040 = vunpack.c.l.b16 %v2881
        %v4041 = vunpack.c.l.b16 %v2882
        %v4042 = vunpack.c.l.b16 %v2883
        %v4043 = vunpack.c.l.b16 %v2884
        %v4044 = vunpack.c.l.b16 %v2885
        %v4045 = vunpack.c.l.b16 %v2886
        %v4046 = vunpack.c.l.b16 %v2887
        %v4047 = vunpack.c.l.b16 %v2888
        %v4048 = vunpack.c.l.b16 %v2889
        %v4049 = vunpack.c.l.b16 %v2890
        %v4050 = vunpack.c.l.b16 %v2891
        %v4051 = vunpack.c.l.b16 %v2892
        %v4052 = vunpack.c.l.b16 %v2893
        %v4053 = vunpack.c.l.b16 %v2894
        %v4054 = vunpack.c.l.b16 %v2895
        %v4055 = vunpack.c.l.b16 %v2896
        %v4056 = vunpack.c.l.b16 %v2897
        %v4057 = vunpack.c.l.b16 %v2898
        %v4058 = vunpack.c.l.b16 %v2899
        %v4059 = vunpack.c.l.b16 %v2900
        %v4060 = vunpack.c.l.b16 %v2901
        %v4061 = vunpack.c.l.b16 %v2902
        %v4062 = vunpack.c.l.b16 %v2903
        %v4063 = vunpack.c.l.b16 %v2904
        %v4064 = vunpack.c.l.b16 %v2905
        %v4065 = vunpack.c.l.b16 %v2906
        %v4066 = vunpack.c.l.b16 %v2907
        %v4067 = vunpack.c.l.b16 %v2908
        %v4068 = vunpack.c.l.b16 %v2909
        %v4069 = vunpack.c.l.b16 %v2910
        %v4070 = vunpack.c.l.b16 %v2911
        %v4071 = vunpack.c.l.b16 %v2912
        %v4072 = vunpack.c.l.b16 %v2913
        %v4073 = vunpack.c.l.b16 %v2914
        %v4074 = vunpack.c.l.b16 %v2915
        %v4075 = vunpack.c.l.b16 %v2916
        %v4076 = vunpack.c.l.b16 %v2917
        %v4077 = vunpack.c.l.b16 %v2918
        %v4078 = vunpack.c.l.b16 %v2919
        %v4079 = vunpack.c.l.b16 %v2920
        %v4080 = vunpack.c.l.b16 %v2921
        %v4081 = vunpack.c.l.b16 %v2922
        %v4082 = vunpack.c.l.b16 %v2923
        %v4083 = vunpack.c.l.b16 %v2924
        %v4084 = vunpack.c.l.b16 %v2925
        %v4085 = vunpack.c.l.b16 %v2926
        %v4086 = vunpack.c.l.b16 %v2927
        %v4087 = vunpack.c.l.b16 %v2928
        %v4088 = vunpack.c.l.b16 %v2929
        %v4089 = vunpack.c.l.b16 %v2930
        %v4090 = vunpack.c.l.b16 %v2931
        %v4091 = vunpack.c.l.b16 %v2932
        %v4092 = vunpack.c.l.b16 %v2933
        %v4093 = vunpack.c.l.b16 %v2934
        %v4094 = vunpack.c.l.b16 %v2935
        %v4095 = vunpack.c.l.b16 %v2936
        %v4096 = vunpack.c.l.b16 %v2937
        %v4097 = vunpack.c.l.b16 %v2938
        %v4098 = vunpack.c.l.b16 %v2939
        %v4099 = vunpack.c.l.b16 %v2940
        %v4100 = vunpack.c.l.b16 %v2941
        %v4101 = vunpack.c.l.b16 %v2942
        %v4102 = vunpack.c.l.b16 %v2943
        %v4103 = vunpack.c.l.b16 %v2944
        %v4104 = vunpack.c.l.b16 %v2945
        %v4105 = vunpack.c.l.b16 %v2946
        %v4106 = vunpack.c.l.b16 %v2947
        %v4107 = vunpack.c.l.b16 %v2948
        %v4108 = vunpack.c.l.b16 %v2949
        %v4109 = vunpack.c.l.b16 %v2950
        %v4110 = vunpack.c.l.b16 %v2951
        %v4111 = vunpack.c.l.b16 %v2952
        %v4112 = vunpack.c.l.b16 %v2953
        %v4113 = vunpack.c.l.b16 %v2954
        %v4114 = vunpack.c.l.b16 %v2955
        %v4115 = vunpack.c.l.b16 %v2956
        %v4116 = vunpack.c.l.b16 %v2957
        %v4117 = vunpack.c.l.b16 %v2958
        %v4118 = vunpack.c.l.b16 %v2959
        %v4119 = vunpack.c.l.b16 %v2960
        %v4120 = vunpack.c.l.b16 %v2961
        %v4121 = vunpack.c.l.b16 %v2962
        %v4122 = vunpack.c.l.b16 %v2963
        %v4123 = vunpack.c.l.b16 %v2964
        %v4124 = vunpack.c.l.b16 %v2965
        %v4125 = vunpack.c.l.b16 %v2966
        %v4126 = vunpack.c.l.b16 %v2967
        %v4127 = vunpack.c.l.b16 %v2968
        %v4128 = vunpack.c.l.b16 %v2969
        %v4129 = vunpack.c.l.b16 %v2970
        %v4130 = vunpack.c.l.b16 %v2971
        %v4131 = vunpack.c.l.b16 %v2972
        %v4132 = vunpack.c.l.b16 %v2973
        %v4133 = vunpack.c.l.b16 %v2974
        %v4134 = vunpack.c.l.b16 %v2975
        %v4135 = vunpack.c.l.b16 %v2976
        %v4136 = vunpack.c.l.b16 %v2977
        %v4137 = vunpack.c.l.b16 %v2978
        %v4138 = vunpack.c.l.b16 %v2979
        %v4139 = vunpack.c.l.b16 %v2980
        %v4140 = vunpack.c.l.b16 %v2981
        %v4141 = vunpack.c.l.b16 %v2982
        %v4142 = vunpack.c.l.b16 %v2983
        %v4143 = vunpack.c.l.b16 %v2984
        %v4144 = vunpack.c.l.b16 %v2985
        %v4145 = vunpack.c.l.b16 %v2986
        %v4146 = vunpack.c.l.b16 %v2987
        %v4147 = vunpack.c.l.b16 %v2988
        %v4148 = vunpack.c.l.b16 %v2989
        %v4149 = vunpack.c.l.b16 %v2990
        %v4150 = vunpack.c.l.b16 %v2991
        %v4151 = vunpack.c.l.b16 %v2992
        %v4152 = vunpack.c.l.b16 %v2993
        %v4153 = vunpack.c.l.b16 %v2994
        %v4154 = vunpack.c.l.b16 %v2995
        %v4155 = vunpack.c.l.b16 %v2996
        %v4156 = vunpack.c.l.b16 %v2997
        %v4157 = vunpack.c.l.b16 %v2998
        %v4158 = vunpack.c.l.b16 %v2999
        %v4159 = vunpack.c.l.b16 %v3000
        %v4160 = vunpack.c.l.b16 %v3001
        %v4161 = vunpack.c.l.b16 %v3002
        %v4162 = vunpack.c.l.b16 %v3003
        %v4163 = vunpack.c.l.b16 %v3004
        %v4164 = vunpack.c.l.b16 %v3005
        %v4165 = vunpack.c.l.b16 %v3006
        %v4166 = vunpack.c.l.b16 %v3007
        %v4167 = vunpack.c.l.b16 %v3008
        %v4168 = vunpack.c.l.b16 %v3009
        %v4169 = vunpack.c.l.b16 %v3010
        %v4170 = vunpack.c.l.b16 %v3011
        %v4171 = vunpack.c.l.b16 %v3012
        %v4172 = vunpack.c.l.b16 %v3013
        %v4173 = vunpack.c.l.b16 %v3014
        %v4174 = vunpack.c.l.b16 %v3015
        %v4175 = vunpack.c.l.b16 %v3016
        %v4176 = vunpack.c.l.b16 %v3017
        %v4177 = vunpack.c.l.b16 %v3018
        %v4178 = vunpack.c.l.b16 %v3019
        %v4179 = vunpack.c.l.b16 %v3020
        %v4180 = vunpack.c.l.b16 %v3021
        %v4181 = vunpack.c.l.b16 %v3022
        %v4182 = vunpack.c.l.b16 %v3023
        %v4183 = vunpack.c.l.b16 %v3024
        %v4184 = vunpack.c.l.b16 %v3025
        %v4185 = vunpack.c.l.b16 %v3026
        %v4186 = vunpack.c.l.b16 %v3027
        %v4187 = vunpack.c.l.b16 %v3028
        %v4188 = vunpack.c.l.b16 %v3029
        %v4189 = vunpack.c.l.b16 %v3030
        %v4190 = vunpack.c.l.b16 %v3031
        %v4191 = vunpack.c.l.b16 %v3032
        %v4192 = vunpack.c.l.b16 %v3033
        %v4193 = vunpack.c.l.b16 %v3034
        %v4194 = vunpack.c.l.b16 %v3035
        %v4195 = vunpack.c.l.b16 %v3036
        %v4196 = vunpack.c.l.b16 %v3037
        %v4197 = vunpack.c.l.b16 %v3038
        %v4198 = vunpack.c.l.b16 %v3039
        %v4199 = vunpack.c.l.b16 %v3040
        %v4200 = vunpack.c.l.b16 %v3041
        %v4201 = vunpack.c.l.b16 %v3042
        %v4202 = vunpack.c.l.b16 %v3043
        %v4203 = vunpack.c.l.b16 %v3044
        %v4204 = vunpack.c.l.b16 %v3045
        %v4205 = vunpack.c.l.b16 %v3046
        %v4206 = vunpack.c.l.b16 %v3047
        %v4207 = vunpack.c.l.b16 %v3048
        %v4208 = vunpack.c.l.b16 %v3049
        %v4209 = vunpack.c.l.b16 %v3050
        %v4210 = vunpack.c.l.b16 %v3051
        %v4211 = vunpack.c.l.b16 %v3052
        %v4212 = vunpack.c.l.b16 %v3053
        %v4213 = vunpack.c.l.b16 %v3054
        %v4214 = vunpack.c.l.b16 %v3055
        %v4215 = vunpack.c.l.b16 %v3056
        %v4216 = vunpack.c.l.b16 %v3057
        %v4217 = vunpack.c.l.b16 %v3058
        %v4218 = vunpack.c.l.b16 %v3059
        %v4219 = vunpack.c.l.b16 %v3060
        %v4220 = vunpack.c.l.b16 %v3061
        %v4221 = vunpack.c.l.b16 %v3062
        %v4222 = vunpack.c.l.b16 %v3063
        %v4223 = vunpack.c.l.b16 %v3064
        %v4224 = vunpack.c.l.b16 %v3065
        %v4225 = vunpack.c.l.b16 %v3066
        %v4226 = vunpack.c.l.b16 %v3067
        %v4227 = vunpack.c.l.b16 %v3068
        %v4228 = vunpack.c.l.b16 %v3069
        %v4229 = vunpack.c.l.b16 %v3070
        %v4230 = vunpack.c.l.b16 %v3071
        %v4231 = vunpack.c.l.b16 %v3072
        %v4232 = vunpack.c.l.b16 %v3073
        %v4233 = vunpack.c.l.b16 %v3074
        %v4234 = vunpack.c.l.b16 %v3075
        %v4235 = vunpack.c.l.b16 %v3076
        %v4236 = vunpack.c.l.b16 %v3077
        %v4237 = vunpack.c.l.b16 %v3078
        %v4238 = vunpack.c.l.b16 %v3079
        %v4239 = vunpack.c.l.b16 %v3080
        %v4240 = vunpack.c.l.b16 %v3081
        %v4241 = vunpack.c.l.b16 %v3082
        %v4242 = vunpack.c.l.b16 %v3083
        %v4243 = vunpack.c.l.b16 %v3084
        %v4244 = vunpack.c.l.b16 %v3085
        %v4245 = vunpack.c.l.b16 %v3086
        %v4246 = vunpack.c.l.b16 %v3087
        %v4247 = vunpack.c.l.b16 %v3088
        %v4248 = vunpack.c.l.b16 %v3089
        %v4249 = vunpack.c.l.b16 %v3090
        %v4250 = vunpack.c.l.b16 %v3091
        %v4251 = vunpack.c.l.b16 %v3092
        %v4252 = vunpack.c.l.b16 %v3093
        %v4253 = vunpack.c.l.b16 %v3094
        %v4254 = vunpack.c.l.b16 %v3095
        %v4255 = vunpack.c.l.b16 %v3096
        %v4256 = vunpack.c.l.b16 %v3097
        %v4257 = vunpack.c.l.b16 %v3098
        %v4258 = vunpack.c.l.b16 %v3099
        %v4259 = vunpack.c.l.b16 %v3100
        %v4260 = vunpack.c.l.b16 %v3101
        %v4261 = vunpack.c.l.b16 %v3102
        %v4262 = vunpack.c.l.b16 %v3103
        %v4263 = vunpack.c.l.b16 %v3104
        %v4264 = vunpack.c.l.b16 %v3105
        %v4265 = vunpack.c.l.b16 %v3106
        %v4266 = vunpack.c.l.b16 %v3107
        %v4267 = vunpack.c.l.b16 %v3108
        %v4268 = vunpack.c.l.b16 %v3109
        %v4269 = vunpack.c.l.b16 %v3110
        %v4270 = vunpack.c.l.b16 %v3111
        %v4271 = vunpack.c.l.b16 %v3112
        %v4272 = vunpack.c.l.b16 %v3113
        %v4273 = vunpack.c.l.b16 %v3114
        %v4274 = vunpack.c.l.b16 %v3115
        %v4275 = vunpack.c.l.b16 %v3116
        %v4276 = vunpack.c.l.b16 %v3117
        %v4277 = vunpack.c.l.b16 %v3118
        %v4278 = vunpack.c.l.b16 %v3119
        %v4279 = vunpack.c.l.b16 %v3120
        %v4280 = vunpack.c.l.b16 %v3121
        %v4281 = vunpack.c.l.b16 %v3122
        %v4282 = vunpack.c.l.b16 %v3123
        %v4283 = vunpack.c.l.b16 %v3124
        %v4284 = vunpack.c.l.b16 %v3125
        %v4285 = vunpack.c.l.b16 %v3126
        %v4286 = vunpack.c.l.b16 %v3127
        %v4287 = vunpack.c.l.b16 %v3128
        %v4288 = vunpack.c.l.b16 %v3129
        %v4289 = vunpack.c.l.b16 %v3130
        %v4290 = vunpack.c.l.b16 %v3131
        %v4291 = vunpack.c.l.b16 %v3132
        %v4292 = vunpack.c.l.b16 %v3133
        %v4293 = vunpack.c.l.b16 %v3134
        %v4294 = vunpack.c.l.b16 %v3135
        %v4295 = vunpack.c.l.b16 %v3136
        %v4296 = vunpack.c.l.b16 %v3137
        %v4297 = vunpack.c.l.b16 %v3138
        %v4298 = vunpack.c.l.b16 %v3139
        %v4299 = vunpack.c.l.b16 %v3140
        %v4300 = vunpack.c.l.b16 %v3141
        %v4301 = vunpack.c.l.b16 %v3142
        %v4302 = vunpack.c.l.b16 %v3143
        %v4303 = vunpack.c.l.b16 %v3144
        %v4304 = vunpack.c.l.b16 %v3145
        %v4305 = vunpack.c.l.b16 %v3146
        %v4306 = vunpack.c.l.b16 %v3147
        %v4307 = vunpack.c.l.b16 %v3148
        %v4308 = vunpack.c.l.b16 %v3149
        %v4309 = vunpack.c.l.b16 %v3150
        %v4310 = vunpack.c.l.b16 %v3151
        %v4311 = vunpack.c.l.b16 %v3152
        %v4312 = vunpack.c.l.b16 %v3153
        %v4313 = vunpack.c.l.b16 %v3154
        %v4314 = vpack.c.b16 %v3739, %v3738
        %v4315 = vpack.c.b16 %v3741, %v3740
        %v4316 = vpack.c.b16 %v3743, %v3742
        %v4317 = vpack.c.b16 %v3745, %v3744
        %v4318 = vpack.c.b16 %v3747, %v3746
        %v4319 = vpack.c.b16 %v3749, %v3748
        %v4320 = vpack.c.b16 %v3751, %v3750
        %v4321 = vpack.c.b16 %v3753, %v3752
        %v4322 = vpack.c.b16 %v3755, %v3754
        %v4323 = vpack.c.b16 %v3757, %v3756
        %v4324 = vpack.c.b16 %v3759, %v3758
        %v4325 = vpack.c.b16 %v3761, %v3760
        %v4326 = vpack.c.b16 %v3763, %v3762
        %v4327 = vpack.c.b16 %v3765, %v3764
        %v4328 = vpack.c.b16 %v3767, %v3766
        %v4329 = vpack.c.b16 %v3769, %v3768
        %v4330 = vpack.c.b16 %v3771, %v3770
        %v4331 = vpack.c.b16 %v3773, %v3772
        %v4332 = vpack.c.b16 %v3775, %v3774
        %v4333 = vpack.c.b16 %v3777, %v3776
        %v4334 = vpack.c.b16 %v3779, %v3778
        %v4335 = vpack.c.b16 %v3781, %v3780
        %v4336 = vpack.c.b16 %v3783, %v3782
        %v4337 = vpack.c.b16 %v3785, %v3784
        %v4338 = vpack.c.b16 %v3787, %v3786
        %v4339 = vpack.c.b16 %v3789, %v3788
        %v4340 = vpack.c.b16 %v3791, %v3790
        %v4341 = vpack.c.b16 %v3793, %v3792
        %v4342 = vpack.c.b16 %v3795, %v3794
        %v4343 = vpack.c.b16 %v3797, %v3796
        %v4344 = vpack.c.b16 %v3799, %v3798
        %v4345 = vpack.c.b16 %v3801, %v3800
        %v4346 = vpack.c.b16 %v3803, %v3802
        %v4347 = vpack.c.b16 %v3805, %v3804
        %v4348 = vpack.c.b16 %v3807, %v3806
        %v4349 = vpack.c.b16 %v3809, %v3808
        %v4350 = vpack.c.b16 %v3811, %v3810
        %v4351 = vpack.c.b16 %v3813, %v3812
        %v4352 = vpack.c.b16 %v3815, %v3814
        %v4353 = vpack.c.b16 %v3817, %v3816
        %v4354 = vpack.c.b16 %v3819, %v3818
        %v4355 = vpack.c.b16 %v3821, %v3820
        %v4356 = vpack.c.b16 %v3823, %v3822
        %v4357 = vpack.c.b16 %v3825, %v3824
        %v4358 = vpack.c.b16 %v3827, %v3826
        %v4359 = vpack.c.b16 %v3829, %v3828
        %v4360 = vpack.c.b16 %v3831, %v3830
        %v4361 = vpack.c.b16 %v3833, %v3832
        %v4362 = vpack.c.b16 %v3835, %v3834
        %v4363 = vpack.c.b16 %v3837, %v3836
        %v4364 = vpack.c.b16 %v3839, %v3838
        %v4365 = vpack.c.b16 %v3841, %v3840
        %v4366 = vpack.c.b16 %v3843, %v3842
        %v4367 = vpack.c.b16 %v3845, %v3844
        %v4368 = vpack.c.b16 %v3847, %v3846
        %v4369 = vpack.c.b16 %v3849, %v3848
        %v4370 = vpack.c.b16 %v3851, %v3850
        %v4371 = vpack.c.b16 %v3853, %v3852
        %v4372 = vpack.c.b16 %v3855, %v3854
        %v4373 = vpack.c.b16 %v3857, %v3856
        %v4374 = vpack.c.b16 %v3859, %v3858
        %v4375 = vpack.c.b16 %v3861, %v3860
        %v4376 = vpack.c.b16 %v3863, %v3862
        %v4377 = vpack.c.b16 %v3865, %v3864
        %v4378 = vpack.c.b16 %v3867, %v3866
        %v4379 = vpack.c.b16 %v3869, %v3868
        %v4380 = vpack.c.b16 %v3871, %v3870
        %v4381 = vpack.c.b16 %v3873, %v3872
        %v4382 = vpack.c.b16 %v3875, %v3874
        %v4383 = vpack.c.b16 %v3877, %v3876
        %v4384 = vpack.c.b16 %v3879, %v3878
        %v4385 = vpack.c.b16 %v3881, %v3880
        %v4386 = vpack.c.b16 %v3883, %v3882
        %v4387 = vpack.c.b16 %v3885, %v3884
        %v4388 = vpack.c.b16 %v3887, %v3886
        %v4389 = vpack.c.b16 %v3889, %v3888
        %v4390 = vpack.c.b16 %v3891, %v3890
        %v4391 = vpack.c.b16 %v3893, %v3892
        %v4392 = vpack.c.b16 %v3895, %v3894
        %v4393 = vpack.c.b16 %v3897, %v3896
        %v4394 = vpack.c.b16 %v3899, %v3898
        %v4395 = vpack.c.b16 %v3901, %v3900
        %v4396 = vpack.c.b16 %v3903, %v3902
        %v4397 = vpack.c.b16 %v3905, %v3904
        %v4398 = vpack.c.b16 %v3907, %v3906
        %v4399 = vpack.c.b16 %v3909, %v3908
        %v4400 = vpack.c.b16 %v3911, %v3910
        %v4401 = vpack.c.b16 %v3913, %v3912
        %v4402 = vpack.c.b16 %v3915, %v3914
        %v4403 = vpack.c.b16 %v3917, %v3916
        %v4404 = vpack.c.b16 %v3919, %v3918
        %v4405 = vpack.c.b16 %v3921, %v3920
        %v4406 = vpack.c.b16 %v3923, %v3922
        %v4407 = vpack.c.b16 %v3925, %v3924
        %v4408 = vpack.c.b16 %v3927, %v3926
        %v4409 = vpack.c.b16 %v3929, %v3928
        %v4410 = vpack.c.b16 %v3931, %v3930
        %v4411 = vpack.c.b16 %v3933, %v3932
        %v4412 = vpack.c.b16 %v3935, %v3934
        %v4413 = vpack.c.b16 %v3937, %v3936
        %v4414 = vpack.c.b16 %v3939, %v3938
        %v4415 = vpack.c.b16 %v3941, %v3940
        %v4416 = vpack.c.b16 %v3943, %v3942
        %v4417 = vpack.c.b16 %v3945, %v3944
        %v4418 = vpack.c.b16 %v3947, %v3946
        %v4419 = vpack.c.b16 %v3949, %v3948
        %v4420 = vpack.c.b16 %v3951, %v3950
        %v4421 = vpack.c.b16 %v3953, %v3952
        %v4422 = vpack.c.b16 %v3955, %v3954
        %v4423 = vpack.c.b16 %v3957, %v3956
        %v4424 = vpack.c.b16 %v3959, %v3958
        %v4425 = vpack.c.b16 %v3961, %v3960
        %v4426 = vpack.c.b16 %v3963, %v3962
        %v4427 = vpack.c.b16 %v3965, %v3964
        %v4428 = vpack.c.b16 %v3967, %v3966
        %v4429 = vpack.c.b16 %v3969, %v3968
        %v4430 = vpack.c.b16 %v3971, %v3970
        %v4431 = vpack.c.b16 %v3973, %v3972
        %v4432 = vpack.c.b16 %v3975, %v3974
        %v4433 = vpack.c.b16 %v3977, %v3976
        %v4434 = vpack.c.b16 %v3979, %v3978
        %v4435 = vpack.c.b16 %v3981, %v3980
        %v4436 = vpack.c.b16 %v3983, %v3982
        %v4437 = vpack.c.b16 %v3985, %v3984
        %v4438 = vpack.c.b16 %v3987, %v3986
        %v4439 = vpack.c.b16 %v3989, %v3988
        %v4440 = vpack.c.b16 %v3991, %v3990
        %v4441 = vpack.c.b16 %v3993, %v3992
        %v4442 = vpack.c.b16 %v3995, %v3994
        %v4443 = vpack.c.b16 %v3997, %v3996
        %v4444 = vpack.c.b16 %v3999, %v3998
        %v4445 = vpack.c.b16 %v4001, %v4000
        %v4446 = vpack.c.b16 %v4003, %v4002
        %v4447 = vpack.c.b16 %v4005, %v4004
        %v4448 = vpack.c.b16 %v4007, %v4006
        %v4449 = vpack.c.b16 %v4009, %v4008
        %v4450 = vpack.c.b16 %v4011, %v4010
        %v4451 = vpack.c.b16 %v4013, %v4012
        %v4452 = vpack.c.b16 %v4015, %v4014
        %v4453 = vpack.c.b16 %v4017, %v4016
        %v4454 = vpack.c.b16 %v4019, %v4018
        %v4455 = vpack.c.b16 %v4021, %v4020
        %v4456 = vpack.c.b16 %v4023, %v4022
        %v4457 = vpack.c.b16 %v4025, %v4024
        %v4458 = vpack.c.b16 %v4027, %v4026
        %v4459 = vpack.c.b16 %v4029, %v4028
        %v4460 = vpack.c.b16 %v4031, %v4030
        %v4461 = vpack.c.b16 %v4033, %v4032
        %v4462 = vpack.c.b16 %v4035, %v4034
        %v4463 = vpack.c.b16 %v4037, %v4036
        %v4464 = vpack.c.b16 %v4039, %v4038
        %v4465 = vpack.c.b16 %v4041, %v4040
        %v4466 = vpack.c.b16 %v4043, %v4042
        %v4467 = vpack.c.b16 %v4045, %v4044
        %v4468 = vpack.c.b16 %v4047, %v4046
        %v4469 = vpack.c.b16 %v4049, %v4048
        %v4470 = vpack.c.b16 %v4051, %v4050
        %v4471 = vpack.c.b16 %v4053, %v4052
        %v4472 = vpack.c.b16 %v4055, %v4054
        %v4473 = vpack.c.b16 %v4057, %v4056
        %v4474 = vpack.c.b16 %v4059, %v4058
        %v4475 = vpack.c.b16 %v4061, %v4060
        %v4476 = vpack.c.b16 %v4063, %v4062
        %v4477 = vpack.c.b16 %v4065, %v4064
        %v4478 = vpack.c.b16 %v4067, %v4066
        %v4479 = vpack.c.b16 %v4069, %v4068
        %v4480 = vpack.c.b16 %v4071, %v4070
        %v4481 = vpack.c.b16 %v4073, %v4072
        %v4482 = vpack.c.b16 %v4075, %v4074
        %v4483 = vpack.c.b16 %v4077, %v4076
        %v4484 = vpack.c.b16 %v4079, %v4078
        %v4485 = vpack.c.b16 %v4081, %v4080
        %v4486 = vpack.c.b16 %v4083, %v4082
        %v4487 = vpack.c.b16 %v4085, %v4084
        %v4488 = vpack.c.b16 %v4087, %v4086
        %v4489 = vpack.c.b16 %v4089, %v4088
        %v4490 = vpack.c.b16 %v4091, %v4090
        %v4491 = vpack.c.b16 %v4093, %v4092
        %v4492 = vpack.c.b16 %v4095, %v4094
        %v4493 = vpack.c.b16 %v4097, %v4096
        %v4494 = vpack.c.b16 %v4099, %v4098
        %v4495 = vpack.c.b16 %v4101, %v4100
        %v4496 = vpack.c.b16 %v4103, %v4102
        %v4497 = vpack.c.b16 %v4105, %v4104
        %v4498 = vpack.c.b16 %v4107, %v4106
        %v4499 = vpack.c.b16 %v4109, %v4108
        %v4500 = vpack.c.b16 %v4111, %v4110
        %v4501 = vpack.c.b16 %v4113, %v4112
        %v4502 = vpack.c.b16 %v4115, %v4114
        %v4503 = vpack.c.b16 %v4117, %v4116
        %v4504 = vpack.c.b16 %v4119, %v4118
        %v4505 = vpack.c.b16 %v4121, %v4120
        %v4506 = vpack.c.b16 %v4123, %v4122
        %v4507 = vpack.c.b16 %v4125, %v4124
        %v4508 = vpack.c.b16 %v4127, %v4126
        %v4509 = vpack.c.b16 %v4129, %v4128
        %v4510 = vpack.c.b16 %v4131, %v4130
        %v4511 = vpack.c.b16 %v4133, %v4132
        %v4512 = vpack.c.b16 %v4135, %v4134
        %v4513 = vpack.c.b16 %v4137, %v4136
        %v4514 = vpack.c.b16 %v4139, %v4138
        %v4515 = vpack.c.b16 %v4141, %v4140
        %v4516 = vpack.c.b16 %v4143, %v4142
        %v4517 = vpack.c.b16 %v4145, %v4144
        %v4518 = vpack.c.b16 %v4147, %v4146
        %v4519 = vpack.c.b16 %v4149, %v4148
        %v4520 = vpack.c.b16 %v4151, %v4150
        %v4521 = vpack.c.b16 %v4153, %v4152
        %v4522 = vpack.c.b16 %v4155, %v4154
        %v4523 = vpack.c.b16 %v4157, %v4156
        %v4524 = vpack.c.b16 %v4159, %v4158
        %v4525 = vpack.c.b16 %v4161, %v4160
        %v4526 = vpack.c.b16 %v4163, %v4162
        %v4527 = vpack.c.b16 %v4165, %v4164
        %v4528 = vpack.c.b16 %v4167, %v4166
        %v4529 = vpack.c.b16 %v4169, %v4168
        %v4530 = vpack.c.b16 %v4171, %v4170
        %v4531 = vpack.c.b16 %v4173, %v4172
        %v4532 = vpack.c.b16 %v4175, %v4174
        %v4533 = vpack.c.b16 %v4177, %v4176
        %v4534 = vpack.c.b16 %v4179, %v4178
        %v4535 = vpack.c.b16 %v4181, %v4180
        %v4536 = vpack.c.b16 %v4183, %v4182
        %v4537 = vpack.c.b16 %v4185, %v4184
        %v4538 = vpack.c.b16 %v4187, %v4186
        %v4539 = vpack.c.b16 %v4189, %v4188
        %v4540 = vpack.c.b16 %v4191, %v4190
        %v4541 = vpack.c.b16 %v4193, %v4192
        %v4542 = vpack.c.b16 %v4195, %v4194
        %v4543 = vpack.c.b16 %v4197, %v4196
        %v4544 = vpack.c.b16 %v4199, %v4198
        %v4545 = vpack.c.b16 %v4201, %v4200
        %v4546 = vpack.c.b16 %v4203, %v4202
        %v4547 = vpack.c.b16 %v4205, %v4204
        %v4548 = vpack.c.b16 %v4207, %v4206
        %v4549 = vpack.c.b16 %v4209, %v4208
        %v4550 = vpack.c.b16 %v4211, %v4210
        %v4551 = vpack.c.b16 %v4213, %v4212
        %v4552 = vpack.c.b16 %v4215, %v4214
        %v4553 = vpack.c.b16 %v4217, %v4216
        %v4554 = vpack.c.b16 %v4219, %v4218
        %v4555 = vpack.c.b16 %v4221, %v4220
        %v4556 = vpack.c.b16 %v4223, %v4222
        %v4557 = vpack.c.b16 %v4225, %v4224
        %v4558 = vpack.c.b16 %v4227, %v4226
        %v4559 = vpack.c.b16 %v4229, %v4228
        %v4560 = vpack.c.b16 %v4231, %v4230
        %v4561 = vpack.c.b16 %v4233, %v4232
        %v4562 = vpack.c.b16 %v4235, %v4234
        %v4563 = vpack.c.b16 %v4237, %v4236
        %v4564 = vpack.c.b16 %v4239, %v4238
        %v4565 = vpack.c.b16 %v4241, %v4240
        %v4566 = vpack.c.b16 %v4243, %v4242
        %v4567 = vpack.c.b16 %v4245, %v4244
        %v4568 = vpack.c.b16 %v4247, %v4246
        %v4569 = vpack.c.b16 %v4249, %v4248
        %v4570 = vpack.c.b16 %v4251, %v4250
        %v4571 = vpack.c.b16 %v4253, %v4252
        %v4572 = vpack.c.b16 %v4255, %v4254
        %v4573 = vpack.c.b16 %v4257, %v4256
        %v4574 = vpack.c.b16 %v4259, %v4258
        %v4575 = vpack.c.b16 %v4261, %v4260
        %v4576 = vpack.c.b16 %v4263, %v4262
        %v4577 = vpack.c.b16 %v4265, %v4264
        %v4578 = vpack.c.b16 %v4267, %v4266
        %v4579 = vpack.c.b16 %v4269, %v4268
        %v4580 = vpack.c.b16 %v4271, %v4270
        %v4581 = vpack.c.b16 %v4273, %v4272
        %v4582 = vpack.c.b16 %v4275, %v4274
        %v4583 = vpack.c.b16 %v4277, %v4276
        %v4584 = vpack.c.b16 %v4279, %v4278
        %v4585 = vpack.c.b16 %v4281, %v4280
        %v4586 = vpack.c.b16 %v4283, %v4282
        %v4587 = vpack.c.b16 %v4285, %v4284
        %v4588 = vpack.c.b16 %v4287, %v4286
        %v4589 = vpack.c.b16 %v4289, %v4288
        %v4590 = vpack.c.b16 %v4291, %v4290
        %v4591 = vpack.c.b16 %v4293, %v4292
        %v4592 = vpack.c.b16 %v4295, %v4294
        %v4593 = vpack.c.b16 %v4297, %v4296
        %v4594 = vpack.c.b16 %v4299, %v4298
        %v4595 = vpack.c.b16 %v4301, %v4300
        %v4596 = vpack.c.b16 %v4303, %v4302
        %v4597 = vpack.c.b16 %v4305, %v4304
        %v4598 = vpack.c.b16 %v4307, %v4306
        %v4599 = vpack.c.b16 %v4309, %v4308
        %v4600 = vpack.c.b16 %v4311, %v4310
        %v4601 = vpack.c.b16 %v4313, %v4312
        %4890 = vmatprep.subr.bf16.mxu0 0
        %4891 = vmatpush1.bf16.msra.mxu0 %v4314
        %4892 = vmatprep.subr.bf16.mxu0 0
        %4893 = vmatpush1.bf16.msra.mxu0 %v4315
        %4894 = vmatprep.subr.bf16.mxu0 0
        %4895 = vmatpush1.bf16.msra.mxu0 %v4316
        %4896 = vmatprep.subr.bf16.mxu0 0
        %4897 = vmatpush1.bf16.msra.mxu0 %v4317
        %4898 = vmatprep.subr.bf16.mxu0 0
        %4899 = vmatpush1.bf16.msra.mxu0 %v4318
        %4900 = vmatprep.subr.bf16.mxu0 0
        %4901 = vmatpush1.bf16.msra.mxu0 %v4319
        %4902 = vmatprep.subr.bf16.mxu0 0
        %4903 = vmatpush1.bf16.msra.mxu0 %v4320
        %4904 = vmatprep.subr.bf16.mxu0 0
        %4905 = vmatpush1.bf16.msra.mxu0 %v4321
        %4906 = vmatprep.subr.bf16.mxu0 0
        %4907 = vmatpush1.bf16.msra.mxu0 %v4322
        %4908 = vmatprep.subr.bf16.mxu0 0
        %4909 = vmatpush1.bf16.msra.mxu0 %v4323
        %4910 = vmatprep.subr.bf16.mxu0 0
        %4911 = vmatpush1.bf16.msra.mxu0 %v4324
        %4912 = vmatprep.subr.bf16.mxu0 0
        %4913 = vmatpush1.bf16.msra.mxu0 %v4325
        %4914 = vmatprep.subr.bf16.mxu0 0
        %4915 = vmatpush1.bf16.msra.mxu0 %v4326
        %4916 = vmatprep.subr.bf16.mxu0 0
        %4917 = vmatpush1.bf16.msra.mxu0 %v4327
        %4918 = vmatprep.subr.bf16.mxu0 0
        %4919 = vmatpush1.bf16.msra.mxu0 %v4328
        %4920 = vmatprep.subr.bf16.mxu0 0
        %4921 = vmatpush1.bf16.msra.mxu0 %v4329
        %4922 = vmatprep.mubr.bf16.mxu0 %v2508
        %4923 = vmatmul.mubr.bf16.gmra.mrb[0].mxu0 %v2507
        %v4924 = vpop.f32.mrb[0].mxu0
        %v4925 = vadd.f32 %v3160, %v4924
        %v4926 = vpop.f32.mrb[0].mxu0
        %v4927 = vpop.f32.mrb[0].mxu0
        %v4928 = vpop.f32.mrb[0].mxu0
        %4929 = vdwg.mxu0
        %4930 = vmatprep.subr.bf16.mxu0 0
        %4931 = vmatpush1.bf16.msra.mxu0 %v4330
        %4932 = vmatprep.subr.bf16.mxu0 0
        %4933 = vmatpush1.bf16.msra.mxu0 %v4331
        %4934 = vmatprep.subr.bf16.mxu0 0
        %4935 = vmatpush1.bf16.msra.mxu0 %v4332
        %4936 = vmatprep.subr.bf16.mxu0 0
        %4937 = vmatpush1.bf16.msra.mxu0 %v4333
        %4938 = vmatprep.subr.bf16.mxu0 0
        %4939 = vmatpush1.bf16.msra.mxu0 %v4334
        %4940 = vmatprep.subr.bf16.mxu0 0
        %4941 = vmatpush1.bf16.msra.mxu0 %v4335
        %4942 = vmatprep.subr.bf16.mxu0 0
        %4943 = vmatpush1.bf16.msra.mxu0 %v4336
        %4944 = vmatprep.subr.bf16.mxu0 0
        %4945 = vmatpush1.bf16.msra.mxu0 %v4337
        %4946 = vmatprep.subr.bf16.mxu0 0
        %4947 = vmatpush1.bf16.msra.mxu0 %v4338
        %4948 = vmatprep.subr.bf16.mxu0 0
        %4949 = vmatpush1.bf16.msra.mxu0 %v4339
        %4950 = vmatprep.subr.bf16.mxu0 0
        %4951 = vmatpush1.bf16.msra.mxu0 %v4340
        %4952 = vmatprep.subr.bf16.mxu0 0
        %4953 = vmatpush1.bf16.msra.mxu0 %v4341
        %4954 = vmatprep.subr.bf16.mxu0 0
        %4955 = vmatpush1.bf16.msra.mxu0 %v4342
        %4956 = vmatprep.subr.bf16.mxu0 0
        %4957 = vmatpush1.bf16.msra.mxu0 %v4343
        %4958 = vmatprep.subr.bf16.mxu0 0
        %4959 = vmatpush1.bf16.msra.mxu0 %v4344
        %4960 = vmatprep.subr.bf16.mxu0 0
        %4961 = vmatpush1.bf16.msra.mxu0 %v4345
        %4962 = vmatprep.mubr.bf16.mxu0 %v2528
        %4963 = vmatmul.mubr.bf16.gmra.mrb[0].mxu0 %v2509
        %v4964 = vpop.f32.mrb[0].mxu0
        %v4965 = vadd.f32 %v4925, %v4964
        %v4966 = vpop.f32.mrb[0].mxu0
        %v4967 = vpop.f32.mrb[0].mxu0
        %v4968 = vpop.f32.mrb[0].mxu0
        %4969 = vdwg.mxu0
        %4970 = vmatprep.subr.bf16.mxu0 0
        %4971 = vmatpush1.bf16.msra.mxu0 %v4346
        %4972 = vmatprep.subr.bf16.mxu0 0
        %4973 = vmatpush1.bf16.msra.mxu0 %v4347
        %4974 = vmatprep.subr.bf16.mxu0 0
        %4975 = vmatpush1.bf16.msra.mxu0 %v4348
        %4976 = vmatprep.subr.bf16.mxu0 0
        %4977 = vmatpush1.bf16.msra.mxu0 %v4349
        %4978 = vmatprep.subr.bf16.mxu0 0
        %4979 = vmatpush1.bf16.msra.mxu0 %v4350
        %4980 = vmatprep.subr.bf16.mxu0 0
        %4981 = vmatpush1.bf16.msra.mxu0 %v4351
        %4982 = vmatprep.subr.bf16.mxu0 0
        %4983 = vmatpush1.bf16.msra.mxu0 %v4352
        %4984 = vmatprep.subr.bf16.mxu0 0
        %4985 = vmatpush1.bf16.msra.mxu0 %v4353
        %4986 = vmatprep.subr.bf16.mxu0 0
        %4987 = vmatpush1.bf16.msra.mxu0 %v4354
        %4988 = vmatprep.subr.bf16.mxu0 0
        %4989 = vmatpush1.bf16.msra.mxu0 %v4355
        %4990 = vmatprep.subr.bf16.mxu0 0
        %4991 = vmatpush1.bf16.msra.mxu0 %v4356
        %4992 = vmatprep.subr.bf16.mxu0 0
        %4993 = vmatpush1.bf16.msra.mxu0 %v4357
        %4994 = vmatprep.subr.bf16.mxu0 0
        %4995 = vmatpush1.bf16.msra.mxu0 %v4358
        %4996 = vmatprep.subr.bf16.mxu0 0
        %4997 = vmatpush1.bf16.msra.mxu0 %v4359
        %4998 = vmatprep.subr.bf16.mxu0 0
        %4999 = vmatpush1.bf16.msra.mxu0 %v4360
        %5000 = vmatprep.subr.bf16.mxu0 0
        %5001 = vmatpush1.bf16.msra.mxu0 %v4361
        %5002 = vmatprep.mubr.bf16.mxu0 %v2530
        %5003 = vmatmul.mubr.bf16.gmra.mrb[0].mxu0 %v2529
        %v5004 = vpop.f32.mrb[0].mxu0
        %v5005 = vadd.f32 %v4965, %v5004
        %v5006 = vpop.f32.mrb[0].mxu0
        %v5007 = vpop.f32.mrb[0].mxu0
        %v5008 = vpop.f32.mrb[0].mxu0
        %5009 = vdwg.mxu0
        %5010 = vmatprep.subr.bf16.mxu0 0
        %5011 = vmatpush1.bf16.msra.mxu0 %v4362
        %5012 = vmatprep.subr.bf16.mxu0 0
        %5013 = vmatpush1.bf16.msra.mxu0 %v4363
        %5014 = vmatprep.subr.bf16.mxu0 0
        %5015 = vmatpush1.bf16.msra.mxu0 %v4364
        %5016 = vmatprep.subr.bf16.mxu0 0
        %5017 = vmatpush1.bf16.msra.mxu0 %v4365
        %5018 = vmatprep.subr.bf16.mxu0 0
        %5019 = vmatpush1.bf16.msra.mxu0 %v4366
        %5020 = vmatprep.subr.bf16.mxu0 0
        %5021 = vmatpush1.bf16.msra.mxu0 %v4367
        %5022 = vmatprep.subr.bf16.mxu0 0
        %5023 = vmatpush1.bf16.msra.mxu0 %v4368
        %5024 = vmatprep.subr.bf16.mxu0 0
        %5025 = vmatpush1.bf16.msra.mxu0 %v4369
        %5026 = vmatprep.subr.bf16.mxu0 0
        %5027 = vmatpush1.bf16.msra.mxu0 %v4370
        %5028 = vmatprep.subr.bf16.mxu0 0
        %5029 = vmatpush1.bf16.msra.mxu0 %v4371
        %5030 = vmatprep.subr.bf16.mxu0 0
        %5031 = vmatpush1.bf16.msra.mxu0 %v4372
        %5032 = vmatprep.subr.bf16.mxu0 0
        %5033 = vmatpush1.bf16.msra.mxu0 %v4373
        %5034 = vmatprep.subr.bf16.mxu0 0
        %5035 = vmatpush1.bf16.msra.mxu0 %v4374
        %5036 = vmatprep.subr.bf16.mxu0 0
        %5037 = vmatpush1.bf16.msra.mxu0 %v4375
        %5038 = vmatprep.subr.bf16.mxu0 0
        %5039 = vmatpush1.bf16.msra.mxu0 %v4376
        %5040 = vmatprep.subr.bf16.mxu0 0
        %5041 = vmatpush1.bf16.msra.mxu0 %v4377
        %5042 = vmatprep.mubr.bf16.mxu0 %v2511
        %5043 = vmatmul.mubr.bf16.gmra.mrb[0].mxu0 %v2510
        %v5044 = vpop.f32.mrb[0].mxu0
        %v5045 = vadd.f32 %v5005, %v5044
        %v5046 = vpop.f32.mrb[0].mxu0
        %v5047 = vpop.f32.mrb[0].mxu0
        %v5048 = vpop.f32.mrb[0].mxu0
        %5049 = vdwg.mxu0
        %5050 = vmatprep.subr.bf16.mxu0 0
        %5051 = vmatpush1.bf16.msra.mxu0 %v4378
        %5052 = vmatprep.subr.bf16.mxu0 0
        %5053 = vmatpush1.bf16.msra.mxu0 %v4379
        %5054 = vmatprep.subr.bf16.mxu0 0
        %5055 = vmatpush1.bf16.msra.mxu0 %v4380
        %5056 = vmatprep.subr.bf16.mxu0 0
        %5057 = vmatpush1.bf16.msra.mxu0 %v4381
        %5058 = vmatprep.subr.bf16.mxu0 0
        %5059 = vmatpush1.bf16.msra.mxu0 %v4382
        %5060 = vmatprep.subr.bf16.mxu0 0
        %5061 = vmatpush1.bf16.msra.mxu0 %v4383
        %5062 = vmatprep.subr.bf16.mxu0 0
        %5063 = vmatpush1.bf16.msra.mxu0 %v4384
        %5064 = vmatprep.subr.bf16.mxu0 0
        %5065 = vmatpush1.bf16.msra.mxu0 %v4385
        %5066 = vmatprep.subr.bf16.mxu0 0
        %5067 = vmatpush1.bf16.msra.mxu0 %v4386
        %5068 = vmatprep.subr.bf16.mxu0 0
        %5069 = vmatpush1.bf16.msra.mxu0 %v4387
        %5070 = vmatprep.subr.bf16.mxu0 0
        %5071 = vmatpush1.bf16.msra.mxu0 %v4388
        %5072 = vmatprep.subr.bf16.mxu0 0
        %5073 = vmatpush1.bf16.msra.mxu0 %v4389
        %5074 = vmatprep.subr.bf16.mxu0 0
        %5075 = vmatpush1.bf16.msra.mxu0 %v4390
        %5076 = vmatprep.subr.bf16.mxu0 0
        %5077 = vmatpush1.bf16.msra.mxu0 %v4391
        %5078 = vmatprep.subr.bf16.mxu0 0
        %5079 = vmatpush1.bf16.msra.mxu0 %v4392
        %5080 = vmatprep.subr.bf16.mxu0 0
        %5081 = vmatpush1.bf16.msra.mxu0 %v4393
        %5082 = vmatprep.mubr.bf16.mxu0 %v2537
        %5083 = vmatmul.mubr.bf16.gmra.mrb[0].mxu0 %v2512
        %v5084 = vpop.f32.mrb[0].mxu0
        %v5085 = vadd.f32 %v5045, %v5084
        %v5086 = vpop.f32.mrb[0].mxu0
        %v5087 = vpop.f32.mrb[0].mxu0
        %v5088 = vpop.f32.mrb[0].mxu0
        %5089 = vdwg.mxu0
        %5090 = vmatprep.subr.bf16.mxu0 0
        %5091 = vmatpush1.bf16.msra.mxu0 %v4394
        %5092 = vmatprep.subr.bf16.mxu0 0
        %5093 = vmatpush1.bf16.msra.mxu0 %v4395
        %5094 = vmatprep.subr.bf16.mxu0 0
        %5095 = vmatpush1.bf16.msra.mxu0 %v4396
        %5096 = vmatprep.subr.bf16.mxu0 0
        %5097 = vmatpush1.bf16.msra.mxu0 %v4397
        %5098 = vmatprep.subr.bf16.mxu0 0
        %5099 = vmatpush1.bf16.msra.mxu0 %v4398
        %5100 = vmatprep.subr.bf16.mxu0 0
        %5101 = vmatpush1.bf16.msra.mxu0 %v4399
        %5102 = vmatprep.subr.bf16.mxu0 0
        %5103 = vmatpush1.bf16.msra.mxu0 %v4400
        %5104 = vmatprep.subr.bf16.mxu0 0
        %5105 = vmatpush1.bf16.msra.mxu0 %v4401
        %5106 = vmatprep.subr.bf16.mxu0 0
        %5107 = vmatpush1.bf16.msra.mxu0 %v4402
        %5108 = vmatprep.subr.bf16.mxu0 0
        %5109 = vmatpush1.bf16.msra.mxu0 %v4403
        %5110 = vmatprep.subr.bf16.mxu0 0
        %5111 = vmatpush1.bf16.msra.mxu0 %v4404
        %5112 = vmatprep.subr.bf16.mxu0 0
        %5113 = vmatpush1.bf16.msra.mxu0 %v4405
        %5114 = vmatprep.subr.bf16.mxu0 0
        %5115 = vmatpush1.bf16.msra.mxu0 %v4406
        %5116 = vmatprep.subr.bf16.mxu0 0
        %5117 = vmatpush1.bf16.msra.mxu0 %v4407
        %5118 = vmatprep.subr.bf16.mxu0 0
        %5119 = vmatpush1.bf16.msra.mxu0 %v4408
        %5120 = vmatprep.subr.bf16.mxu0 0
        %5121 = vmatpush1.bf16.msra.mxu0 %v4409
        %5122 = vmatprep.mubr.bf16.mxu0 %v2539
        %5123 = vmatmul.mubr.bf16.gmra.mrb[0].mxu0 %v2538
        %v5124 = vpop.f32.mrb[0].mxu0
        %v5125 = vadd.f32 %v5085, %v5124
        %v5126 = vpop.f32.mrb[0].mxu0
        %v5127 = vpop.f32.mrb[0].mxu0
        %v5128 = vpop.f32.mrb[0].mxu0
        %5129 = vdwg.mxu0
        %5130 = vmatprep.subr.bf16.mxu0 0
        %5131 = vmatpush1.bf16.msra.mxu0 %v4410
        %5132 = vmatprep.subr.bf16.mxu0 0
        %5133 = vmatpush1.bf16.msra.mxu0 %v4411
        %5134 = vmatprep.subr.bf16.mxu0 0
        %5135 = vmatpush1.bf16.msra.mxu0 %v4412
        %5136 = vmatprep.subr.bf16.mxu0 0
        %5137 = vmatpush1.bf16.msra.mxu0 %v4413
        %5138 = vmatprep.subr.bf16.mxu0 0
        %5139 = vmatpush1.bf16.msra.mxu0 %v4414
        %5140 = vmatprep.subr.bf16.mxu0 0
        %5141 = vmatpush1.bf16.msra.mxu0 %v4415
        %5142 = vmatprep.subr.bf16.mxu0 0
        %5143 = vmatpush1.bf16.msra.mxu0 %v4416
        %5144 = vmatprep.subr.bf16.mxu0 0
        %5145 = vmatpush1.bf16.msra.mxu0 %v4417
        %5146 = vmatprep.subr.bf16.mxu0 0
        %5147 = vmatpush1.bf16.msra.mxu0 %v4418
        %5148 = vmatprep.subr.bf16.mxu0 0
        %5149 = vmatpush1.bf16.msra.mxu0 %v4419
        %5150 = vmatprep.subr.bf16.mxu0 0
        %5151 = vmatpush1.bf16.msra.mxu0 %v4420
        %5152 = vmatprep.subr.bf16.mxu0 0
        %5153 = vmatpush1.bf16.msra.mxu0 %v4421
        %5154 = vmatprep.subr.bf16.mxu0 0
        %5155 = vmatpush1.bf16.msra.mxu0 %v4422
        %5156 = vmatprep.subr.bf16.mxu0 0
        %5157 = vmatpush1.bf16.msra.mxu0 %v4423
        %5158 = vmatprep.subr.bf16.mxu0 0
        %5159 = vmatpush1.bf16.msra.mxu0 %v4424
        %5160 = vmatprep.subr.bf16.mxu0 0
        %5161 = vmatpush1.bf16.msra.mxu0 %v4425
        %5162 = vmatprep.mubr.bf16.mxu0 %v2514
        %5163 = vmatmul.mubr.bf16.gmra.mrb[0].mxu0 %v2513
        %v5164 = vpop.f32.mrb[0].mxu0
        %v5165 = vadd.f32 %v5125, %v5164
        %v5166 = vpop.f32.mrb[0].mxu0
        %v5167 = vpop.f32.mrb[0].mxu0
        %v5168 = vpop.f32.mrb[0].mxu0
        %5169 = vdwg.mxu0
        %5170 = vmatprep.subr.bf16.mxu0 0
        %5171 = vmatpush1.bf16.msra.mxu0 %v4426
        %5172 = vmatprep.subr.bf16.mxu0 0
        %5173 = vmatpush1.bf16.msra.mxu0 %v4427
        %5174 = vmatprep.subr.bf16.mxu0 0
        %5175 = vmatpush1.bf16.msra.mxu0 %v4428
        %5176 = vmatprep.subr.bf16.mxu0 0
        %5177 = vmatpush1.bf16.msra.mxu0 %v4429
        %5178 = vmatprep.subr.bf16.mxu0 0
        %5179 = vmatpush1.bf16.msra.mxu0 %v4430
        %5180 = vmatprep.subr.bf16.mxu0 0
        %5181 = vmatpush1.bf16.msra.mxu0 %v4431
        %5182 = vmatprep.subr.bf16.mxu0 0
        %5183 = vmatpush1.bf16.msra.mxu0 %v4432
        %5184 = vmatprep.subr.bf16.mxu0 0
        %5185 = vmatpush1.bf16.msra.mxu0 %v4433
        %5186 = vmatprep.subr.bf16.mxu0 0
        %5187 = vmatpush1.bf16.msra.mxu0 %v4434
        %5188 = vmatprep.subr.bf16.mxu0 0
        %5189 = vmatpush1.bf16.msra.mxu0 %v4435
        %5190 = vmatprep.subr.bf16.mxu0 0
        %5191 = vmatpush1.bf16.msra.mxu0 %v4436
        %5192 = vmatprep.subr.bf16.mxu0 0
        %5193 = vmatpush1.bf16.msra.mxu0 %v4437
        %5194 = vmatprep.subr.bf16.mxu0 0
        %5195 = vmatpush1.bf16.msra.mxu0 %v4438
        %5196 = vmatprep.subr.bf16.mxu0 0
        %5197 = vmatpush1.bf16.msra.mxu0 %v4439
        %5198 = vmatprep.subr.bf16.mxu0 0
        %5199 = vmatpush1.bf16.msra.mxu0 %v4440
        %5200 = vmatprep.subr.bf16.mxu0 0
        %5201 = vmatpush1.bf16.msra.mxu0 %v4441
        %5202 = vmatprep.mubr.bf16.mxu0 %v2546
        %5203 = vmatmul.mubr.bf16.gmra.mrb[0].mxu0 %v2515
        %v5204 = vpop.f32.mrb[0].mxu0
        %v5205 = vadd.f32 %v5165, %v5204
        %v5206 = vpop.f32.mrb[0].mxu0
        %v5207 = vpop.f32.mrb[0].mxu0
        %v5208 = vpop.f32.mrb[0].mxu0
        %5209 = vdwg.mxu0
        %5210 = vmatprep.subr.bf16.mxu0 0
        %5211 = vmatpush1.bf16.msra.mxu0 %v4442
        %5212 = vmatprep.subr.bf16.mxu0 0
        %5213 = vmatpush1.bf16.msra.mxu0 %v4443
        %5214 = vmatprep.subr.bf16.mxu0 0
        %5215 = vmatpush1.bf16.msra.mxu0 %v4444
        %5216 = vmatprep.subr.bf16.mxu0 0
        %5217 = vmatpush1.bf16.msra.mxu0 %v4445
        %5218 = vmatprep.subr.bf16.mxu0 0
        %5219 = vmatpush1.bf16.msra.mxu0 %v4446
        %5220 = vmatprep.subr.bf16.mxu0 0
        %5221 = vmatpush1.bf16.msra.mxu0 %v4447
        %5222 = vmatprep.subr.bf16.mxu0 0
        %5223 = vmatpush1.bf16.msra.mxu0 %v4448
        %5224 = vmatprep.subr.bf16.mxu0 0
        %5225 = vmatpush1.bf16.msra.mxu0 %v4449
        %5226 = vmatprep.subr.bf16.mxu0 0
        %5227 = vmatpush1.bf16.msra.mxu0 %v4450
        %5228 = vmatprep.subr.bf16.mxu0 0
        %5229 = vmatpush1.bf16.msra.mxu0 %v4451
        %5230 = vmatprep.subr.bf16.mxu0 0
        %5231 = vmatpush1.bf16.msra.mxu0 %v4452
        %5232 = vmatprep.subr.bf16.mxu0 0
        %5233 = vmatpush1.bf16.msra.mxu0 %v4453
        %5234 = vmatprep.subr.bf16.mxu0 0
        %5235 = vmatpush1.bf16.msra.mxu0 %v4454
        %5236 = vmatprep.subr.bf16.mxu0 0
        %5237 = vmatpush1.bf16.msra.mxu0 %v4455
        %5238 = vmatprep.subr.bf16.mxu0 0
        %5239 = vmatpush1.bf16.msra.mxu0 %v4456
        %5240 = vmatprep.subr.bf16.mxu0 0
        %5241 = vmatpush1.bf16.msra.mxu0 %v4457
        %5242 = vmatprep.mubr.bf16.mxu0 %v2548
        %5243 = vmatmul.mubr.bf16.gmra.mrb[0].mxu0 %v2547
        %v5244 = vpop.f32.mrb[0].mxu0
        %v5245 = vadd.f32 %v5205, %v5244
        %v5246 = vpop.f32.mrb[0].mxu0
        %v5247 = vpop.f32.mrb[0].mxu0
        %v5248 = vpop.f32.mrb[0].mxu0
        %5249 = vdwg.mxu0
        %5250 = vmatprep.subr.bf16.mxu0 0
        %5251 = vmatpush1.bf16.msra.mxu0 %v4458
        %5252 = vmatprep.subr.bf16.mxu0 0
        %5253 = vmatpush1.bf16.msra.mxu0 %v4459
        %5254 = vmatprep.subr.bf16.mxu0 0
        %5255 = vmatpush1.bf16.msra.mxu0 %v4460
        %5256 = vmatprep.subr.bf16.mxu0 0
        %5257 = vmatpush1.bf16.msra.mxu0 %v4461
        %5258 = vmatprep.subr.bf16.mxu0 0
        %5259 = vmatpush1.bf16.msra.mxu0 %v4462
        %5260 = vmatprep.subr.bf16.mxu0 0
        %5261 = vmatpush1.bf16.msra.mxu0 %v4463
        %5262 = vmatprep.subr.bf16.mxu0 0
        %5263 = vmatpush1.bf16.msra.mxu0 %v4464
        %5264 = vmatprep.subr.bf16.mxu0 0
        %5265 = vmatpush1.bf16.msra.mxu0 %v4465
        %5266 = vmatprep.subr.bf16.mxu0 0
        %5267 = vmatpush1.bf16.msra.mxu0 %v4466
        %5268 = vmatprep.subr.bf16.mxu0 0
        %5269 = vmatpush1.bf16.msra.mxu0 %v4467
        %5270 = vmatprep.subr.bf16.mxu0 0
        %5271 = vmatpush1.bf16.msra.mxu0 %v4468
        %5272 = vmatprep.subr.bf16.mxu0 0
        %5273 = vmatpush1.bf16.msra.mxu0 %v4469
        %5274 = vmatprep.subr.bf16.mxu0 0
        %5275 = vmatpush1.bf16.msra.mxu0 %v4470
        %5276 = vmatprep.subr.bf16.mxu0 0
        %5277 = vmatpush1.bf16.msra.mxu0 %v4471
        %5278 = vmatprep.subr.bf16.mxu0 0
        %5279 = vmatpush1.bf16.msra.mxu0 %v4472
        %5280 = vmatprep.subr.bf16.mxu0 0
        %5281 = vmatpush1.bf16.msra.mxu0 %v4473
        %5282 = vmatprep.mubr.bf16.mxu0 %v2517
        %5283 = vmatmul.mubr.bf16.gmra.mrb[0].mxu0 %v2516
        %v5284 = vpop.f32.mrb[0].mxu0
        %v5285 = vadd.f32 %v5245, %v5284
        %v5286 = vpop.f32.mrb[0].mxu0
        %v5287 = vpop.f32.mrb[0].mxu0
        %v5288 = vpop.f32.mrb[0].mxu0
        %5289 = vdwg.mxu0
        %5290 = vmatprep.subr.bf16.mxu0 0
        %5291 = vmatpush1.bf16.msra.mxu0 %v4474
        %5292 = vmatprep.subr.bf16.mxu0 0
        %5293 = vmatpush1.bf16.msra.mxu0 %v4475
        %5294 = vmatprep.subr.bf16.mxu0 0
        %5295 = vmatpush1.bf16.msra.mxu0 %v4476
        %5296 = vmatprep.subr.bf16.mxu0 0
        %5297 = vmatpush1.bf16.msra.mxu0 %v4477
        %5298 = vmatprep.subr.bf16.mxu0 0
        %5299 = vmatpush1.bf16.msra.mxu0 %v4478
        %5300 = vmatprep.subr.bf16.mxu0 0
        %5301 = vmatpush1.bf16.msra.mxu0 %v4479
        %5302 = vmatprep.subr.bf16.mxu0 0
        %5303 = vmatpush1.bf16.msra.mxu0 %v4480
        %5304 = vmatprep.subr.bf16.mxu0 0
        %5305 = vmatpush1.bf16.msra.mxu0 %v4481
        %5306 = vmatprep.subr.bf16.mxu0 0
        %5307 = vmatpush1.bf16.msra.mxu0 %v4482
        %5308 = vmatprep.subr.bf16.mxu0 0
        %5309 = vmatpush1.bf16.msra.mxu0 %v4483
        %5310 = vmatprep.subr.bf16.mxu0 0
        %5311 = vmatpush1.bf16.msra.mxu0 %v4484
        %5312 = vmatprep.subr.bf16.mxu0 0
        %5313 = vmatpush1.bf16.msra.mxu0 %v4485
        %5314 = vmatprep.subr.bf16.mxu0 0
        %5315 = vmatpush1.bf16.msra.mxu0 %v4486
        %5316 = vmatprep.subr.bf16.mxu0 0
        %5317 = vmatpush1.bf16.msra.mxu0 %v4487
        %5318 = vmatprep.subr.bf16.mxu0 0
        %5319 = vmatpush1.bf16.msra.mxu0 %v4488
        %5320 = vmatprep.subr.bf16.mxu0 0
        %5321 = vmatpush1.bf16.msra.mxu0 %v4489
        %5322 = vmatprep.mubr.bf16.mxu0 %v2555
        %5323 = vmatmul.mubr.bf16.gmra.mrb[0].mxu0 %v2518
        %v5324 = vpop.f32.mrb[0].mxu0
        %v5325 = vadd.f32 %v5285, %v5324
        %v5326 = vpop.f32.mrb[0].mxu0
        %v5327 = vpop.f32.mrb[0].mxu0
        %v5328 = vpop.f32.mrb[0].mxu0
        %5329 = vdwg.mxu0
        %5330 = vmatprep.subr.bf16.mxu0 0
        %5331 = vmatpush1.bf16.msra.mxu0 %v4490
        %5332 = vmatprep.subr.bf16.mxu0 0
        %5333 = vmatpush1.bf16.msra.mxu0 %v4491
        %5334 = vmatprep.subr.bf16.mxu0 0
        %5335 = vmatpush1.bf16.msra.mxu0 %v4492
        %5336 = vmatprep.subr.bf16.mxu0 0
        %5337 = vmatpush1.bf16.msra.mxu0 %v4493
        %5338 = vmatprep.subr.bf16.mxu0 0
        %5339 = vmatpush1.bf16.msra.mxu0 %v4494
        %5340 = vmatprep.subr.bf16.mxu0 0
        %5341 = vmatpush1.bf16.msra.mxu0 %v4495
        %5342 = vmatprep.subr.bf16.mxu0 0
        %5343 = vmatpush1.bf16.msra.mxu0 %v4496
        %5344 = vmatprep.subr.bf16.mxu0 0
        %5345 = vmatpush1.bf16.msra.mxu0 %v4497
        %5346 = vmatprep.subr.bf16.mxu0 0
        %5347 = vmatpush1.bf16.msra.mxu0 %v4498
        %5348 = vmatprep.subr.bf16.mxu0 0
        %5349 = vmatpush1.bf16.msra.mxu0 %v4499
        %5350 = vmatprep.subr.bf16.mxu0 0
        %5351 = vmatpush1.bf16.msra.mxu0 %v4500
        %5352 = vmatprep.subr.bf16.mxu0 0
        %5353 = vmatpush1.bf16.msra.mxu0 %v4501
        %5354 = vmatprep.subr.bf16.mxu0 0
        %5355 = vmatpush1.bf16.msra.mxu0 %v4502
        %5356 = vmatprep.subr.bf16.mxu0 0
        %5357 = vmatpush1.bf16.msra.mxu0 %v4503
        %5358 = vmatprep.subr.bf16.mxu0 0
        %5359 = vmatpush1.bf16.msra.mxu0 %v4504
        %5360 = vmatprep.subr.bf16.mxu0 0
        %5361 = vmatpush1.bf16.msra.mxu0 %v4505
        %5362 = vmatprep.mubr.bf16.mxu0 %v2557
        %5363 = vmatmul.mubr.bf16.gmra.mrb[0].mxu0 %v2556
        %v5364 = vpop.f32.mrb[0].mxu0
        %v5365 = vadd.f32 %v5325, %v5364
        %v5366 = vpop.f32.mrb[0].mxu0
        %v5367 = vpop.f32.mrb[0].mxu0
        %v5368 = vpop.f32.mrb[0].mxu0
        %5369 = vdwg.mxu0
        %5370 = vmatprep.subr.bf16.mxu0 0
        %5371 = vmatpush1.bf16.msra.mxu0 %v4506
        %5372 = vmatprep.subr.bf16.mxu0 0
        %5373 = vmatpush1.bf16.msra.mxu0 %v4507
        %5374 = vmatprep.subr.bf16.mxu0 0
        %5375 = vmatpush1.bf16.msra.mxu0 %v4508
        %5376 = vmatprep.subr.bf16.mxu0 0
        %5377 = vmatpush1.bf16.msra.mxu0 %v4509
        %5378 = vmatprep.subr.bf16.mxu0 0
        %5379 = vmatpush1.bf16.msra.mxu0 %v4510
        %5380 = vmatprep.subr.bf16.mxu0 0
        %5381 = vmatpush1.bf16.msra.mxu0 %v4511
        %5382 = vmatprep.subr.bf16.mxu0 0
        %5383 = vmatpush1.bf16.msra.mxu0 %v4512
        %5384 = vmatprep.subr.bf16.mxu0 0
        %5385 = vmatpush1.bf16.msra.mxu0 %v4513
        %5386 = vmatprep.subr.bf16.mxu0 0
        %5387 = vmatpush1.bf16.msra.mxu0 %v4514
        %5388 = vmatprep.subr.bf16.mxu0 0
        %5389 = vmatpush1.bf16.msra.mxu0 %v4515
        %5390 = vmatprep.subr.bf16.mxu0 0
        %5391 = vmatpush1.bf16.msra.mxu0 %v4516
        %5392 = vmatprep.subr.bf16.mxu0 0
        %5393 = vmatpush1.bf16.msra.mxu0 %v4517
        %5394 = vmatprep.subr.bf16.mxu0 0
        %5395 = vmatpush1.bf16.msra.mxu0 %v4518
        %5396 = vmatprep.subr.bf16.mxu0 0
        %5397 = vmatpush1.bf16.msra.mxu0 %v4519
        %5398 = vmatprep.subr.bf16.mxu0 0
        %5399 = vmatpush1.bf16.msra.mxu0 %v4520
        %5400 = vmatprep.subr.bf16.mxu0 0
        %5401 = vmatpush1.bf16.msra.mxu0 %v4521
        %5402 = vmatprep.mubr.bf16.mxu0 %v2520
        %5403 = vmatmul.mubr.bf16.gmra.mrb[0].mxu0 %v2519
        %v5404 = vpop.f32.mrb[0].mxu0
        %v5405 = vadd.f32 %v5365, %v5404
        %v5406 = vpop.f32.mrb[0].mxu0
        %v5407 = vpop.f32.mrb[0].mxu0
        %v5408 = vpop.f32.mrb[0].mxu0
        %5409 = vdwg.mxu0
        %5410 = vmatprep.subr.bf16.mxu0 0
        %5411 = vmatpush1.bf16.msra.mxu0 %v4522
        %5412 = vmatprep.subr.bf16.mxu0 0
        %5413 = vmatpush1.bf16.msra.mxu0 %v4523
        %5414 = vmatprep.subr.bf16.mxu0 0
        %5415 = vmatpush1.bf16.msra.mxu0 %v4524
        %5416 = vmatprep.subr.bf16.mxu0 0
        %5417 = vmatpush1.bf16.msra.mxu0 %v4525
        %5418 = vmatprep.subr.bf16.mxu0 0
        %5419 = vmatpush1.bf16.msra.mxu0 %v4526
        %5420 = vmatprep.subr.bf16.mxu0 0
        %5421 = vmatpush1.bf16.msra.mxu0 %v4527
        %5422 = vmatprep.subr.bf16.mxu0 0
        %5423 = vmatpush1.bf16.msra.mxu0 %v4528
        %5424 = vmatprep.subr.bf16.mxu0 0
        %5425 = vmatpush1.bf16.msra.mxu0 %v4529
        %5426 = vmatprep.subr.bf16.mxu0 0
        %5427 = vmatpush1.bf16.msra.mxu0 %v4530
        %5428 = vmatprep.subr.bf16.mxu0 0
        %5429 = vmatpush1.bf16.msra.mxu0 %v4531
        %5430 = vmatprep.subr.bf16.mxu0 0
        %5431 = vmatpush1.bf16.msra.mxu0 %v4532
        %5432 = vmatprep.subr.bf16.mxu0 0
        %5433 = vmatpush1.bf16.msra.mxu0 %v4533
        %5434 = vmatprep.subr.bf16.mxu0 0
        %5435 = vmatpush1.bf16.msra.mxu0 %v4534
        %5436 = vmatprep.subr.bf16.mxu0 0
        %5437 = vmatpush1.bf16.msra.mxu0 %v4535
        %5438 = vmatprep.subr.bf16.mxu0 0
        %5439 = vmatpush1.bf16.msra.mxu0 %v4536
        %5440 = vmatprep.subr.bf16.mxu0 0
        %5441 = vmatpush1.bf16.msra.mxu0 %v4537
        %5442 = vmatprep.mubr.bf16.mxu0 %v2564
        %5443 = vmatmul.mubr.bf16.gmra.mrb[0].mxu0 %v2521
        %v5444 = vpop.f32.mrb[0].mxu0
        %v5445 = vadd.f32 %v5405, %v5444
        %v5446 = vpop.f32.mrb[0].mxu0
        %v5447 = vpop.f32.mrb[0].mxu0
        %v5448 = vpop.f32.mrb[0].mxu0
        %5449 = vdwg.mxu0
        %5450 = vmatprep.subr.bf16.mxu0 0
        %5451 = vmatpush1.bf16.msra.mxu0 %v4538
        %5452 = vmatprep.subr.bf16.mxu0 0
        %5453 = vmatpush1.bf16.msra.mxu0 %v4539
        %5454 = vmatprep.subr.bf16.mxu0 0
        %5455 = vmatpush1.bf16.msra.mxu0 %v4540
        %5456 = vmatprep.subr.bf16.mxu0 0
        %5457 = vmatpush1.bf16.msra.mxu0 %v4541
        %5458 = vmatprep.subr.bf16.mxu0 0
        %5459 = vmatpush1.bf16.msra.mxu0 %v4542
        %5460 = vmatprep.subr.bf16.mxu0 0
        %5461 = vmatpush1.bf16.msra.mxu0 %v4543
        %5462 = vmatprep.subr.bf16.mxu0 0
        %5463 = vmatpush1.bf16.msra.mxu0 %v4544
        %5464 = vmatprep.subr.bf16.mxu0 0
        %5465 = vmatpush1.bf16.msra.mxu0 %v4545
        %5466 = vmatprep.subr.bf16.mxu0 0
        %5467 = vmatpush1.bf16.msra.mxu0 %v4546
        %5468 = vmatprep.subr.bf16.mxu0 0
        %5469 = vmatpush1.bf16.msra.mxu0 %v4547
        %5470 = vmatprep.subr.bf16.mxu0 0
        %5471 = vmatpush1.bf16.msra.mxu0 %v4548
        %5472 = vmatprep.subr.bf16.mxu0 0
        %5473 = vmatpush1.bf16.msra.mxu0 %v4549
        %5474 = vmatprep.subr.bf16.mxu0 0
        %5475 = vmatpush1.bf16.msra.mxu0 %v4550
        %5476 = vmatprep.subr.bf16.mxu0 0
        %5477 = vmatpush1.bf16.msra.mxu0 %v4551
        %5478 = vmatprep.subr.bf16.mxu0 0
        %5479 = vmatpush1.bf16.msra.mxu0 %v4552
        %5480 = vmatprep.subr.bf16.mxu0 0
        %5481 = vmatpush1.bf16.msra.mxu0 %v4553
        %5482 = vmatprep.mubr.bf16.mxu0 %v2566
        %5483 = vmatmul.mubr.bf16.gmra.mrb[0].mxu0 %v2565
        %v5484 = vpop.f32.mrb[0].mxu0
        %v5485 = vadd.f32 %v5445, %v5484
        %v5486 = vpop.f32.mrb[0].mxu0
        %v5487 = vpop.f32.mrb[0].mxu0
        %v5488 = vpop.f32.mrb[0].mxu0
        %5489 = vdwg.mxu0
        %5490 = vmatprep.subr.bf16.mxu0 0
        %5491 = vmatpush1.bf16.msra.mxu0 %v4554
        %5492 = vmatprep.subr.bf16.mxu0 0
        %5493 = vmatpush1.bf16.msra.mxu0 %v4555
        %5494 = vmatprep.subr.bf16.mxu0 0
        %5495 = vmatpush1.bf16.msra.mxu0 %v4556
        %5496 = vmatprep.subr.bf16.mxu0 0
        %5497 = vmatpush1.bf16.msra.mxu0 %v4557
        %5498 = vmatprep.subr.bf16.mxu0 0
        %5499 = vmatpush1.bf16.msra.mxu0 %v4558
        %5500 = vmatprep.subr.bf16.mxu0 0
        %5501 = vmatpush1.bf16.msra.mxu0 %v4559
        %5502 = vmatprep.subr.bf16.mxu0 0
        %5503 = vmatpush1.bf16.msra.mxu0 %v4560
        %5504 = vmatprep.subr.bf16.mxu0 0
        %5505 = vmatpush1.bf16.msra.mxu0 %v4561
        %5506 = vmatprep.subr.bf16.mxu0 0
        %5507 = vmatpush1.bf16.msra.mxu0 %v4562
        %5508 = vmatprep.subr.bf16.mxu0 0
        %5509 = vmatpush1.bf16.msra.mxu0 %v4563
        %5510 = vmatprep.subr.bf16.mxu0 0
        %5511 = vmatpush1.bf16.msra.mxu0 %v4564
        %5512 = vmatprep.subr.bf16.mxu0 0
        %5513 = vmatpush1.bf16.msra.mxu0 %v4565
        %5514 = vmatprep.subr.bf16.mxu0 0
        %5515 = vmatpush1.bf16.msra.mxu0 %v4566
        %5516 = vmatprep.subr.bf16.mxu0 0
        %5517 = vmatpush1.bf16.msra.mxu0 %v4567
        %5518 = vmatprep.subr.bf16.mxu0 0
        %5519 = vmatpush1.bf16.msra.mxu0 %v4568
        %5520 = vmatprep.subr.bf16.mxu0 0
        %5521 = vmatpush1.bf16.msra.mxu0 %v4569
        %5522 = vmatprep.mubr.bf16.mxu0 %v2523
        %5523 = vmatmul.mubr.bf16.gmra.mrb[0].mxu0 %v2522
        %v5524 = vpop.f32.mrb[0].mxu0
        %v5525 = vadd.f32 %v5485, %v5524
        %v5526 = vpop.f32.mrb[0].mxu0
        %v5527 = vpop.f32.mrb[0].mxu0
        %v5528 = vpop.f32.mrb[0].mxu0
        %5529 = vdwg.mxu0
        %5530 = vmatprep.subr.bf16.mxu0 0
        %5531 = vmatpush1.bf16.msra.mxu0 %v4570
        %5532 = vmatprep.subr.bf16.mxu0 0
        %5533 = vmatpush1.bf16.msra.mxu0 %v4571
        %5534 = vmatprep.subr.bf16.mxu0 0
        %5535 = vmatpush1.bf16.msra.mxu0 %v4572
        %5536 = vmatprep.subr.bf16.mxu0 0
        %5537 = vmatpush1.bf16.msra.mxu0 %v4573
        %5538 = vmatprep.subr.bf16.mxu0 0
        %5539 = vmatpush1.bf16.msra.mxu0 %v4574
        %5540 = vmatprep.subr.bf16.mxu0 0
        %5541 = vmatpush1.bf16.msra.mxu0 %v4575
        %5542 = vmatprep.subr.bf16.mxu0 0
        %5543 = vmatpush1.bf16.msra.mxu0 %v4576
        %5544 = vmatprep.subr.bf16.mxu0 0
        %5545 = vmatpush1.bf16.msra.mxu0 %v4577
        %5546 = vmatprep.subr.bf16.mxu0 0
        %5547 = vmatpush1.bf16.msra.mxu0 %v4578
        %5548 = vmatprep.subr.bf16.mxu0 0
        %5549 = vmatpush1.bf16.msra.mxu0 %v4579
        %5550 = vmatprep.subr.bf16.mxu0 0
        %5551 = vmatpush1.bf16.msra.mxu0 %v4580
        %5552 = vmatprep.subr.bf16.mxu0 0
        %5553 = vmatpush1.bf16.msra.mxu0 %v4581
        %5554 = vmatprep.subr.bf16.mxu0 0
        %5555 = vmatpush1.bf16.msra.mxu0 %v4582
        %5556 = vmatprep.subr.bf16.mxu0 0
        %5557 = vmatpush1.bf16.msra.mxu0 %v4583
        %5558 = vmatprep.subr.bf16.mxu0 0
        %5559 = vmatpush1.bf16.msra.mxu0 %v4584
        %5560 = vmatprep.subr.bf16.mxu0 0
        %5561 = vmatpush1.bf16.msra.mxu0 %v4585
        %5562 = vmatprep.mubr.bf16.mxu0 %v2573
        %5563 = vmatmul.mubr.bf16.gmra.mrb[0].mxu0 %v2524
        %v5564 = vpop.f32.mrb[0].mxu0
        %v5565 = vadd.f32 %v5525, %v5564
        %v5566 = vpop.f32.mrb[0].mxu0
        %v5567 = vpop.f32.mrb[0].mxu0
        %v5568 = vpop.f32.mrb[0].mxu0
        %5569 = vdwg.mxu0
        %5570 = vmatprep.subr.bf16.mxu0 0
        %5571 = vmatpush1.bf16.msra.mxu0 %v4586
        %5572 = vmatprep.subr.bf16.mxu0 0
        %5573 = vmatpush1.bf16.msra.mxu0 %v4587
        %5574 = vmatprep.subr.bf16.mxu0 0
        %5575 = vmatpush1.bf16.msra.mxu0 %v4588
        %5576 = vmatprep.subr.bf16.mxu0 0
        %5577 = vmatpush1.bf16.msra.mxu0 %v4589
        %5578 = vmatprep.subr.bf16.mxu0 0
        %5579 = vmatpush1.bf16.msra.mxu0 %v4590
        %5580 = vmatprep.subr.bf16.mxu0 0
        %5581 = vmatpush1.bf16.msra.mxu0 %v4591
        %5582 = vmatprep.subr.bf16.mxu0 0
        %5583 = vmatpush1.bf16.msra.mxu0 %v4592
        %5584 = vmatprep.subr.bf16.mxu0 0
        %5585 = vmatpush1.bf16.msra.mxu0 %v4593
        %5586 = vmatprep.subr.bf16.mxu0 0
        %5587 = vmatpush1.bf16.msra.mxu0 %v4594
        %5588 = vmatprep.subr.bf16.mxu0 0
        %5589 = vmatpush1.bf16.msra.mxu0 %v4595
        %5590 = vmatprep.subr.bf16.mxu0 0
        %5591 = vmatpush1.bf16.msra.mxu0 %v4596
        %5592 = vmatprep.subr.bf16.mxu0 0
        %5593 = vmatpush1.bf16.msra.mxu0 %v4597
        %5594 = vmatprep.subr.bf16.mxu0 0
        %5595 = vmatpush1.bf16.msra.mxu0 %v4598
        %5596 = vmatprep.subr.bf16.mxu0 0
        %5597 = vmatpush1.bf16.msra.mxu0 %v4599
        %5598 = vmatprep.subr.bf16.mxu0 0
        %5599 = vmatpush1.bf16.msra.mxu0 %v4600
        %5600 = vmatprep.subr.bf16.mxu0 0
        %5601 = vmatpush1.bf16.msra.mxu0 %v4601
        %5602 = vmatprep.mubr.bf16.mxu0 %v2575
        %5603 = vmatmul.mubr.bf16.gmra.mrb[0].mxu0 %v2574
        %v5604 = vpop.f32.mrb[0].mxu0
        %v5605 = vadd.f32 %v5565, %v5604
        %v5606 = vpop.f32.mrb[0].mxu0
        %v5607 = vpop.f32.mrb[0].mxu0
        %v5608 = vpop.f32.mrb[0].mxu0
        %5609 = vdwg.mxu0
        %5610 = vst [vmem:[%s286] sm:$0xff] %v5605
        %s5611 = sand.u32 %s182, 1
        %s5612 = scalar_lea.sflag [#allocation4], %s5611
        %s5613 = sand.u32 %s182, 1
        %s5614 = smul.addr %s5613, 8
        %s5615 = scalar_lea.vmem [#allocation5], %s5614
        // Predicated region
        $region53: #{convnet_forward.1} parent=47 // pred_check
          %p5616 = pneg %p192
        $region54: #{convnet_forward.1} parent=47 // pred_check_branch
          %5618 = sbr.rel (%p5616) target = $region56
        $region55: #{convnet_forward.1} parent=47 // pred_region
          %s5620 = ssub.s32 128, 128
          %5621 = vsyncadd %s5612, %s5620
          %s5622 = smul.addr %s22, 128
          %s5623 = scalar_lea.hbm %s7, %s5622
          %s5625 = sshll.u32 %s5615, 4
          %s5626 = int_to_ptr.vmem [resolvable:$true] %s5625
          %5628 = dma.vmem_to_hbm [thread:$0]  %s5626, 128, %s5623, %s5612
        $region56: #{convnet_forward.1} parent=47 // pred_fallthru
          _
      $region48: #{convnet_forward.1} parent=5 // pred_fallthru
        _
      %p5629 = scmp.le.s32.totalorder 2, %s17
      // Predicated region
      $region57: #{convnet_forward.1} parent=5 // pred_check
        %p5630 = pneg %p5629
      $region58: #{convnet_forward.1} parent=5 // pred_check_branch
        %5632 = sbr.rel (%p5630) target = $region60
      $region59: #{convnet_forward.1} parent=5 // pred_region
        %s5633 = ssub.s32 %s17, 2
        // Predicated region
        $region61: #{convnet_forward.1} parent=59 // pred_check
          %p5634 = pneg %p198
        $region62: #{convnet_forward.1} parent=59 // pred_check_branch
          %5636 = sbr.rel (%p5634) target = $region64
        $region63: #{convnet_forward.1} parent=59 // pred_region
          %s5637 = sand.u32 %s183, 1
          %s5638 = scalar_lea.sflag [#allocation4], %s5637
          %s5639 = sand.u32 %s183, 1
          %s5640 = smul.addr %s5639, 8
          %s5641 = scalar_lea.vmem [#allocation5], %s5640
          %5642 = dma.done %s5638, 128
        $region64: #{convnet_forward.1} parent=59 // pred_fallthru
          _
      $region60: #{convnet_forward.1} parent=5 // pred_fallthru
        _
    $region6: #{convnet_forward.1} parent=1 // loop_footer
      %s21 = sadd.s32 1, %s17
    $region7: #{convnet_forward.1} parent=1 // loop_footer_branch
      %16 = sbr.rel target = $region3
    $region8: #{convnet_forward.1} parent=1 // loop_exit
      _
    %5643 = vsyncpa [#allocation3], 1
    %s5644 = scalar_lea.sflag [#allocation3], 1
    %5645 = vsyncpa %s5644, 1
    %5646 = vsyncpa [#allocation4], 1
    %s5647 = scalar_lea.sflag [#allocation4], 1
    %5648 = vsyncpa %s5647, 1

</llo_original>
